<compile_context>
chip_gen: v7x
topology: tpu7x:2x2x1
jax: 0.10.0
libtpu: 0.0.40
codegen_flags: <defaults>
</compile_context>

<pallas_src>
import jax
import jax.numpy as jnp
from jax import lax
from jax.experimental import pallas as pl
from jax.experimental.pallas import tpu as pltpu


def make_resnet_kernel(C, KK, res_num, PACK, ROWS, LANES, tap_offsets):
    """Fused ResnetBlock kernel on batch-packed, lane-padded (ROWS, LANES) tiles."""
    REP = LANES // 128

    def widen(t):
        # (ROWS, 128) lane-replicated tile -> (ROWS, LANES); lane-aligned concat
        # of identical vregs (register copies, no broadcast_in_dim in the loop).
        return t if REP == 1 else jnp.concatenate([t] * REP, axis=-1)

    def lrelu(v):
        return jnp.where(v >= 0, v, 0.1 * v)

    def kernel(x_ref, w_ref, b_ref, m_ref, o_ref):
        mask = m_ref[...]                      # (ROWS, LANES): 1 inside image, 0 on ring/tail
        x0 = x_ref[0]                          # (ROWS, LANES) packed input (zero ring/tail)
        cur = x0

        def conv_stage(act, stage):
            offs = tap_offsets[stage % 2]      # static flat lane offsets for this dilation
            acc = widen(b_ref[stage])          # start accumulator from the bias tile
            for s in range(C):
                # Channel rotation: row co*PACK+n reads channel (co+s)%C of the SAME batch.
                act_s = act if s == 0 else pltpu.roll(
                    act, shift=(ROWS - s * PACK) % ROWS, axis=0)
                for t in range(KK):
                    off = offs[t]
                    # Spatial tap shift: rolled[p] = act_s[p + off] for all interior p.
                    src = act_s if off == 0 else pltpu.roll(
                        act_s, shift=(-off) % LANES, axis=1)
                    w = widen(w_ref[(stage * C + s) * KK + t])   # pre-gathered weight tile
                    acc = acc + w * src                          # full-vreg VPU MAC
            return acc

        for i in range(res_num):
            # stage 1: conv(dilation[0]) + bias -> lrelu ; re-zero pad ring & lane tail
            y = lrelu(conv_stage(cur, 2 * i)) * mask
            # stage 2: conv(dilation[1]) + bias + residual -> lrelu ; re-zero ring & tail
            cur = lrelu(conv_stage(y, 2 * i + 1) + cur) * mask
        if res_num > 1:
            cur = cur + x0                     # outer residual (ring already zero)
        o_ref[0] = cur

    return kernel


def resnet_block_forward(x_nchw, params, dilation, res_num):
    """Matches ResnetBlock.forward semantics (NCHW in / NCHW out)."""
    N, C, H, W = x_nchw.shape
    K = params[0][0].shape[0]
    KK = K * K
    half = K // 2
    P = (K - 1) // 2 * max(dilation)                 # common zero-pad ring for both stages
    Hp, Wp = H + 2 * P, W + 2 * P
    PHW = Hp * Wp
    LANES = ((PHW + 127) // 128) * 128               # lane-dense, multiple-of-128 width
    PACK = 8 // C if (C <= 8 and 8 % C == 0) else 1  # batch elements packed per block
    ROWS = PACK * C                                  # sublane rows (8 for C=4)
    G = (N + PACK - 1) // PACK                       # grid size (batch pairs)
    Npad = G * PACK

    # Static flat tap offsets per sub-stage dilation: (kh-half)*d*Wp + (kw-half)*d.
    tap_offsets = []
    for d in dilation:
        tap_offsets.append([(kh - half) * d * Wp + (kw - half) * d
                            for kh in range(K) for kw in range(K)])

    # ---- Pre-gather weights / biases as lane-replicated (ROWS, 128) tiles. ----
    # Row r = co*PACK + n.  Weight tile (stage, s, t): row -> w[t, (co+s)%C, co].
    co_idx = jnp.arange(C)
    w_tiles, b_tiles = [], []
    for i in range(res_num):
        w1, b1, w2, b2 = params[i]
        for wgt, bias in ((w1, b1), (w2, b2)):
            wkk = wgt.astype(jnp.float32).reshape(KK, C, C)      # (tap, ci, co)
            for s in range(C):
                ci_sel = (co_idx + s) % C
                for t in range(KK):
                    vals = wkk[t][ci_sel, co_idx]                 # (C,): w[(co+s)%C, co]
                    rows = jnp.repeat(vals, PACK)                 # (ROWS,)
                    w_tiles.append(jnp.broadcast_to(rows[:, None], (ROWS, 128)))
            b_rows = jnp.repeat(bias.astype(jnp.float32), PACK)
            b_tiles.append(jnp.broadcast_to(b_rows[:, None], (ROWS, 128)))
    W_all = jnp.stack(w_tiles)                                    # (2*res_num*C*KK, ROWS, 128)
    B_all = jnp.stack(b_tiles)                                    # (2*res_num,      ROWS, 128)

    # ---- Interior mask (zero on pad ring and on the lane tail), pre-broadcast. ----
    row_ok = (jnp.arange(Hp) >= P) & (jnp.arange(Hp) < P + H)
    col_ok = (jnp.arange(Wp) >= P) & (jnp.arange(Wp) < P + W)
    m = (row_ok[:, None] & col_ok[None, :]).astype(jnp.float32).reshape(PHW)
    m = jnp.pad(m, (0, LANES - PHW))
    mask = jnp.broadcast_to(m[None, :], (ROWS, LANES))

    # ---- Pack input: pad batch/ring/lanes, rows = channel-major / batch-minor. ----
    xb = jnp.pad(x_nchw.astype(jnp.float32),
                 ((0, Npad - N), (0, 0), (P, P), (P, P))).reshape(Npad, C, PHW)
    xb = jnp.pad(xb, ((0, 0), (0, 0), (0, LANES - PHW)))
    xb = xb.reshape(G, PACK, C, LANES).transpose(0, 2, 1, 3).reshape(G, ROWS, LANES)

    kernel = make_resnet_kernel(C, KK, res_num, PACK, ROWS, LANES, tap_offsets)

    out = pl.pallas_call(
        kernel,
        out_shape=jax.ShapeDtypeStruct((G, ROWS, LANES), jnp.float32),
        grid_spec=pltpu.PrefetchScalarGridSpec(
            num_scalar_prefetch=0,
            grid=(G,),
            in_specs=[
                pl.BlockSpec((1, ROWS, LANES), lambda g: (g, 0, 0)),   # packed activations
                pl.BlockSpec(W_all.shape, lambda g: (0, 0, 0)),        # weights (VMEM resident)
                pl.BlockSpec(B_all.shape, lambda g: (0, 0, 0)),        # biases
                pl.BlockSpec((ROWS, LANES), lambda g: (0, 0)),         # interior mask
            ],
            out_specs=pl.BlockSpec((1, ROWS, LANES), lambda g: (g, 0, 0)),
        ),
        compiler_params=pltpu.CompilerParams(dimension_semantics=("parallel",)),
    )(xb, W_all, B_all, mask)

    # ---- Unpack: rows -> (N, C), drop lane tail and pad ring. ----
    out = out.reshape(G, C, PACK, LANES).transpose(0, 2, 1, 3).reshape(Npad, C, LANES)
    out = out[:N, :, :PHW].reshape(N, C, Hp, Wp)[:, :, P:P + H, P:P + W]
    return out.astype(x_nchw.dtype)


def resnet_block_reference(x_nchw, params, dilation, res_num):
    """Pure-JAX reference using lax.conv_general_dilated (correctness check)."""
    def conv(x, w, b, d):
        K = w.shape[0]
        p = (K - 1) // 2 * d
        y = lax.conv_general_dilated(
            x, w, window_strides=(1, 1), padding=[(p, p), (p, p)],
            rhs_dilation=(d, d),
            dimension_numbers=("NHWC", "HWIO", "NHWC"))
        return y + b.reshape(1, 1, 1, -1)

    lrelu = lambda v: jnp.where(v >= 0, v, 0.1 * v)
    x = jnp.transpose(x_nchw, (0, 2, 3, 1))
    if res_num > 1:
        temp = x
    for i in range(res_num):
        w1, b1, w2, b2 = params[i]
        xx = conv(lrelu(conv(x, w1, b1, dilation[0])), w2, b2, dilation[1])
        x = lrelu(x + xx)
    if res_num > 1:
        x = x + temp
    return jnp.transpose(x, (0, 3, 1, 2))


def init_params(key, in_channels, kernel_size, res_num):
    """Deterministic synthetic weights: HWIO conv weights + biases per stem block."""
    params = []
    C, K = in_channels, kernel_size
    scale = 1.0 / (C * K * K) ** 0.5
    for _ in range(res_num):
        key, k1, k2, k3, k4 = jax.random.split(key, 5)
        w1 = jax.random.uniform(k1, (K, K, C, C), jnp.float32, -scale, scale)
        b1 = jax.random.uniform(k2, (C,), jnp.float32, -scale, scale)
        w2 = jax.random.uniform(k3, (K, K, C, C), jnp.float32, -scale, scale)
        b2 = jax.random.uniform(k4, (C,), jnp.float32, -scale, scale)
        params.append((w1, b1, w2, b2))
    return params


if __name__ == "__main__":
    # Module config: ResnetBlock(in_channels=4, kernel_size=3, dilation=(1, 2),
    #                            bias=True, res_num=2)
    in_channels = 4
    kernel_size = 3
    dilation = (1, 2)
    res_num = 2

    key = jax.random.PRNGKey(0)
    key, kx = jax.random.split(key)
    x = jax.random.normal(kx, (2, in_channels, 16, 16), jnp.float32)  # NCHW
    params = init_params(key, in_channels, kernel_size, res_num)

    out = jax.block_until_ready(resnet_block_forward(x, params, dilation, res_num))
    ref = jax.block_until_ready(resnet_block_reference(x, params, dilation, res_num))

    assert out.shape == x.shape
    assert jnp.allclose(out, ref, atol=1e-4, rtol=1e-4)

    print("KERNEL_OK")
</pallas_src>

<mosaic_0001>
module attributes {stable_mosaic.version = 11 : i64} {
  func.func @kernel(%arg0: i32, %arg1: memref<1x8x512xf32, #tpu.memory_space<vmem>>, %arg2: memref<144x8x128xf32, #tpu.memory_space<vmem>>, %arg3: memref<4x8x128xf32, #tpu.memory_space<vmem>>, %arg4: memref<8x512xf32, #tpu.memory_space<vmem>>, %arg5: memref<1x8x512xf32, #tpu.memory_space<vmem>>) attributes {dimension_semantics = [#tpu.dimension_semantics<parallel>], iteration_bounds = array<i64: 1>, scalar_prefetch = 0 : i64, scratch_operands = 0 : i64, tpu.core_type = #tpu.core_type<tc>, window_params = [{transform_indices = @transform_0, window_bounds = array<i64: 1, 8, 512>}, {pipeline_mode = #tpu.pipeline_mode<synchronous>, transform_indices = @transform_1, window_bounds = array<i64: 144, 8, 128>}, {pipeline_mode = #tpu.pipeline_mode<synchronous>, transform_indices = @transform_2, window_bounds = array<i64: 4, 8, 128>}, {pipeline_mode = #tpu.pipeline_mode<synchronous>, transform_indices = @transform_3, window_bounds = array<i64: 8, 512>}, {transform_indices = @transform_4, window_bounds = array<i64: 1, 8, 512>}]} {
    %c0 = arith.constant 0 : index
    %c0_0 = arith.constant 0 : index
    %0 = vector.load %arg4[%c0, %c0_0] : memref<8x512xf32, #tpu.memory_space<vmem>>, vector<8x512xf32>
    %c0_1 = arith.constant 0 : index
    %c0_2 = arith.constant 0 : index
    %c0_3 = arith.constant 0 : index
    %1 = vector.load %arg1[%c0_1, %c0_2, %c0_3] : memref<1x8x512xf32, #tpu.memory_space<vmem>>, vector<1x8x512xf32>
    %2 = vector.shape_cast %1 : vector<1x8x512xf32> to vector<8x512xf32>
    %c0_4 = arith.constant 0 : index
    %c0_5 = arith.constant 0 : index
    %c0_6 = arith.constant 0 : index
    %3 = vector.load %arg3[%c0_4, %c0_5, %c0_6] : memref<4x8x128xf32, #tpu.memory_space<vmem>>, vector<1x8x128xf32>
    %4 = vector.shape_cast %3 : vector<1x8x128xf32> to vector<8x128xf32>
    %5 = tpu.concatenate %4, %4, %4, %4 in 1 : vector<8x128xf32>, vector<8x128xf32>, vector<8x128xf32>, vector<8x128xf32> -> vector<8x512xf32>
    %c21_i32 = arith.constant 21 : i32
    %6 = tpu.dynamic_rotate %2 by %c21_i32 dim 1 : vector<8x512xf32>, i32 -> vector<8x512xf32>
    %c0_7 = arith.constant 0 : index
    %c0_8 = arith.constant 0 : index
    %c0_9 = arith.constant 0 : index
    %7 = vector.load %arg2[%c0_7, %c0_8, %c0_9] : memref<144x8x128xf32, #tpu.memory_space<vmem>>, vector<1x8x128xf32>
    %8 = vector.shape_cast %7 : vector<1x8x128xf32> to vector<8x128xf32>
    %9 = tpu.concatenate %8, %8, %8, %8 in 1 : vector<8x128xf32>, vector<8x128xf32>, vector<8x128xf32>, vector<8x128xf32> -> vector<8x512xf32>
    %10 = arith.mulf %9, %6 : vector<8x512xf32>
    %11 = arith.addf %5, %10 : vector<8x512xf32>
    %c20_i32 = arith.constant 20 : i32
    %12 = tpu.dynamic_rotate %2 by %c20_i32 dim 1 : vector<8x512xf32>, i32 -> vector<8x512xf32>
    %c1 = arith.constant 1 : index
    %c0_10 = arith.constant 0 : index
    %c0_11 = arith.constant 0 : index
    %13 = vector.load %arg2[%c1, %c0_10, %c0_11] : memref<144x8x128xf32, #tpu.memory_space<vmem>>, vector<1x8x128xf32>
    %14 = vector.shape_cast %13 : vector<1x8x128xf32> to vector<8x128xf32>
    %15 = tpu.concatenate %14, %14, %14, %14 in 1 : vector<8x128xf32>, vector<8x128xf32>, vector<8x128xf32>, vector<8x128xf32> -> vector<8x512xf32>
    %16 = arith.mulf %15, %12 : vector<8x512xf32>
    %17 = arith.addf %11, %16 : vector<8x512xf32>
    %c19_i32 = arith.constant 19 : i32
    %18 = tpu.dynamic_rotate %2 by %c19_i32 dim 1 : vector<8x512xf32>, i32 -> vector<8x512xf32>
    %c2 = arith.constant 2 : index
    %c0_12 = arith.constant 0 : index
    %c0_13 = arith.constant 0 : index
    %19 = vector.load %arg2[%c2, %c0_12, %c0_13] : memref<144x8x128xf32, #tpu.memory_space<vmem>>, vector<1x8x128xf32>
    %20 = vector.shape_cast %19 : vector<1x8x128xf32> to vector<8x128xf32>
    %21 = tpu.concatenate %20, %20, %20, %20 in 1 : vector<8x128xf32>, vector<8x128xf32>, vector<8x128xf32>, vector<8x128xf32> -> vector<8x512xf32>
    %22 = arith.mulf %21, %18 : vector<8x512xf32>
    %23 = arith.addf %17, %22 : vector<8x512xf32>
    %c1_i32 = arith.constant 1 : i32
    %24 = tpu.dynamic_rotate %2 by %c1_i32 dim 1 : vector<8x512xf32>, i32 -> vector<8x512xf32>
    %c3 = arith.constant 3 : index
    %c0_14 = arith.constant 0 : index
    %c0_15 = arith.constant 0 : index
    %25 = vector.load %arg2[%c3, %c0_14, %c0_15] : memref<144x8x128xf32, #tpu.memory_space<vmem>>, vector<1x8x128xf32>
    %26 = vector.shape_cast %25 : vector<1x8x128xf32> to vector<8x128xf32>
    %27 = tpu.concatenate %26, %26, %26, %26 in 1 : vector<8x128xf32>, vector<8x128xf32>, vector<8x128xf32>, vector<8x128xf32> -> vector<8x512xf32>
    %28 = arith.mulf %27, %24 : vector<8x512xf32>
    %29 = arith.addf %23, %28 : vector<8x512xf32>
    %c4 = arith.constant 4 : index
    %c0_16 = arith.constant 0 : index
    %c0_17 = arith.constant 0 : index
    %30 = vector.load %arg2[%c4, %c0_16, %c0_17] : memref<144x8x128xf32, #tpu.memory_space<vmem>>, vector<1x8x128xf32>
    %31 = vector.shape_cast %30 : vector<1x8x128xf32> to vector<8x128xf32>
    %32 = tpu.concatenate %31, %31, %31, %31 in 1 : vector<8x128xf32>, vector<8x128xf32>, vector<8x128xf32>, vector<8x128xf32> -> vector<8x512xf32>
    %33 = arith.mulf %32, %2 : vector<8x512xf32>
    %34 = arith.addf %29, %33 : vector<8x512xf32>
    %c511_i32 = arith.constant 511 : i32
    %35 = tpu.dynamic_rotate %2 by %c511_i32 dim 1 : vector<8x512xf32>, i32 -> vector<8x512xf32>
    %c5 = arith.constant 5 : index
    %c0_18 = arith.constant 0 : index
    %c0_19 = arith.constant 0 : index
    %36 = vector.load %arg2[%c5, %c0_18, %c0_19] : memref<144x8x128xf32, #tpu.memory_space<vmem>>, vector<1x8x128xf32>
    %37 = vector.shape_cast %36 : vector<1x8x128xf32> to vector<8x128xf32>
    %38 = tpu.concatenate %37, %37, %37, %37 in 1 : vector<8x128xf32>, vector<8x128xf32>, vector<8x128xf32>, vector<8x128xf32> -> vector<8x512xf32>
    %39 = arith.mulf %38, %35 : vector<8x512xf32>
    %40 = arith.addf %34, %39 : vector<8x512xf32>
    %c493_i32 = arith.constant 493 : i32
    %41 = tpu.dynamic_rotate %2 by %c493_i32 dim 1 : vector<8x512xf32>, i32 -> vector<8x512xf32>
    %c6 = arith.constant 6 : index
    %c0_20 = arith.constant 0 : index
    %c0_21 = arith.constant 0 : index
    %42 = vector.load %arg2[%c6, %c0_20, %c0_21] : memref<144x8x128xf32, #tpu.memory_space<vmem>>, vector<1x8x128xf32>
    %43 = vector.shape_cast %42 : vector<1x8x128xf32> to vector<8x128xf32>
    %44 = tpu.concatenate %43, %43, %43, %43 in 1 : vector<8x128xf32>, vector<8x128xf32>, vector<8x128xf32>, vector<8x128xf32> -> vector<8x512xf32>
    %45 = arith.mulf %44, %41 : vector<8x512xf32>
    %46 = arith.addf %40, %45 : vector<8x512xf32>
    %c492_i32 = arith.constant 492 : i32
    %47 = tpu.dynamic_rotate %2 by %c492_i32 dim 1 : vector<8x512xf32>, i32 -> vector<8x512xf32>
    %c7 = arith.constant 7 : index
    %c0_22 = arith.constant 0 : index
    %c0_23 = arith.constant 0 : index
    %48 = vector.load %arg2[%c7, %c0_22, %c0_23] : memref<144x8x128xf32, #tpu.memory_space<vmem>>, vector<1x8x128xf32>
    %49 = vector.shape_cast %48 : vector<1x8x128xf32> to vector<8x128xf32>
    %50 = tpu.concatenate %49, %49, %49, %49 in 1 : vector<8x128xf32>, vector<8x128xf32>, vector<8x128xf32>, vector<8x128xf32> -> vector<8x512xf32>
    %51 = arith.mulf %50, %47 : vector<8x512xf32>
    %52 = arith.addf %46, %51 : vector<8x512xf32>
    %c491_i32 = arith.constant 491 : i32
    %53 = tpu.dynamic_rotate %2 by %c491_i32 dim 1 : vector<8x512xf32>, i32 -> vector<8x512xf32>
    %c8 = arith.constant 8 : index
    %c0_24 = arith.constant 0 : index
    %c0_25 = arith.constant 0 : index
    %54 = vector.load %arg2[%c8, %c0_24, %c0_25] : memref<144x8x128xf32, #tpu.memory_space<vmem>>, vector<1x8x128xf32>
    %55 = vector.shape_cast %54 : vector<1x8x128xf32> to vector<8x128xf32>
    %56 = tpu.concatenate %55, %55, %55, %55 in 1 : vector<8x128xf32>, vector<8x128xf32>, vector<8x128xf32>, vector<8x128xf32> -> vector<8x512xf32>
    %57 = arith.mulf %56, %53 : vector<8x512xf32>
    %58 = arith.addf %52, %57 : vector<8x512xf32>
    %c6_i32 = arith.constant 6 : i32
    %59 = tpu.dynamic_rotate %2 by %c6_i32 dim 0 : vector<8x512xf32>, i32 -> vector<8x512xf32>
    %c21_i32_26 = arith.constant 21 : i32
    %60 = tpu.dynamic_rotate %59 by %c21_i32_26 dim 1 : vector<8x512xf32>, i32 -> vector<8x512xf32>
    %c9 = arith.constant 9 : index
    %c0_27 = arith.constant 0 : index
    %c0_28 = arith.constant 0 : index
    %61 = vector.load %arg2[%c9, %c0_27, %c0_28] : memref<144x8x128xf32, #tpu.memory_space<vmem>>, vector<1x8x128xf32>
    %62 = vector.shape_cast %61 : vector<1x8x128xf32> to vector<8x128xf32>
    %63 = tpu.concatenate %62, %62, %62, %62 in 1 : vector<8x128xf32>, vector<8x128xf32>, vector<8x128xf32>, vector<8x128xf32> -> vector<8x512xf32>
    %64 = arith.mulf %63, %60 : vector<8x512xf32>
    %65 = arith.addf %58, %64 : vector<8x512xf32>
    %c20_i32_29 = arith.constant 20 : i32
    %66 = tpu.dynamic_rotate %59 by %c20_i32_29 dim 1 : vector<8x512xf32>, i32 -> vector<8x512xf32>
    %c10 = arith.constant 10 : index
    %c0_30 = arith.constant 0 : index
    %c0_31 = arith.constant 0 : index
    %67 = vector.load %arg2[%c10, %c0_30, %c0_31] : memref<144x8x128xf32, #tpu.memory_space<vmem>>, vector<1x8x128xf32>
    %68 = vector.shape_cast %67 : vector<1x8x128xf32> to vector<8x128xf32>
    %69 = tpu.concatenate %68, %68, %68, %68 in 1 : vector<8x128xf32>, vector<8x128xf32>, vector<8x128xf32>, vector<8x128xf32> -> vector<8x512xf32>
    %70 = arith.mulf %69, %66 : vector<8x512xf32>
    %71 = arith.addf %65, %70 : vector<8x512xf32>
    %c19_i32_32 = arith.constant 19 : i32
    %72 = tpu.dynamic_rotate %59 by %c19_i32_32 dim 1 : vector<8x512xf32>, i32 -> vector<8x512xf32>
    %c11 = arith.constant 11 : index
    %c0_33 = arith.constant 0 : index
    %c0_34 = arith.constant 0 : index
    %73 = vector.load %arg2[%c11, %c0_33, %c0_34] : memref<144x8x128xf32, #tpu.memory_space<vmem>>, vector<1x8x128xf32>
    %74 = vector.shape_cast %73 : vector<1x8x128xf32> to vector<8x128xf32>
    %75 = tpu.concatenate %74, %74, %74, %74 in 1 : vector<8x128xf32>, vector<8x128xf32>, vector<8x128xf32>, vector<8x128xf32> -> vector<8x512xf32>
    %76 = arith.mulf %75, %72 : vector<8x512xf32>
    %77 = arith.addf %71, %76 : vector<8x512xf32>
    %c1_i32_35 = arith.constant 1 : i32
    %78 = tpu.dynamic_rotate %59 by %c1_i32_35 dim 1 : vector<8x512xf32>, i32 -> vector<8x512xf32>
    %c12 = arith.constant 12 : index
    %c0_36 = arith.constant 0 : index
    %c0_37 = arith.constant 0 : index
    %79 = vector.load %arg2[%c12, %c0_36, %c0_37] : memref<144x8x128xf32, #tpu.memory_space<vmem>>, vector<1x8x128xf32>
    %80 = vector.shape_cast %79 : vector<1x8x128xf32> to vector<8x128xf32>
    %81 = tpu.concatenate %80, %80, %80, %80 in 1 : vector<8x128xf32>, vector<8x128xf32>, vector<8x128xf32>, vector<8x128xf32> -> vector<8x512xf32>
    %82 = arith.mulf %81, %78 : vector<8x512xf32>
    %83 = arith.addf %77, %82 : vector<8x512xf32>
    %c13 = arith.constant 13 : index
    %c0_38 = arith.constant 0 : index
    %c0_39 = arith.constant 0 : index
    %84 = vector.load %arg2[%c13, %c0_38, %c0_39] : memref<144x8x128xf32, #tpu.memory_space<vmem>>, vector<1x8x128xf32>
    %85 = vector.shape_cast %84 : vector<1x8x128xf32> to vector<8x128xf32>
    %86 = tpu.concatenate %85, %85, %85, %85 in 1 : vector<8x128xf32>, vector<8x128xf32>, vector<8x128xf32>, vector<8x128xf32> -> vector<8x512xf32>
    %87 = arith.mulf %86, %59 : vector<8x512xf32>
    %88 = arith.addf %83, %87 : vector<8x512xf32>
    %c511_i32_40 = arith.constant 511 : i32
    %89 = tpu.dynamic_rotate %59 by %c511_i32_40 dim 1 : vector<8x512xf32>, i32 -> vector<8x512xf32>
    %c14 = arith.constant 14 : index
    %c0_41 = arith.constant 0 : index
    %c0_42 = arith.constant 0 : index
    %90 = vector.load %arg2[%c14, %c0_41, %c0_42] : memref<144x8x128xf32, #tpu.memory_space<vmem>>, vector<1x8x128xf32>
    %91 = vector.shape_cast %90 : vector<1x8x128xf32> to vector<8x128xf32>
    %92 = tpu.concatenate %91, %91, %91, %91 in 1 : vector<8x128xf32>, vector<8x128xf32>, vector<8x128xf32>, vector<8x128xf32> -> vector<8x512xf32>
    %93 = arith.mulf %92, %89 : vector<8x512xf32>
    %94 = arith.addf %88, %93 : vector<8x512xf32>
    %c493_i32_43 = arith.constant 493 : i32
    %95 = tpu.dynamic_rotate %59 by %c493_i32_43 dim 1 : vector<8x512xf32>, i32 -> vector<8x512xf32>
    %c15 = arith.constant 15 : index
    %c0_44 = arith.constant 0 : index
    %c0_45 = arith.constant 0 : index
    %96 = vector.load %arg2[%c15, %c0_44, %c0_45] : memref<144x8x128xf32, #tpu.memory_space<vmem>>, vector<1x8x128xf32>
    %97 = vector.shape_cast %96 : vector<1x8x128xf32> to vector<8x128xf32>
    %98 = tpu.concatenate %97, %97, %97, %97 in 1 : vector<8x128xf32>, vector<8x128xf32>, vector<8x128xf32>, vector<8x128xf32> -> vector<8x512xf32>
    %99 = arith.mulf %98, %95 : vector<8x512xf32>
    %100 = arith.addf %94, %99 : vector<8x512xf32>
    %c492_i32_46 = arith.constant 492 : i32
    %101 = tpu.dynamic_rotate %59 by %c492_i32_46 dim 1 : vector<8x512xf32>, i32 -> vector<8x512xf32>
    %c16 = arith.constant 16 : index
    %c0_47 = arith.constant 0 : index
    %c0_48 = arith.constant 0 : index
    %102 = vector.load %arg2[%c16, %c0_47, %c0_48] : memref<144x8x128xf32, #tpu.memory_space<vmem>>, vector<1x8x128xf32>
    %103 = vector.shape_cast %102 : vector<1x8x128xf32> to vector<8x128xf32>
    %104 = tpu.concatenate %103, %103, %103, %103 in 1 : vector<8x128xf32>, vector<8x128xf32>, vector<8x128xf32>, vector<8x128xf32> -> vector<8x512xf32>
    %105 = arith.mulf %104, %101 : vector<8x512xf32>
    %106 = arith.addf %100, %105 : vector<8x512xf32>
    %c491_i32_49 = arith.constant 491 : i32
    %107 = tpu.dynamic_rotate %59 by %c491_i32_49 dim 1 : vector<8x512xf32>, i32 -> vector<8x512xf32>
    %c17 = arith.constant 17 : index
    %c0_50 = arith.constant 0 : index
    %c0_51 = arith.constant 0 : index
    %108 = vector.load %arg2[%c17, %c0_50, %c0_51] : memref<144x8x128xf32, #tpu.memory_space<vmem>>, vector<1x8x128xf32>
    %109 = vector.shape_cast %108 : vector<1x8x128xf32> to vector<8x128xf32>
    %110 = tpu.concatenate %109, %109, %109, %109 in 1 : vector<8x128xf32>, vector<8x128xf32>, vector<8x128xf32>, vector<8x128xf32> -> vector<8x512xf32>
    %111 = arith.mulf %110, %107 : vector<8x512xf32>
    %112 = arith.addf %106, %111 : vector<8x512xf32>
    %c4_i32 = arith.constant 4 : i32
    %113 = tpu.dynamic_rotate %2 by %c4_i32 dim 0 : vector<8x512xf32>, i32 -> vector<8x512xf32>
    %c21_i32_52 = arith.constant 21 : i32
    %114 = tpu.dynamic_rotate %113 by %c21_i32_52 dim 1 : vector<8x512xf32>, i32 -> vector<8x512xf32>
    %c18 = arith.constant 18 : index
    %c0_53 = arith.constant 0 : index
    %c0_54 = arith.constant 0 : index
    %115 = vector.load %arg2[%c18, %c0_53, %c0_54] : memref<144x8x128xf32, #tpu.memory_space<vmem>>, vector<1x8x128xf32>
    %116 = vector.shape_cast %115 : vector<1x8x128xf32> to vector<8x128xf32>
    %117 = tpu.concatenate %116, %116, %116, %116 in 1 : vector<8x128xf32>, vector<8x128xf32>, vector<8x128xf32>, vector<8x128xf32> -> vector<8x512xf32>
    %118 = arith.mulf %117, %114 : vector<8x512xf32>
    %119 = arith.addf %112, %118 : vector<8x512xf32>
    %c20_i32_55 = arith.constant 20 : i32
    %120 = tpu.dynamic_rotate %113 by %c20_i32_55 dim 1 : vector<8x512xf32>, i32 -> vector<8x512xf32>
    %c19 = arith.constant 19 : index
    %c0_56 = arith.constant 0 : index
    %c0_57 = arith.constant 0 : index
    %121 = vector.load %arg2[%c19, %c0_56, %c0_57] : memref<144x8x128xf32, #tpu.memory_space<vmem>>, vector<1x8x128xf32>
    %122 = vector.shape_cast %121 : vector<1x8x128xf32> to vector<8x128xf32>
    %123 = tpu.concatenate %122, %122, %122, %122 in 1 : vector<8x128xf32>, vector<8x128xf32>, vector<8x128xf32>, vector<8x128xf32> -> vector<8x512xf32>
    %124 = arith.mulf %123, %120 : vector<8x512xf32>
    %125 = arith.addf %119, %124 : vector<8x512xf32>
    %c19_i32_58 = arith.constant 19 : i32
    %126 = tpu.dynamic_rotate %113 by %c19_i32_58 dim 1 : vector<8x512xf32>, i32 -> vector<8x512xf32>
    %c20 = arith.constant 20 : index
    %c0_59 = arith.constant 0 : index
    %c0_60 = arith.constant 0 : index
    %127 = vector.load %arg2[%c20, %c0_59, %c0_60] : memref<144x8x128xf32, #tpu.memory_space<vmem>>, vector<1x8x128xf32>
    %128 = vector.shape_cast %127 : vector<1x8x128xf32> to vector<8x128xf32>
    %129 = tpu.concatenate %128, %128, %128, %128 in 1 : vector<8x128xf32>, vector<8x128xf32>, vector<8x128xf32>, vector<8x128xf32> -> vector<8x512xf32>
    %130 = arith.mulf %129, %126 : vector<8x512xf32>
    %131 = arith.addf %125, %130 : vector<8x512xf32>
    %c1_i32_61 = arith.constant 1 : i32
    %132 = tpu.dynamic_rotate %113 by %c1_i32_61 dim 1 : vector<8x512xf32>, i32 -> vector<8x512xf32>
    %c21 = arith.constant 21 : index
    %c0_62 = arith.constant 0 : index
    %c0_63 = arith.constant 0 : index
    %133 = vector.load %arg2[%c21, %c0_62, %c0_63] : memref<144x8x128xf32, #tpu.memory_space<vmem>>, vector<1x8x128xf32>
    %134 = vector.shape_cast %133 : vector<1x8x128xf32> to vector<8x128xf32>
    %135 = tpu.concatenate %134, %134, %134, %134 in 1 : vector<8x128xf32>, vector<8x128xf32>, vector<8x128xf32>, vector<8x128xf32> -> vector<8x512xf32>
    %136 = arith.mulf %135, %132 : vector<8x512xf32>
    %137 = arith.addf %131, %136 : vector<8x512xf32>
    %c22 = arith.constant 22 : index
    %c0_64 = arith.constant 0 : index
    %c0_65 = arith.constant 0 : index
    %138 = vector.load %arg2[%c22, %c0_64, %c0_65] : memref<144x8x128xf32, #tpu.memory_space<vmem>>, vector<1x8x128xf32>
    %139 = vector.shape_cast %138 : vector<1x8x128xf32> to vector<8x128xf32>
    %140 = tpu.concatenate %139, %139, %139, %139 in 1 : vector<8x128xf32>, vector<8x128xf32>, vector<8x128xf32>, vector<8x128xf32> -> vector<8x512xf32>
    %141 = arith.mulf %140, %113 : vector<8x512xf32>
    %142 = arith.addf %137, %141 : vector<8x512xf32>
    %c511_i32_66 = arith.constant 511 : i32
    %143 = tpu.dynamic_rotate %113 by %c511_i32_66 dim 1 : vector<8x512xf32>, i32 -> vector<8x512xf32>
    %c23 = arith.constant 23 : index
    %c0_67 = arith.constant 0 : index
    %c0_68 = arith.constant 0 : index
    %144 = vector.load %arg2[%c23, %c0_67, %c0_68] : memref<144x8x128xf32, #tpu.memory_space<vmem>>, vector<1x8x128xf32>
    %145 = vector.shape_cast %144 : vector<1x8x128xf32> to vector<8x128xf32>
    %146 = tpu.concatenate %145, %145, %145, %145 in 1 : vector<8x128xf32>, vector<8x128xf32>, vector<8x128xf32>, vector<8x128xf32> -> vector<8x512xf32>
    %147 = arith.mulf %146, %143 : vector<8x512xf32>
    %148 = arith.addf %142, %147 : vector<8x512xf32>
    %c493_i32_69 = arith.constant 493 : i32
    %149 = tpu.dynamic_rotate %113 by %c493_i32_69 dim 1 : vector<8x512xf32>, i32 -> vector<8x512xf32>
    %c24 = arith.constant 24 : index
    %c0_70 = arith.constant 0 : index
    %c0_71 = arith.constant 0 : index
    %150 = vector.load %arg2[%c24, %c0_70, %c0_71] : memref<144x8x128xf32, #tpu.memory_space<vmem>>, vector<1x8x128xf32>
    %151 = vector.shape_cast %150 : vector<1x8x128xf32> to vector<8x128xf32>
    %152 = tpu.concatenate %151, %151, %151, %151 in 1 : vector<8x128xf32>, vector<8x128xf32>, vector<8x128xf32>, vector<8x128xf32> -> vector<8x512xf32>
    %153 = arith.mulf %152, %149 : vector<8x512xf32>
    %154 = arith.addf %148, %153 : vector<8x512xf32>
    %c492_i32_72 = arith.constant 492 : i32
    %155 = tpu.dynamic_rotate %113 by %c492_i32_72 dim 1 : vector<8x512xf32>, i32 -> vector<8x512xf32>
    %c25 = arith.constant 25 : index
    %c0_73 = arith.constant 0 : index
    %c0_74 = arith.constant 0 : index
    %156 = vector.load %arg2[%c25, %c0_73, %c0_74] : memref<144x8x128xf32, #tpu.memory_space<vmem>>, vector<1x8x128xf32>
    %157 = vector.shape_cast %156 : vector<1x8x128xf32> to vector<8x128xf32>
    %158 = tpu.concatenate %157, %157, %157, %157 in 1 : vector<8x128xf32>, vector<8x128xf32>, vector<8x128xf32>, vector<8x128xf32> -> vector<8x512xf32>
    %159 = arith.mulf %158, %155 : vector<8x512xf32>
    %160 = arith.addf %154, %159 : vector<8x512xf32>
    %c491_i32_75 = arith.constant 491 : i32
    %161 = tpu.dynamic_rotate %113 by %c491_i32_75 dim 1 : vector<8x512xf32>, i32 -> vector<8x512xf32>
    %c26 = arith.constant 26 : index
    %c0_76 = arith.constant 0 : index
    %c0_77 = arith.constant 0 : index
    %162 = vector.load %arg2[%c26, %c0_76, %c0_77] : memref<144x8x128xf32, #tpu.memory_space<vmem>>, vector<1x8x128xf32>
    %163 = vector.shape_cast %162 : vector<1x8x128xf32> to vector<8x128xf32>
    %164 = tpu.concatenate %163, %163, %163, %163 in 1 : vector<8x128xf32>, vector<8x128xf32>, vector<8x128xf32>, vector<8x128xf32> -> vector<8x512xf32>
    %165 = arith.mulf %164, %161 : vector<8x512xf32>
    %166 = arith.addf %160, %165 : vector<8x512xf32>
    %c2_i32 = arith.constant 2 : i32
    %167 = tpu.dynamic_rotate %2 by %c2_i32 dim 0 : vector<8x512xf32>, i32 -> vector<8x512xf32>
    %c21_i32_78 = arith.constant 21 : i32
    %168 = tpu.dynamic_rotate %167 by %c21_i32_78 dim 1 : vector<8x512xf32>, i32 -> vector<8x512xf32>
    %c27 = arith.constant 27 : index
    %c0_79 = arith.constant 0 : index
    %c0_80 = arith.constant 0 : index
    %169 = vector.load %arg2[%c27, %c0_79, %c0_80] : memref<144x8x128xf32, #tpu.memory_space<vmem>>, vector<1x8x128xf32>
    %170 = vector.shape_cast %169 : vector<1x8x128xf32> to vector<8x128xf32>
    %171 = tpu.concatenate %170, %170, %170, %170 in 1 : vector<8x128xf32>, vector<8x128xf32>, vector<8x128xf32>, vector<8x128xf32> -> vector<8x512xf32>
    %172 = arith.mulf %171, %168 : vector<8x512xf32>
    %173 = arith.addf %166, %172 : vector<8x512xf32>
    %c20_i32_81 = arith.constant 20 : i32
    %174 = tpu.dynamic_rotate %167 by %c20_i32_81 dim 1 : vector<8x512xf32>, i32 -> vector<8x512xf32>
    %c28 = arith.constant 28 : index
    %c0_82 = arith.constant 0 : index
    %c0_83 = arith.constant 0 : index
    %175 = vector.load %arg2[%c28, %c0_82, %c0_83] : memref<144x8x128xf32, #tpu.memory_space<vmem>>, vector<1x8x128xf32>
    %176 = vector.shape_cast %175 : vector<1x8x128xf32> to vector<8x128xf32>
    %177 = tpu.concatenate %176, %176, %176, %176 in 1 : vector<8x128xf32>, vector<8x128xf32>, vector<8x128xf32>, vector<8x128xf32> -> vector<8x512xf32>
    %178 = arith.mulf %177, %174 : vector<8x512xf32>
    %179 = arith.addf %173, %178 : vector<8x512xf32>
    %c19_i32_84 = arith.constant 19 : i32
    %180 = tpu.dynamic_rotate %167 by %c19_i32_84 dim 1 : vector<8x512xf32>, i32 -> vector<8x512xf32>
    %c29 = arith.constant 29 : index
    %c0_85 = arith.constant 0 : index
    %c0_86 = arith.constant 0 : index
    %181 = vector.load %arg2[%c29, %c0_85, %c0_86] : memref<144x8x128xf32, #tpu.memory_space<vmem>>, vector<1x8x128xf32>
    %182 = vector.shape_cast %181 : vector<1x8x128xf32> to vector<8x128xf32>
    %183 = tpu.concatenate %182, %182, %182, %182 in 1 : vector<8x128xf32>, vector<8x128xf32>, vector<8x128xf32>, vector<8x128xf32> -> vector<8x512xf32>
    %184 = arith.mulf %183, %180 : vector<8x512xf32>
    %185 = arith.addf %179, %184 : vector<8x512xf32>
    %c1_i32_87 = arith.constant 1 : i32
    %186 = tpu.dynamic_rotate %167 by %c1_i32_87 dim 1 : vector<8x512xf32>, i32 -> vector<8x512xf32>
    %c30 = arith.constant 30 : index
    %c0_88 = arith.constant 0 : index
    %c0_89 = arith.constant 0 : index
    %187 = vector.load %arg2[%c30, %c0_88, %c0_89] : memref<144x8x128xf32, #tpu.memory_space<vmem>>, vector<1x8x128xf32>
    %188 = vector.shape_cast %187 : vector<1x8x128xf32> to vector<8x128xf32>
    %189 = tpu.concatenate %188, %188, %188, %188 in 1 : vector<8x128xf32>, vector<8x128xf32>, vector<8x128xf32>, vector<8x128xf32> -> vector<8x512xf32>
    %190 = arith.mulf %189, %186 : vector<8x512xf32>
    %191 = arith.addf %185, %190 : vector<8x512xf32>
    %c31 = arith.constant 31 : index
    %c0_90 = arith.constant 0 : index
    %c0_91 = arith.constant 0 : index
    %192 = vector.load %arg2[%c31, %c0_90, %c0_91] : memref<144x8x128xf32, #tpu.memory_space<vmem>>, vector<1x8x128xf32>
    %193 = vector.shape_cast %192 : vector<1x8x128xf32> to vector<8x128xf32>
    %194 = tpu.concatenate %193, %193, %193, %193 in 1 : vector<8x128xf32>, vector<8x128xf32>, vector<8x128xf32>, vector<8x128xf32> -> vector<8x512xf32>
    %195 = arith.mulf %194, %167 : vector<8x512xf32>
    %196 = arith.addf %191, %195 : vector<8x512xf32>
    %c511_i32_92 = arith.constant 511 : i32
    %197 = tpu.dynamic_rotate %167 by %c511_i32_92 dim 1 : vector<8x512xf32>, i32 -> vector<8x512xf32>
    %c32 = arith.constant 32 : index
    %c0_93 = arith.constant 0 : index
    %c0_94 = arith.constant 0 : index
    %198 = vector.load %arg2[%c32, %c0_93, %c0_94] : memref<144x8x128xf32, #tpu.memory_space<vmem>>, vector<1x8x128xf32>
    %199 = vector.shape_cast %198 : vector<1x8x128xf32> to vector<8x128xf32>
    %200 = tpu.concatenate %199, %199, %199, %199 in 1 : vector<8x128xf32>, vector<8x128xf32>, vector<8x128xf32>, vector<8x128xf32> -> vector<8x512xf32>
    %201 = arith.mulf %200, %197 : vector<8x512xf32>
    %202 = arith.addf %196, %201 : vector<8x512xf32>
    %c493_i32_95 = arith.constant 493 : i32
    %203 = tpu.dynamic_rotate %167 by %c493_i32_95 dim 1 : vector<8x512xf32>, i32 -> vector<8x512xf32>
    %c33 = arith.constant 33 : index
    %c0_96 = arith.constant 0 : index
    %c0_97 = arith.constant 0 : index
    %204 = vector.load %arg2[%c33, %c0_96, %c0_97] : memref<144x8x128xf32, #tpu.memory_space<vmem>>, vector<1x8x128xf32>
    %205 = vector.shape_cast %204 : vector<1x8x128xf32> to vector<8x128xf32>
    %206 = tpu.concatenate %205, %205, %205, %205 in 1 : vector<8x128xf32>, vector<8x128xf32>, vector<8x128xf32>, vector<8x128xf32> -> vector<8x512xf32>
    %207 = arith.mulf %206, %203 : vector<8x512xf32>
    %208 = arith.addf %202, %207 : vector<8x512xf32>
    %c492_i32_98 = arith.constant 492 : i32
    %209 = tpu.dynamic_rotate %167 by %c492_i32_98 dim 1 : vector<8x512xf32>, i32 -> vector<8x512xf32>
    %c34 = arith.constant 34 : index
    %c0_99 = arith.constant 0 : index
    %c0_100 = arith.constant 0 : index
    %210 = vector.load %arg2[%c34, %c0_99, %c0_100] : memref<144x8x128xf32, #tpu.memory_space<vmem>>, vector<1x8x128xf32>
    %211 = vector.shape_cast %210 : vector<1x8x128xf32> to vector<8x128xf32>
    %212 = tpu.concatenate %211, %211, %211, %211 in 1 : vector<8x128xf32>, vector<8x128xf32>, vector<8x128xf32>, vector<8x128xf32> -> vector<8x512xf32>
    %213 = arith.mulf %212, %209 : vector<8x512xf32>
    %214 = arith.addf %208, %213 : vector<8x512xf32>
    %c491_i32_101 = arith.constant 491 : i32
    %215 = tpu.dynamic_rotate %167 by %c491_i32_101 dim 1 : vector<8x512xf32>, i32 -> vector<8x512xf32>
    %c35 = arith.constant 35 : index
    %c0_102 = arith.constant 0 : index
    %c0_103 = arith.constant 0 : index
    %216 = vector.load %arg2[%c35, %c0_102, %c0_103] : memref<144x8x128xf32, #tpu.memory_space<vmem>>, vector<1x8x128xf32>
    %217 = vector.shape_cast %216 : vector<1x8x128xf32> to vector<8x128xf32>
    %218 = tpu.concatenate %217, %217, %217, %217 in 1 : vector<8x128xf32>, vector<8x128xf32>, vector<8x128xf32>, vector<8x128xf32> -> vector<8x512xf32>
    %219 = arith.mulf %218, %215 : vector<8x512xf32>
    %220 = arith.addf %214, %219 : vector<8x512xf32>
    %cst = arith.constant 0.000000e+00 : f32
    %221 = vector.broadcast %cst : f32 to vector<8x512xf32>
    %222 = arith.cmpf oge, %220, %221 : vector<8x512xf32>
    %cst_104 = arith.constant 1.000000e-01 : f32
    %223 = vector.broadcast %cst_104 : f32 to vector<8x512xf32>
    %224 = arith.mulf %223, %220 : vector<8x512xf32>
    %225 = arith.select %222, %220, %224 : vector<8x512xi1>, vector<8x512xf32>
    %226 = arith.mulf %225, %0 : vector<8x512xf32>
    %c1_105 = arith.constant 1 : index
    %c0_106 = arith.constant 0 : index
    %c0_107 = arith.constant 0 : index
    %227 = vector.load %arg3[%c1_105, %c0_106, %c0_107] : memref<4x8x128xf32, #tpu.memory_space<vmem>>, vector<1x8x128xf32>
    %228 = vector.shape_cast %227 : vector<1x8x128xf32> to vector<8x128xf32>
    %229 = tpu.concatenate %228, %228, %228, %228 in 1 : vector<8x128xf32>, vector<8x128xf32>, vector<8x128xf32>, vector<8x128xf32> -> vector<8x512xf32>
    %c42_i32 = arith.constant 42 : i32
    %230 = tpu.dynamic_rotate %226 by %c42_i32 dim 1 : vector<8x512xf32>, i32 -> vector<8x512xf32>
    %c36 = arith.constant 36 : index
    %c0_108 = arith.constant 0 : index
    %c0_109 = arith.constant 0 : index
    %231 = vector.load %arg2[%c36, %c0_108, %c0_109] : memref<144x8x128xf32, #tpu.memory_space<vmem>>, vector<1x8x128xf32>
    %232 = vector.shape_cast %231 : vector<1x8x128xf32> to vector<8x128xf32>
    %233 = tpu.concatenate %232, %232, %232, %232 in 1 : vector<8x128xf32>, vector<8x128xf32>, vector<8x128xf32>, vector<8x128xf32> -> vector<8x512xf32>
    %234 = arith.mulf %233, %230 : vector<8x512xf32>
    %235 = arith.addf %229, %234 : vector<8x512xf32>
    %c40_i32 = arith.constant 40 : i32
    %236 = tpu.dynamic_rotate %226 by %c40_i32 dim 1 : vector<8x512xf32>, i32 -> vector<8x512xf32>
    %c37 = arith.constant 37 : index
    %c0_110 = arith.constant 0 : index
    %c0_111 = arith.constant 0 : index
    %237 = vector.load %arg2[%c37, %c0_110, %c0_111] : memref<144x8x128xf32, #tpu.memory_space<vmem>>, vector<1x8x128xf32>
    %238 = vector.shape_cast %237 : vector<1x8x128xf32> to vector<8x128xf32>
    %239 = tpu.concatenate %238, %238, %238, %238 in 1 : vector<8x128xf32>, vector<8x128xf32>, vector<8x128xf32>, vector<8x128xf32> -> vector<8x512xf32>
    %240 = arith.mulf %239, %236 : vector<8x512xf32>
    %241 = arith.addf %235, %240 : vector<8x512xf32>
    %c38_i32 = arith.constant 38 : i32
    %242 = tpu.dynamic_rotate %226 by %c38_i32 dim 1 : vector<8x512xf32>, i32 -> vector<8x512xf32>
    %c38 = arith.constant 38 : index
    %c0_112 = arith.constant 0 : index
    %c0_113 = arith.constant 0 : index
    %243 = vector.load %arg2[%c38, %c0_112, %c0_113] : memref<144x8x128xf32, #tpu.memory_space<vmem>>, vector<1x8x128xf32>
    %244 = vector.shape_cast %243 : vector<1x8x128xf32> to vector<8x128xf32>
    %245 = tpu.concatenate %244, %244, %244, %244 in 1 : vector<8x128xf32>, vector<8x128xf32>, vector<8x128xf32>, vector<8x128xf32> -> vector<8x512xf32>
    %246 = arith.mulf %245, %242 : vector<8x512xf32>
    %247 = arith.addf %241, %246 : vector<8x512xf32>
    %c2_i32_114 = arith.constant 2 : i32
    %248 = tpu.dynamic_rotate %226 by %c2_i32_114 dim 1 : vector<8x512xf32>, i32 -> vector<8x512xf32>
    %c39 = arith.constant 39 : index
    %c0_115 = arith.constant 0 : index
    %c0_116 = arith.constant 0 : index
    %249 = vector.load %arg2[%c39, %c0_115, %c0_116] : memref<144x8x128xf32, #tpu.memory_space<vmem>>, vector<1x8x128xf32>
    %250 = vector.shape_cast %249 : vector<1x8x128xf32> to vector<8x128xf32>
    %251 = tpu.concatenate %250, %250, %250, %250 in 1 : vector<8x128xf32>, vector<8x128xf32>, vector<8x128xf32>, vector<8x128xf32> -> vector<8x512xf32>
    %252 = arith.mulf %251, %248 : vector<8x512xf32>
    %253 = arith.addf %247, %252 : vector<8x512xf32>
    %c40 = arith.constant 40 : index
    %c0_117 = arith.constant 0 : index
    %c0_118 = arith.constant 0 : index
    %254 = vector.load %arg2[%c40, %c0_117, %c0_118] : memref<144x8x128xf32, #tpu.memory_space<vmem>>, vector<1x8x128xf32>
    %255 = vector.shape_cast %254 : vector<1x8x128xf32> to vector<8x128xf32>
    %256 = tpu.concatenate %255, %255, %255, %255 in 1 : vector<8x128xf32>, vector<8x128xf32>, vector<8x128xf32>, vector<8x128xf32> -> vector<8x512xf32>
    %257 = arith.mulf %256, %226 : vector<8x512xf32>
    %258 = arith.addf %253, %257 : vector<8x512xf32>
    %c510_i32 = arith.constant 510 : i32
    %259 = tpu.dynamic_rotate %226 by %c510_i32 dim 1 : vector<8x512xf32>, i32 -> vector<8x512xf32>
    %c41 = arith.constant 41 : index
    %c0_119 = arith.constant 0 : index
    %c0_120 = arith.constant 0 : index
    %260 = vector.load %arg2[%c41, %c0_119, %c0_120] : memref<144x8x128xf32, #tpu.memory_space<vmem>>, vector<1x8x128xf32>
    %261 = vector.shape_cast %260 : vector<1x8x128xf32> to vector<8x128xf32>
    %262 = tpu.concatenate %261, %261, %261, %261 in 1 : vector<8x128xf32>, vector<8x128xf32>, vector<8x128xf32>, vector<8x128xf32> -> vector<8x512xf32>
    %263 = arith.mulf %262, %259 : vector<8x512xf32>
    %264 = arith.addf %258, %263 : vector<8x512xf32>
    %c474_i32 = arith.constant 474 : i32
    %265 = tpu.dynamic_rotate %226 by %c474_i32 dim 1 : vector<8x512xf32>, i32 -> vector<8x512xf32>
    %c42 = arith.constant 42 : index
    %c0_121 = arith.constant 0 : index
    %c0_122 = arith.constant 0 : index
    %266 = vector.load %arg2[%c42, %c0_121, %c0_122] : memref<144x8x128xf32, #tpu.memory_space<vmem>>, vector<1x8x128xf32>
    %267 = vector.shape_cast %266 : vector<1x8x128xf32> to vector<8x128xf32>
    %268 = tpu.concatenate %267, %267, %267, %267 in 1 : vector<8x128xf32>, vector<8x128xf32>, vector<8x128xf32>, vector<8x128xf32> -> vector<8x512xf32>
    %269 = arith.mulf %268, %265 : vector<8x512xf32>
    %270 = arith.addf %264, %269 : vector<8x512xf32>
    %c472_i32 = arith.constant 472 : i32
    %271 = tpu.dynamic_rotate %226 by %c472_i32 dim 1 : vector<8x512xf32>, i32 -> vector<8x512xf32>
    %c43 = arith.constant 43 : index
    %c0_123 = arith.constant 0 : index
    %c0_124 = arith.constant 0 : index
    %272 = vector.load %arg2[%c43, %c0_123, %c0_124] : memref<144x8x128xf32, #tpu.memory_space<vmem>>, vector<1x8x128xf32>
    %273 = vector.shape_cast %272 : vector<1x8x128xf32> to vector<8x128xf32>
    %274 = tpu.concatenate %273, %273, %273, %273 in 1 : vector<8x128xf32>, vector<8x128xf32>, vector<8x128xf32>, vector<8x128xf32> -> vector<8x512xf32>
    %275 = arith.mulf %274, %271 : vector<8x512xf32>
    %276 = arith.addf %270, %275 : vector<8x512xf32>
    %c470_i32 = arith.constant 470 : i32
    %277 = tpu.dynamic_rotate %226 by %c470_i32 dim 1 : vector<8x512xf32>, i32 -> vector<8x512xf32>
    %c44 = arith.constant 44 : index
    %c0_125 = arith.constant 0 : index
    %c0_126 = arith.constant 0 : index
    %278 = vector.load %arg2[%c44, %c0_125, %c0_126] : memref<144x8x128xf32, #tpu.memory_space<vmem>>, vector<1x8x128xf32>
    %279 = vector.shape_cast %278 : vector<1x8x128xf32> to vector<8x128xf32>
    %280 = tpu.concatenate %279, %279, %279, %279 in 1 : vector<8x128xf32>, vector<8x128xf32>, vector<8x128xf32>, vector<8x128xf32> -> vector<8x512xf32>
    %281 = arith.mulf %280, %277 : vector<8x512xf32>
    %282 = arith.addf %276, %281 : vector<8x512xf32>
    %c6_i32_127 = arith.constant 6 : i32
    %283 = tpu.dynamic_rotate %226 by %c6_i32_127 dim 0 : vector<8x512xf32>, i32 -> vector<8x512xf32>
    %c42_i32_128 = arith.constant 42 : i32
    %284 = tpu.dynamic_rotate %283 by %c42_i32_128 dim 1 : vector<8x512xf32>, i32 -> vector<8x512xf32>
    %c45 = arith.constant 45 : index
    %c0_129 = arith.constant 0 : index
    %c0_130 = arith.constant 0 : index
    %285 = vector.load %arg2[%c45, %c0_129, %c0_130] : memref<144x8x128xf32, #tpu.memory_space<vmem>>, vector<1x8x128xf32>
    %286 = vector.shape_cast %285 : vector<1x8x128xf32> to vector<8x128xf32>
    %287 = tpu.concatenate %286, %286, %286, %286 in 1 : vector<8x128xf32>, vector<8x128xf32>, vector<8x128xf32>, vector<8x128xf32> -> vector<8x512xf32>
    %288 = arith.mulf %287, %284 : vector<8x512xf32>
    %289 = arith.addf %282, %288 : vector<8x512xf32>
    %c40_i32_131 = arith.constant 40 : i32
    %290 = tpu.dynamic_rotate %283 by %c40_i32_131 dim 1 : vector<8x512xf32>, i32 -> vector<8x512xf32>
    %c46 = arith.constant 46 : index
    %c0_132 = arith.constant 0 : index
    %c0_133 = arith.constant 0 : index
    %291 = vector.load %arg2[%c46, %c0_132, %c0_133] : memref<144x8x128xf32, #tpu.memory_space<vmem>>, vector<1x8x128xf32>
    %292 = vector.shape_cast %291 : vector<1x8x128xf32> to vector<8x128xf32>
    %293 = tpu.concatenate %292, %292, %292, %292 in 1 : vector<8x128xf32>, vector<8x128xf32>, vector<8x128xf32>, vector<8x128xf32> -> vector<8x512xf32>
    %294 = arith.mulf %293, %290 : vector<8x512xf32>
    %295 = arith.addf %289, %294 : vector<8x512xf32>
    %c38_i32_134 = arith.constant 38 : i32
    %296 = tpu.dynamic_rotate %283 by %c38_i32_134 dim 1 : vector<8x512xf32>, i32 -> vector<8x512xf32>
    %c47 = arith.constant 47 : index
    %c0_135 = arith.constant 0 : index
    %c0_136 = arith.constant 0 : index
    %297 = vector.load %arg2[%c47, %c0_135, %c0_136] : memref<144x8x128xf32, #tpu.memory_space<vmem>>, vector<1x8x128xf32>
    %298 = vector.shape_cast %297 : vector<1x8x128xf32> to vector<8x128xf32>
    %299 = tpu.concatenate %298, %298, %298, %298 in 1 : vector<8x128xf32>, vector<8x128xf32>, vector<8x128xf32>, vector<8x128xf32> -> vector<8x512xf32>
    %300 = arith.mulf %299, %296 : vector<8x512xf32>
    %301 = arith.addf %295, %300 : vector<8x512xf32>
    %c2_i32_137 = arith.constant 2 : i32
    %302 = tpu.dynamic_rotate %283 by %c2_i32_137 dim 1 : vector<8x512xf32>, i32 -> vector<8x512xf32>
    %c48 = arith.constant 48 : index
    %c0_138 = arith.constant 0 : index
    %c0_139 = arith.constant 0 : index
    %303 = vector.load %arg2[%c48, %c0_138, %c0_139] : memref<144x8x128xf32, #tpu.memory_space<vmem>>, vector<1x8x128xf32>
    %304 = vector.shape_cast %303 : vector<1x8x128xf32> to vector<8x128xf32>
    %305 = tpu.concatenate %304, %304, %304, %304 in 1 : vector<8x128xf32>, vector<8x128xf32>, vector<8x128xf32>, vector<8x128xf32> -> vector<8x512xf32>
    %306 = arith.mulf %305, %302 : vector<8x512xf32>
    %307 = arith.addf %301, %306 : vector<8x512xf32>
    %c49 = arith.constant 49 : index
    %c0_140 = arith.constant 0 : index
    %c0_141 = arith.constant 0 : index
    %308 = vector.load %arg2[%c49, %c0_140, %c0_141] : memref<144x8x128xf32, #tpu.memory_space<vmem>>, vector<1x8x128xf32>
    %309 = vector.shape_cast %308 : vector<1x8x128xf32> to vector<8x128xf32>
    %310 = tpu.concatenate %309, %309, %309, %309 in 1 : vector<8x128xf32>, vector<8x128xf32>, vector<8x128xf32>, vector<8x128xf32> -> vector<8x512xf32>
    %311 = arith.mulf %310, %283 : vector<8x512xf32>
    %312 = arith.addf %307, %311 : vector<8x512xf32>
    %c510_i32_142 = arith.constant 510 : i32
    %313 = tpu.dynamic_rotate %283 by %c510_i32_142 dim 1 : vector<8x512xf32>, i32 -> vector<8x512xf32>
    %c50 = arith.constant 50 : index
    %c0_143 = arith.constant 0 : index
    %c0_144 = arith.constant 0 : index
    %314 = vector.load %arg2[%c50, %c0_143, %c0_144] : memref<144x8x128xf32, #tpu.memory_space<vmem>>, vector<1x8x128xf32>
    %315 = vector.shape_cast %314 : vector<1x8x128xf32> to vector<8x128xf32>
    %316 = tpu.concatenate %315, %315, %315, %315 in 1 : vector<8x128xf32>, vector<8x128xf32>, vector<8x128xf32>, vector<8x128xf32> -> vector<8x512xf32>
    %317 = arith.mulf %316, %313 : vector<8x512xf32>
    %318 = arith.addf %312, %317 : vector<8x512xf32>
    %c474_i32_145 = arith.constant 474 : i32
    %319 = tpu.dynamic_rotate %283 by %c474_i32_145 dim 1 : vector<8x512xf32>, i32 -> vector<8x512xf32>
    %c51 = arith.constant 51 : index
    %c0_146 = arith.constant 0 : index
    %c0_147 = arith.constant 0 : index
    %320 = vector.load %arg2[%c51, %c0_146, %c0_147] : memref<144x8x128xf32, #tpu.memory_space<vmem>>, vector<1x8x128xf32>
    %321 = vector.shape_cast %320 : vector<1x8x128xf32> to vector<8x128xf32>
    %322 = tpu.concatenate %321, %321, %321, %321 in 1 : vector<8x128xf32>, vector<8x128xf32>, vector<8x128xf32>, vector<8x128xf32> -> vector<8x512xf32>
    %323 = arith.mulf %322, %319 : vector<8x512xf32>
    %324 = arith.addf %318, %323 : vector<8x512xf32>
    %c472_i32_148 = arith.constant 472 : i32
    %325 = tpu.dynamic_rotate %283 by %c472_i32_148 dim 1 : vector<8x512xf32>, i32 -> vector<8x512xf32>
    %c52 = arith.constant 52 : index
    %c0_149 = arith.constant 0 : index
    %c0_150 = arith.constant 0 : index
    %326 = vector.load %arg2[%c52, %c0_149, %c0_150] : memref<144x8x128xf32, #tpu.memory_space<vmem>>, vector<1x8x128xf32>
    %327 = vector.shape_cast %326 : vector<1x8x128xf32> to vector<8x128xf32>
    %328 = tpu.concatenate %327, %327, %327, %327 in 1 : vector<8x128xf32>, vector<8x128xf32>, vector<8x128xf32>, vector<8x128xf32> -> vector<8x512xf32>
    %329 = arith.mulf %328, %325 : vector<8x512xf32>
    %330 = arith.addf %324, %329 : vector<8x512xf32>
    %c470_i32_151 = arith.constant 470 : i32
    %331 = tpu.dynamic_rotate %283 by %c470_i32_151 dim 1 : vector<8x512xf32>, i32 -> vector<8x512xf32>
    %c53 = arith.constant 53 : index
    %c0_152 = arith.constant 0 : index
    %c0_153 = arith.constant 0 : index
    %332 = vector.load %arg2[%c53, %c0_152, %c0_153] : memref<144x8x128xf32, #tpu.memory_space<vmem>>, vector<1x8x128xf32>
    %333 = vector.shape_cast %332 : vector<1x8x128xf32> to vector<8x128xf32>
    %334 = tpu.concatenate %333, %333, %333, %333 in 1 : vector<8x128xf32>, vector<8x128xf32>, vector<8x128xf32>, vector<8x128xf32> -> vector<8x512xf32>
    %335 = arith.mulf %334, %331 : vector<8x512xf32>
    %336 = arith.addf %330, %335 : vector<8x512xf32>
    %c4_i32_154 = arith.constant 4 : i32
    %337 = tpu.dynamic_rotate %226 by %c4_i32_154 dim 0 : vector<8x512xf32>, i32 -> vector<8x512xf32>
    %c42_i32_155 = arith.constant 42 : i32
    %338 = tpu.dynamic_rotate %337 by %c42_i32_155 dim 1 : vector<8x512xf32>, i32 -> vector<8x512xf32>
    %c54 = arith.constant 54 : index
    %c0_156 = arith.constant 0 : index
    %c0_157 = arith.constant 0 : index
    %339 = vector.load %arg2[%c54, %c0_156, %c0_157] : memref<144x8x128xf32, #tpu.memory_space<vmem>>, vector<1x8x128xf32>
    %340 = vector.shape_cast %339 : vector<1x8x128xf32> to vector<8x128xf32>
    %341 = tpu.concatenate %340, %340, %340, %340 in 1 : vector<8x128xf32>, vector<8x128xf32>, vector<8x128xf32>, vector<8x128xf32> -> vector<8x512xf32>
    %342 = arith.mulf %341, %338 : vector<8x512xf32>
    %343 = arith.addf %336, %342 : vector<8x512xf32>
    %c40_i32_158 = arith.constant 40 : i32
    %344 = tpu.dynamic_rotate %337 by %c40_i32_158 dim 1 : vector<8x512xf32>, i32 -> vector<8x512xf32>
    %c55 = arith.constant 55 : index
    %c0_159 = arith.constant 0 : index
    %c0_160 = arith.constant 0 : index
    %345 = vector.load %arg2[%c55, %c0_159, %c0_160] : memref<144x8x128xf32, #tpu.memory_space<vmem>>, vector<1x8x128xf32>
    %346 = vector.shape_cast %345 : vector<1x8x128xf32> to vector<8x128xf32>
    %347 = tpu.concatenate %346, %346, %346, %346 in 1 : vector<8x128xf32>, vector<8x128xf32>, vector<8x128xf32>, vector<8x128xf32> -> vector<8x512xf32>
    %348 = arith.mulf %347, %344 : vector<8x512xf32>
    %349 = arith.addf %343, %348 : vector<8x512xf32>
    %c38_i32_161 = arith.constant 38 : i32
    %350 = tpu.dynamic_rotate %337 by %c38_i32_161 dim 1 : vector<8x512xf32>, i32 -> vector<8x512xf32>
    %c56 = arith.constant 56 : index
    %c0_162 = arith.constant 0 : index
    %c0_163 = arith.constant 0 : index
    %351 = vector.load %arg2[%c56, %c0_162, %c0_163] : memref<144x8x128xf32, #tpu.memory_space<vmem>>, vector<1x8x128xf32>
    %352 = vector.shape_cast %351 : vector<1x8x128xf32> to vector<8x128xf32>
    %353 = tpu.concatenate %352, %352, %352, %352 in 1 : vector<8x128xf32>, vector<8x128xf32>, vector<8x128xf32>, vector<8x128xf32> -> vector<8x512xf32>
    %354 = arith.mulf %353, %350 : vector<8x512xf32>
    %355 = arith.addf %349, %354 : vector<8x512xf32>
    %c2_i32_164 = arith.constant 2 : i32
    %356 = tpu.dynamic_rotate %337 by %c2_i32_164 dim 1 : vector<8x512xf32>, i32 -> vector<8x512xf32>
    %c57 = arith.constant 57 : index
    %c0_165 = arith.constant 0 : index
    %c0_166 = arith.constant 0 : index
    %357 = vector.load %arg2[%c57, %c0_165, %c0_166] : memref<144x8x128xf32, #tpu.memory_space<vmem>>, vector<1x8x128xf32>
    %358 = vector.shape_cast %357 : vector<1x8x128xf32> to vector<8x128xf32>
    %359 = tpu.concatenate %358, %358, %358, %358 in 1 : vector<8x128xf32>, vector<8x128xf32>, vector<8x128xf32>, vector<8x128xf32> -> vector<8x512xf32>
    %360 = arith.mulf %359, %356 : vector<8x512xf32>
    %361 = arith.addf %355, %360 : vector<8x512xf32>
    %c58 = arith.constant 58 : index
    %c0_167 = arith.constant 0 : index
    %c0_168 = arith.constant 0 : index
    %362 = vector.load %arg2[%c58, %c0_167, %c0_168] : memref<144x8x128xf32, #tpu.memory_space<vmem>>, vector<1x8x128xf32>
    %363 = vector.shape_cast %362 : vector<1x8x128xf32> to vector<8x128xf32>
    %364 = tpu.concatenate %363, %363, %363, %363 in 1 : vector<8x128xf32>, vector<8x128xf32>, vector<8x128xf32>, vector<8x128xf32> -> vector<8x512xf32>
    %365 = arith.mulf %364, %337 : vector<8x512xf32>
    %366 = arith.addf %361, %365 : vector<8x512xf32>
    %c510_i32_169 = arith.constant 510 : i32
    %367 = tpu.dynamic_rotate %337 by %c510_i32_169 dim 1 : vector<8x512xf32>, i32 -> vector<8x512xf32>
    %c59 = arith.constant 59 : index
    %c0_170 = arith.constant 0 : index
    %c0_171 = arith.constant 0 : index
    %368 = vector.load %arg2[%c59, %c0_170, %c0_171] : memref<144x8x128xf32, #tpu.memory_space<vmem>>, vector<1x8x128xf32>
    %369 = vector.shape_cast %368 : vector<1x8x128xf32> to vector<8x128xf32>
    %370 = tpu.concatenate %369, %369, %369, %369 in 1 : vector<8x128xf32>, vector<8x128xf32>, vector<8x128xf32>, vector<8x128xf32> -> vector<8x512xf32>
    %371 = arith.mulf %370, %367 : vector<8x512xf32>
    %372 = arith.addf %366, %371 : vector<8x512xf32>
    %c474_i32_172 = arith.constant 474 : i32
    %373 = tpu.dynamic_rotate %337 by %c474_i32_172 dim 1 : vector<8x512xf32>, i32 -> vector<8x512xf32>
    %c60 = arith.constant 60 : index
    %c0_173 = arith.constant 0 : index
    %c0_174 = arith.constant 0 : index
    %374 = vector.load %arg2[%c60, %c0_173, %c0_174] : memref<144x8x128xf32, #tpu.memory_space<vmem>>, vector<1x8x128xf32>
    %375 = vector.shape_cast %374 : vector<1x8x128xf32> to vector<8x128xf32>
    %376 = tpu.concatenate %375, %375, %375, %375 in 1 : vector<8x128xf32>, vector<8x128xf32>, vector<8x128xf32>, vector<8x128xf32> -> vector<8x512xf32>
    %377 = arith.mulf %376, %373 : vector<8x512xf32>
    %378 = arith.addf %372, %377 : vector<8x512xf32>
    %c472_i32_175 = arith.constant 472 : i32
    %379 = tpu.dynamic_rotate %337 by %c472_i32_175 dim 1 : vector<8x512xf32>, i32 -> vector<8x512xf32>
    %c61 = arith.constant 61 : index
    %c0_176 = arith.constant 0 : index
    %c0_177 = arith.constant 0 : index
    %380 = vector.load %arg2[%c61, %c0_176, %c0_177] : memref<144x8x128xf32, #tpu.memory_space<vmem>>, vector<1x8x128xf32>
    %381 = vector.shape_cast %380 : vector<1x8x128xf32> to vector<8x128xf32>
    %382 = tpu.concatenate %381, %381, %381, %381 in 1 : vector<8x128xf32>, vector<8x128xf32>, vector<8x128xf32>, vector<8x128xf32> -> vector<8x512xf32>
    %383 = arith.mulf %382, %379 : vector<8x512xf32>
    %384 = arith.addf %378, %383 : vector<8x512xf32>
    %c470_i32_178 = arith.constant 470 : i32
    %385 = tpu.dynamic_rotate %337 by %c470_i32_178 dim 1 : vector<8x512xf32>, i32 -> vector<8x512xf32>
    %c62 = arith.constant 62 : index
    %c0_179 = arith.constant 0 : index
    %c0_180 = arith.constant 0 : index
    %386 = vector.load %arg2[%c62, %c0_179, %c0_180] : memref<144x8x128xf32, #tpu.memory_space<vmem>>, vector<1x8x128xf32>
    %387 = vector.shape_cast %386 : vector<1x8x128xf32> to vector<8x128xf32>
    %388 = tpu.concatenate %387, %387, %387, %387 in 1 : vector<8x128xf32>, vector<8x128xf32>, vector<8x128xf32>, vector<8x128xf32> -> vector<8x512xf32>
    %389 = arith.mulf %388, %385 : vector<8x512xf32>
    %390 = arith.addf %384, %389 : vector<8x512xf32>
    %c2_i32_181 = arith.constant 2 : i32
    %391 = tpu.dynamic_rotate %226 by %c2_i32_181 dim 0 : vector<8x512xf32>, i32 -> vector<8x512xf32>
    %c42_i32_182 = arith.constant 42 : i32
    %392 = tpu.dynamic_rotate %391 by %c42_i32_182 dim 1 : vector<8x512xf32>, i32 -> vector<8x512xf32>
    %c63 = arith.constant 63 : index
    %c0_183 = arith.constant 0 : index
    %c0_184 = arith.constant 0 : index
    %393 = vector.load %arg2[%c63, %c0_183, %c0_184] : memref<144x8x128xf32, #tpu.memory_space<vmem>>, vector<1x8x128xf32>
    %394 = vector.shape_cast %393 : vector<1x8x128xf32> to vector<8x128xf32>
    %395 = tpu.concatenate %394, %394, %394, %394 in 1 : vector<8x128xf32>, vector<8x128xf32>, vector<8x128xf32>, vector<8x128xf32> -> vector<8x512xf32>
    %396 = arith.mulf %395, %392 : vector<8x512xf32>
    %397 = arith.addf %390, %396 : vector<8x512xf32>
    %c40_i32_185 = arith.constant 40 : i32
    %398 = tpu.dynamic_rotate %391 by %c40_i32_185 dim 1 : vector<8x512xf32>, i32 -> vector<8x512xf32>
    %c64 = arith.constant 64 : index
    %c0_186 = arith.constant 0 : index
    %c0_187 = arith.constant 0 : index
    %399 = vector.load %arg2[%c64, %c0_186, %c0_187] : memref<144x8x128xf32, #tpu.memory_space<vmem>>, vector<1x8x128xf32>
    %400 = vector.shape_cast %399 : vector<1x8x128xf32> to vector<8x128xf32>
    %401 = tpu.concatenate %400, %400, %400, %400 in 1 : vector<8x128xf32>, vector<8x128xf32>, vector<8x128xf32>, vector<8x128xf32> -> vector<8x512xf32>
    %402 = arith.mulf %401, %398 : vector<8x512xf32>
    %403 = arith.addf %397, %402 : vector<8x512xf32>
    %c38_i32_188 = arith.constant 38 : i32
    %404 = tpu.dynamic_rotate %391 by %c38_i32_188 dim 1 : vector<8x512xf32>, i32 -> vector<8x512xf32>
    %c65 = arith.constant 65 : index
    %c0_189 = arith.constant 0 : index
    %c0_190 = arith.constant 0 : index
    %405 = vector.load %arg2[%c65, %c0_189, %c0_190] : memref<144x8x128xf32, #tpu.memory_space<vmem>>, vector<1x8x128xf32>
    %406 = vector.shape_cast %405 : vector<1x8x128xf32> to vector<8x128xf32>
    %407 = tpu.concatenate %406, %406, %406, %406 in 1 : vector<8x128xf32>, vector<8x128xf32>, vector<8x128xf32>, vector<8x128xf32> -> vector<8x512xf32>
    %408 = arith.mulf %407, %404 : vector<8x512xf32>
    %409 = arith.addf %403, %408 : vector<8x512xf32>
    %c2_i32_191 = arith.constant 2 : i32
    %410 = tpu.dynamic_rotate %391 by %c2_i32_191 dim 1 : vector<8x512xf32>, i32 -> vector<8x512xf32>
    %c66 = arith.constant 66 : index
    %c0_192 = arith.constant 0 : index
    %c0_193 = arith.constant 0 : index
    %411 = vector.load %arg2[%c66, %c0_192, %c0_193] : memref<144x8x128xf32, #tpu.memory_space<vmem>>, vector<1x8x128xf32>
    %412 = vector.shape_cast %411 : vector<1x8x128xf32> to vector<8x128xf32>
    %413 = tpu.concatenate %412, %412, %412, %412 in 1 : vector<8x128xf32>, vector<8x128xf32>, vector<8x128xf32>, vector<8x128xf32> -> vector<8x512xf32>
    %414 = arith.mulf %413, %410 : vector<8x512xf32>
    %415 = arith.addf %409, %414 : vector<8x512xf32>
    %c67 = arith.constant 67 : index
    %c0_194 = arith.constant 0 : index
    %c0_195 = arith.constant 0 : index
    %416 = vector.load %arg2[%c67, %c0_194, %c0_195] : memref<144x8x128xf32, #tpu.memory_space<vmem>>, vector<1x8x128xf32>
    %417 = vector.shape_cast %416 : vector<1x8x128xf32> to vector<8x128xf32>
    %418 = tpu.concatenate %417, %417, %417, %417 in 1 : vector<8x128xf32>, vector<8x128xf32>, vector<8x128xf32>, vector<8x128xf32> -> vector<8x512xf32>
    %419 = arith.mulf %418, %391 : vector<8x512xf32>
    %420 = arith.addf %415, %419 : vector<8x512xf32>
    %c510_i32_196 = arith.constant 510 : i32
    %421 = tpu.dynamic_rotate %391 by %c510_i32_196 dim 1 : vector<8x512xf32>, i32 -> vector<8x512xf32>
    %c68 = arith.constant 68 : index
    %c0_197 = arith.constant 0 : index
    %c0_198 = arith.constant 0 : index
    %422 = vector.load %arg2[%c68, %c0_197, %c0_198] : memref<144x8x128xf32, #tpu.memory_space<vmem>>, vector<1x8x128xf32>
    %423 = vector.shape_cast %422 : vector<1x8x128xf32> to vector<8x128xf32>
    %424 = tpu.concatenate %423, %423, %423, %423 in 1 : vector<8x128xf32>, vector<8x128xf32>, vector<8x128xf32>, vector<8x128xf32> -> vector<8x512xf32>
    %425 = arith.mulf %424, %421 : vector<8x512xf32>
    %426 = arith.addf %420, %425 : vector<8x512xf32>
    %c474_i32_199 = arith.constant 474 : i32
    %427 = tpu.dynamic_rotate %391 by %c474_i32_199 dim 1 : vector<8x512xf32>, i32 -> vector<8x512xf32>
    %c69 = arith.constant 69 : index
    %c0_200 = arith.constant 0 : index
    %c0_201 = arith.constant 0 : index
    %428 = vector.load %arg2[%c69, %c0_200, %c0_201] : memref<144x8x128xf32, #tpu.memory_space<vmem>>, vector<1x8x128xf32>
    %429 = vector.shape_cast %428 : vector<1x8x128xf32> to vector<8x128xf32>
    %430 = tpu.concatenate %429, %429, %429, %429 in 1 : vector<8x128xf32>, vector<8x128xf32>, vector<8x128xf32>, vector<8x128xf32> -> vector<8x512xf32>
    %431 = arith.mulf %430, %427 : vector<8x512xf32>
    %432 = arith.addf %426, %431 : vector<8x512xf32>
    %c472_i32_202 = arith.constant 472 : i32
    %433 = tpu.dynamic_rotate %391 by %c472_i32_202 dim 1 : vector<8x512xf32>, i32 -> vector<8x512xf32>
    %c70 = arith.constant 70 : index
    %c0_203 = arith.constant 0 : index
    %c0_204 = arith.constant 0 : index
    %434 = vector.load %arg2[%c70, %c0_203, %c0_204] : memref<144x8x128xf32, #tpu.memory_space<vmem>>, vector<1x8x128xf32>
    %435 = vector.shape_cast %434 : vector<1x8x128xf32> to vector<8x128xf32>
    %436 = tpu.concatenate %435, %435, %435, %435 in 1 : vector<8x128xf32>, vector<8x128xf32>, vector<8x128xf32>, vector<8x128xf32> -> vector<8x512xf32>
    %437 = arith.mulf %436, %433 : vector<8x512xf32>
    %438 = arith.addf %432, %437 : vector<8x512xf32>
    %c470_i32_205 = arith.constant 470 : i32
    %439 = tpu.dynamic_rotate %391 by %c470_i32_205 dim 1 : vector<8x512xf32>, i32 -> vector<8x512xf32>
    %c71 = arith.constant 71 : index
    %c0_206 = arith.constant 0 : index
    %c0_207 = arith.constant 0 : index
    %440 = vector.load %arg2[%c71, %c0_206, %c0_207] : memref<144x8x128xf32, #tpu.memory_space<vmem>>, vector<1x8x128xf32>
    %441 = vector.shape_cast %440 : vector<1x8x128xf32> to vector<8x128xf32>
    %442 = tpu.concatenate %441, %441, %441, %441 in 1 : vector<8x128xf32>, vector<8x128xf32>, vector<8x128xf32>, vector<8x128xf32> -> vector<8x512xf32>
    %443 = arith.mulf %442, %439 : vector<8x512xf32>
    %444 = arith.addf %438, %443 : vector<8x512xf32>
    %445 = arith.addf %444, %2 : vector<8x512xf32>
    %cst_208 = arith.constant 0.000000e+00 : f32
    %446 = vector.broadcast %cst_208 : f32 to vector<8x512xf32>
    %447 = arith.cmpf oge, %445, %446 : vector<8x512xf32>
    %cst_209 = arith.constant 1.000000e-01 : f32
    %448 = vector.broadcast %cst_209 : f32 to vector<8x512xf32>
    %449 = arith.mulf %448, %445 : vector<8x512xf32>
    %450 = arith.select %447, %445, %449 : vector<8x512xi1>, vector<8x512xf32>
    %451 = arith.mulf %450, %0 : vector<8x512xf32>
    %c2_210 = arith.constant 2 : index
    %c0_211 = arith.constant 0 : index
    %c0_212 = arith.constant 0 : index
    %452 = vector.load %arg3[%c2_210, %c0_211, %c0_212] : memref<4x8x128xf32, #tpu.memory_space<vmem>>, vector<1x8x128xf32>
    %453 = vector.shape_cast %452 : vector<1x8x128xf32> to vector<8x128xf32>
    %454 = tpu.concatenate %453, %453, %453, %453 in 1 : vector<8x128xf32>, vector<8x128xf32>, vector<8x128xf32>, vector<8x128xf32> -> vector<8x512xf32>
    %c21_i32_213 = arith.constant 21 : i32
    %455 = tpu.dynamic_rotate %451 by %c21_i32_213 dim 1 : vector<8x512xf32>, i32 -> vector<8x512xf32>
    %c72 = arith.constant 72 : index
    %c0_214 = arith.constant 0 : index
    %c0_215 = arith.constant 0 : index
    %456 = vector.load %arg2[%c72, %c0_214, %c0_215] : memref<144x8x128xf32, #tpu.memory_space<vmem>>, vector<1x8x128xf32>
    %457 = vector.shape_cast %456 : vector<1x8x128xf32> to vector<8x128xf32>
    %458 = tpu.concatenate %457, %457, %457, %457 in 1 : vector<8x128xf32>, vector<8x128xf32>, vector<8x128xf32>, vector<8x128xf32> -> vector<8x512xf32>
    %459 = arith.mulf %458, %455 : vector<8x512xf32>
    %460 = arith.addf %454, %459 : vector<8x512xf32>
    %c20_i32_216 = arith.constant 20 : i32
    %461 = tpu.dynamic_rotate %451 by %c20_i32_216 dim 1 : vector<8x512xf32>, i32 -> vector<8x512xf32>
    %c73 = arith.constant 73 : index
    %c0_217 = arith.constant 0 : index
    %c0_218 = arith.constant 0 : index
    %462 = vector.load %arg2[%c73, %c0_217, %c0_218] : memref<144x8x128xf32, #tpu.memory_space<vmem>>, vector<1x8x128xf32>
    %463 = vector.shape_cast %462 : vector<1x8x128xf32> to vector<8x128xf32>
    %464 = tpu.concatenate %463, %463, %463, %463 in 1 : vector<8x128xf32>, vector<8x128xf32>, vector<8x128xf32>, vector<8x128xf32> -> vector<8x512xf32>
    %465 = arith.mulf %464, %461 : vector<8x512xf32>
    %466 = arith.addf %460, %465 : vector<8x512xf32>
    %c19_i32_219 = arith.constant 19 : i32
    %467 = tpu.dynamic_rotate %451 by %c19_i32_219 dim 1 : vector<8x512xf32>, i32 -> vector<8x512xf32>
    %c74 = arith.constant 74 : index
    %c0_220 = arith.constant 0 : index
    %c0_221 = arith.constant 0 : index
    %468 = vector.load %arg2[%c74, %c0_220, %c0_221] : memref<144x8x128xf32, #tpu.memory_space<vmem>>, vector<1x8x128xf32>
    %469 = vector.shape_cast %468 : vector<1x8x128xf32> to vector<8x128xf32>
    %470 = tpu.concatenate %469, %469, %469, %469 in 1 : vector<8x128xf32>, vector<8x128xf32>, vector<8x128xf32>, vector<8x128xf32> -> vector<8x512xf32>
    %471 = arith.mulf %470, %467 : vector<8x512xf32>
    %472 = arith.addf %466, %471 : vector<8x512xf32>
    %c1_i32_222 = arith.constant 1 : i32
    %473 = tpu.dynamic_rotate %451 by %c1_i32_222 dim 1 : vector<8x512xf32>, i32 -> vector<8x512xf32>
    %c75 = arith.constant 75 : index
    %c0_223 = arith.constant 0 : index
    %c0_224 = arith.constant 0 : index
    %474 = vector.load %arg2[%c75, %c0_223, %c0_224] : memref<144x8x128xf32, #tpu.memory_space<vmem>>, vector<1x8x128xf32>
    %475 = vector.shape_cast %474 : vector<1x8x128xf32> to vector<8x128xf32>
    %476 = tpu.concatenate %475, %475, %475, %475 in 1 : vector<8x128xf32>, vector<8x128xf32>, vector<8x128xf32>, vector<8x128xf32> -> vector<8x512xf32>
    %477 = arith.mulf %476, %473 : vector<8x512xf32>
    %478 = arith.addf %472, %477 : vector<8x512xf32>
    %c76 = arith.constant 76 : index
    %c0_225 = arith.constant 0 : index
    %c0_226 = arith.constant 0 : index
    %479 = vector.load %arg2[%c76, %c0_225, %c0_226] : memref<144x8x128xf32, #tpu.memory_space<vmem>>, vector<1x8x128xf32>
    %480 = vector.shape_cast %479 : vector<1x8x128xf32> to vector<8x128xf32>
    %481 = tpu.concatenate %480, %480, %480, %480 in 1 : vector<8x128xf32>, vector<8x128xf32>, vector<8x128xf32>, vector<8x128xf32> -> vector<8x512xf32>
    %482 = arith.mulf %481, %451 : vector<8x512xf32>
    %483 = arith.addf %478, %482 : vector<8x512xf32>
    %c511_i32_227 = arith.constant 511 : i32
    %484 = tpu.dynamic_rotate %451 by %c511_i32_227 dim 1 : vector<8x512xf32>, i32 -> vector<8x512xf32>
    %c77 = arith.constant 77 : index
    %c0_228 = arith.constant 0 : index
    %c0_229 = arith.constant 0 : index
    %485 = vector.load %arg2[%c77, %c0_228, %c0_229] : memref<144x8x128xf32, #tpu.memory_space<vmem>>, vector<1x8x128xf32>
    %486 = vector.shape_cast %485 : vector<1x8x128xf32> to vector<8x128xf32>
    %487 = tpu.concatenate %486, %486, %486, %486 in 1 : vector<8x128xf32>, vector<8x128xf32>, vector<8x128xf32>, vector<8x128xf32> -> vector<8x512xf32>
    %488 = arith.mulf %487, %484 : vector<8x512xf32>
    %489 = arith.addf %483, %488 : vector<8x512xf32>
    %c493_i32_230 = arith.constant 493 : i32
    %490 = tpu.dynamic_rotate %451 by %c493_i32_230 dim 1 : vector<8x512xf32>, i32 -> vector<8x512xf32>
    %c78 = arith.constant 78 : index
    %c0_231 = arith.constant 0 : index
    %c0_232 = arith.constant 0 : index
    %491 = vector.load %arg2[%c78, %c0_231, %c0_232] : memref<144x8x128xf32, #tpu.memory_space<vmem>>, vector<1x8x128xf32>
    %492 = vector.shape_cast %491 : vector<1x8x128xf32> to vector<8x128xf32>
    %493 = tpu.concatenate %492, %492, %492, %492 in 1 : vector<8x128xf32>, vector<8x128xf32>, vector<8x128xf32>, vector<8x128xf32> -> vector<8x512xf32>
    %494 = arith.mulf %493, %490 : vector<8x512xf32>
    %495 = arith.addf %489, %494 : vector<8x512xf32>
    %c492_i32_233 = arith.constant 492 : i32
    %496 = tpu.dynamic_rotate %451 by %c492_i32_233 dim 1 : vector<8x512xf32>, i32 -> vector<8x512xf32>
    %c79 = arith.constant 79 : index
    %c0_234 = arith.constant 0 : index
    %c0_235 = arith.constant 0 : index
    %497 = vector.load %arg2[%c79, %c0_234, %c0_235] : memref<144x8x128xf32, #tpu.memory_space<vmem>>, vector<1x8x128xf32>
    %498 = vector.shape_cast %497 : vector<1x8x128xf32> to vector<8x128xf32>
    %499 = tpu.concatenate %498, %498, %498, %498 in 1 : vector<8x128xf32>, vector<8x128xf32>, vector<8x128xf32>, vector<8x128xf32> -> vector<8x512xf32>
    %500 = arith.mulf %499, %496 : vector<8x512xf32>
    %501 = arith.addf %495, %500 : vector<8x512xf32>
    %c491_i32_236 = arith.constant 491 : i32
    %502 = tpu.dynamic_rotate %451 by %c491_i32_236 dim 1 : vector<8x512xf32>, i32 -> vector<8x512xf32>
    %c80 = arith.constant 80 : index
    %c0_237 = arith.constant 0 : index
    %c0_238 = arith.constant 0 : index
    %503 = vector.load %arg2[%c80, %c0_237, %c0_238] : memref<144x8x128xf32, #tpu.memory_space<vmem>>, vector<1x8x128xf32>
    %504 = vector.shape_cast %503 : vector<1x8x128xf32> to vector<8x128xf32>
    %505 = tpu.concatenate %504, %504, %504, %504 in 1 : vector<8x128xf32>, vector<8x128xf32>, vector<8x128xf32>, vector<8x128xf32> -> vector<8x512xf32>
    %506 = arith.mulf %505, %502 : vector<8x512xf32>
    %507 = arith.addf %501, %506 : vector<8x512xf32>
    %c6_i32_239 = arith.constant 6 : i32
    %508 = tpu.dynamic_rotate %451 by %c6_i32_239 dim 0 : vector<8x512xf32>, i32 -> vector<8x512xf32>
    %c21_i32_240 = arith.constant 21 : i32
    %509 = tpu.dynamic_rotate %508 by %c21_i32_240 dim 1 : vector<8x512xf32>, i32 -> vector<8x512xf32>
    %c81 = arith.constant 81 : index
    %c0_241 = arith.constant 0 : index
    %c0_242 = arith.constant 0 : index
    %510 = vector.load %arg2[%c81, %c0_241, %c0_242] : memref<144x8x128xf32, #tpu.memory_space<vmem>>, vector<1x8x128xf32>
    %511 = vector.shape_cast %510 : vector<1x8x128xf32> to vector<8x128xf32>
    %512 = tpu.concatenate %511, %511, %511, %511 in 1 : vector<8x128xf32>, vector<8x128xf32>, vector<8x128xf32>, vector<8x128xf32> -> vector<8x512xf32>
    %513 = arith.mulf %512, %509 : vector<8x512xf32>
    %514 = arith.addf %507, %513 : vector<8x512xf32>
    %c20_i32_243 = arith.constant 20 : i32
    %515 = tpu.dynamic_rotate %508 by %c20_i32_243 dim 1 : vector<8x512xf32>, i32 -> vector<8x512xf32>
    %c82 = arith.constant 82 : index
    %c0_244 = arith.constant 0 : index
    %c0_245 = arith.constant 0 : index
    %516 = vector.load %arg2[%c82, %c0_244, %c0_245] : memref<144x8x128xf32, #tpu.memory_space<vmem>>, vector<1x8x128xf32>
    %517 = vector.shape_cast %516 : vector<1x8x128xf32> to vector<8x128xf32>
    %518 = tpu.concatenate %517, %517, %517, %517 in 1 : vector<8x128xf32>, vector<8x128xf32>, vector<8x128xf32>, vector<8x128xf32> -> vector<8x512xf32>
    %519 = arith.mulf %518, %515 : vector<8x512xf32>
    %520 = arith.addf %514, %519 : vector<8x512xf32>
    %c19_i32_246 = arith.constant 19 : i32
    %521 = tpu.dynamic_rotate %508 by %c19_i32_246 dim 1 : vector<8x512xf32>, i32 -> vector<8x512xf32>
    %c83 = arith.constant 83 : index
    %c0_247 = arith.constant 0 : index
    %c0_248 = arith.constant 0 : index
    %522 = vector.load %arg2[%c83, %c0_247, %c0_248] : memref<144x8x128xf32, #tpu.memory_space<vmem>>, vector<1x8x128xf32>
    %523 = vector.shape_cast %522 : vector<1x8x128xf32> to vector<8x128xf32>
    %524 = tpu.concatenate %523, %523, %523, %523 in 1 : vector<8x128xf32>, vector<8x128xf32>, vector<8x128xf32>, vector<8x128xf32> -> vector<8x512xf32>
    %525 = arith.mulf %524, %521 : vector<8x512xf32>
    %526 = arith.addf %520, %525 : vector<8x512xf32>
    %c1_i32_249 = arith.constant 1 : i32
    %527 = tpu.dynamic_rotate %508 by %c1_i32_249 dim 1 : vector<8x512xf32>, i32 -> vector<8x512xf32>
    %c84 = arith.constant 84 : index
    %c0_250 = arith.constant 0 : index
    %c0_251 = arith.constant 0 : index
    %528 = vector.load %arg2[%c84, %c0_250, %c0_251] : memref<144x8x128xf32, #tpu.memory_space<vmem>>, vector<1x8x128xf32>
    %529 = vector.shape_cast %528 : vector<1x8x128xf32> to vector<8x128xf32>
    %530 = tpu.concatenate %529, %529, %529, %529 in 1 : vector<8x128xf32>, vector<8x128xf32>, vector<8x128xf32>, vector<8x128xf32> -> vector<8x512xf32>
    %531 = arith.mulf %530, %527 : vector<8x512xf32>
    %532 = arith.addf %526, %531 : vector<8x512xf32>
    %c85 = arith.constant 85 : index
    %c0_252 = arith.constant 0 : index
    %c0_253 = arith.constant 0 : index
    %533 = vector.load %arg2[%c85, %c0_252, %c0_253] : memref<144x8x128xf32, #tpu.memory_space<vmem>>, vector<1x8x128xf32>
    %534 = vector.shape_cast %533 : vector<1x8x128xf32> to vector<8x128xf32>
    %535 = tpu.concatenate %534, %534, %534, %534 in 1 : vector<8x128xf32>, vector<8x128xf32>, vector<8x128xf32>, vector<8x128xf32> -> vector<8x512xf32>
    %536 = arith.mulf %535, %508 : vector<8x512xf32>
    %537 = arith.addf %532, %536 : vector<8x512xf32>
    %c511_i32_254 = arith.constant 511 : i32
    %538 = tpu.dynamic_rotate %508 by %c511_i32_254 dim 1 : vector<8x512xf32>, i32 -> vector<8x512xf32>
    %c86 = arith.constant 86 : index
    %c0_255 = arith.constant 0 : index
    %c0_256 = arith.constant 0 : index
    %539 = vector.load %arg2[%c86, %c0_255, %c0_256] : memref<144x8x128xf32, #tpu.memory_space<vmem>>, vector<1x8x128xf32>
    %540 = vector.shape_cast %539 : vector<1x8x128xf32> to vector<8x128xf32>
    %541 = tpu.concatenate %540, %540, %540, %540 in 1 : vector<8x128xf32>, vector<8x128xf32>, vector<8x128xf32>, vector<8x128xf32> -> vector<8x512xf32>
    %542 = arith.mulf %541, %538 : vector<8x512xf32>
    %543 = arith.addf %537, %542 : vector<8x512xf32>
    %c493_i32_257 = arith.constant 493 : i32
    %544 = tpu.dynamic_rotate %508 by %c493_i32_257 dim 1 : vector<8x512xf32>, i32 -> vector<8x512xf32>
    %c87 = arith.constant 87 : index
    %c0_258 = arith.constant 0 : index
    %c0_259 = arith.constant 0 : index
    %545 = vector.load %arg2[%c87, %c0_258, %c0_259] : memref<144x8x128xf32, #tpu.memory_space<vmem>>, vector<1x8x128xf32>
    %546 = vector.shape_cast %545 : vector<1x8x128xf32> to vector<8x128xf32>
    %547 = tpu.concatenate %546, %546, %546, %546 in 1 : vector<8x128xf32>, vector<8x128xf32>, vector<8x128xf32>, vector<8x128xf32> -> vector<8x512xf32>
    %548 = arith.mulf %547, %544 : vector<8x512xf32>
    %549 = arith.addf %543, %548 : vector<8x512xf32>
    %c492_i32_260 = arith.constant 492 : i32
    %550 = tpu.dynamic_rotate %508 by %c492_i32_260 dim 1 : vector<8x512xf32>, i32 -> vector<8x512xf32>
    %c88 = arith.constant 88 : index
    %c0_261 = arith.constant 0 : index
    %c0_262 = arith.constant 0 : index
    %551 = vector.load %arg2[%c88, %c0_261, %c0_262] : memref<144x8x128xf32, #tpu.memory_space<vmem>>, vector<1x8x128xf32>
    %552 = vector.shape_cast %551 : vector<1x8x128xf32> to vector<8x128xf32>
    %553 = tpu.concatenate %552, %552, %552, %552 in 1 : vector<8x128xf32>, vector<8x128xf32>, vector<8x128xf32>, vector<8x128xf32> -> vector<8x512xf32>
    %554 = arith.mulf %553, %550 : vector<8x512xf32>
    %555 = arith.addf %549, %554 : vector<8x512xf32>
    %c491_i32_263 = arith.constant 491 : i32
    %556 = tpu.dynamic_rotate %508 by %c491_i32_263 dim 1 : vector<8x512xf32>, i32 -> vector<8x512xf32>
    %c89 = arith.constant 89 : index
    %c0_264 = arith.constant 0 : index
    %c0_265 = arith.constant 0 : index
    %557 = vector.load %arg2[%c89, %c0_264, %c0_265] : memref<144x8x128xf32, #tpu.memory_space<vmem>>, vector<1x8x128xf32>
    %558 = vector.shape_cast %557 : vector<1x8x128xf32> to vector<8x128xf32>
    %559 = tpu.concatenate %558, %558, %558, %558 in 1 : vector<8x128xf32>, vector<8x128xf32>, vector<8x128xf32>, vector<8x128xf32> -> vector<8x512xf32>
    %560 = arith.mulf %559, %556 : vector<8x512xf32>
    %561 = arith.addf %555, %560 : vector<8x512xf32>
    %c4_i32_266 = arith.constant 4 : i32
    %562 = tpu.dynamic_rotate %451 by %c4_i32_266 dim 0 : vector<8x512xf32>, i32 -> vector<8x512xf32>
    %c21_i32_267 = arith.constant 21 : i32
    %563 = tpu.dynamic_rotate %562 by %c21_i32_267 dim 1 : vector<8x512xf32>, i32 -> vector<8x512xf32>
    %c90 = arith.constant 90 : index
    %c0_268 = arith.constant 0 : index
    %c0_269 = arith.constant 0 : index
    %564 = vector.load %arg2[%c90, %c0_268, %c0_269] : memref<144x8x128xf32, #tpu.memory_space<vmem>>, vector<1x8x128xf32>
    %565 = vector.shape_cast %564 : vector<1x8x128xf32> to vector<8x128xf32>
    %566 = tpu.concatenate %565, %565, %565, %565 in 1 : vector<8x128xf32>, vector<8x128xf32>, vector<8x128xf32>, vector<8x128xf32> -> vector<8x512xf32>
    %567 = arith.mulf %566, %563 : vector<8x512xf32>
    %568 = arith.addf %561, %567 : vector<8x512xf32>
    %c20_i32_270 = arith.constant 20 : i32
    %569 = tpu.dynamic_rotate %562 by %c20_i32_270 dim 1 : vector<8x512xf32>, i32 -> vector<8x512xf32>
    %c91 = arith.constant 91 : index
    %c0_271 = arith.constant 0 : index
    %c0_272 = arith.constant 0 : index
    %570 = vector.load %arg2[%c91, %c0_271, %c0_272] : memref<144x8x128xf32, #tpu.memory_space<vmem>>, vector<1x8x128xf32>
    %571 = vector.shape_cast %570 : vector<1x8x128xf32> to vector<8x128xf32>
    %572 = tpu.concatenate %571, %571, %571, %571 in 1 : vector<8x128xf32>, vector<8x128xf32>, vector<8x128xf32>, vector<8x128xf32> -> vector<8x512xf32>
    %573 = arith.mulf %572, %569 : vector<8x512xf32>
    %574 = arith.addf %568, %573 : vector<8x512xf32>
    %c19_i32_273 = arith.constant 19 : i32
    %575 = tpu.dynamic_rotate %562 by %c19_i32_273 dim 1 : vector<8x512xf32>, i32 -> vector<8x512xf32>
    %c92 = arith.constant 92 : index
    %c0_274 = arith.constant 0 : index
    %c0_275 = arith.constant 0 : index
    %576 = vector.load %arg2[%c92, %c0_274, %c0_275] : memref<144x8x128xf32, #tpu.memory_space<vmem>>, vector<1x8x128xf32>
    %577 = vector.shape_cast %576 : vector<1x8x128xf32> to vector<8x128xf32>
    %578 = tpu.concatenate %577, %577, %577, %577 in 1 : vector<8x128xf32>, vector<8x128xf32>, vector<8x128xf32>, vector<8x128xf32> -> vector<8x512xf32>
    %579 = arith.mulf %578, %575 : vector<8x512xf32>
    %580 = arith.addf %574, %579 : vector<8x512xf32>
    %c1_i32_276 = arith.constant 1 : i32
    %581 = tpu.dynamic_rotate %562 by %c1_i32_276 dim 1 : vector<8x512xf32>, i32 -> vector<8x512xf32>
    %c93 = arith.constant 93 : index
    %c0_277 = arith.constant 0 : index
    %c0_278 = arith.constant 0 : index
    %582 = vector.load %arg2[%c93, %c0_277, %c0_278] : memref<144x8x128xf32, #tpu.memory_space<vmem>>, vector<1x8x128xf32>
    %583 = vector.shape_cast %582 : vector<1x8x128xf32> to vector<8x128xf32>
    %584 = tpu.concatenate %583, %583, %583, %583 in 1 : vector<8x128xf32>, vector<8x128xf32>, vector<8x128xf32>, vector<8x128xf32> -> vector<8x512xf32>
    %585 = arith.mulf %584, %581 : vector<8x512xf32>
    %586 = arith.addf %580, %585 : vector<8x512xf32>
    %c94 = arith.constant 94 : index
    %c0_279 = arith.constant 0 : index
    %c0_280 = arith.constant 0 : index
    %587 = vector.load %arg2[%c94, %c0_279, %c0_280] : memref<144x8x128xf32, #tpu.memory_space<vmem>>, vector<1x8x128xf32>
    %588 = vector.shape_cast %587 : vector<1x8x128xf32> to vector<8x128xf32>
    %589 = tpu.concatenate %588, %588, %588, %588 in 1 : vector<8x128xf32>, vector<8x128xf32>, vector<8x128xf32>, vector<8x128xf32> -> vector<8x512xf32>
    %590 = arith.mulf %589, %562 : vector<8x512xf32>
    %591 = arith.addf %586, %590 : vector<8x512xf32>
    %c511_i32_281 = arith.constant 511 : i32
    %592 = tpu.dynamic_rotate %562 by %c511_i32_281 dim 1 : vector<8x512xf32>, i32 -> vector<8x512xf32>
    %c95 = arith.constant 95 : index
    %c0_282 = arith.constant 0 : index
    %c0_283 = arith.constant 0 : index
    %593 = vector.load %arg2[%c95, %c0_282, %c0_283] : memref<144x8x128xf32, #tpu.memory_space<vmem>>, vector<1x8x128xf32>
    %594 = vector.shape_cast %593 : vector<1x8x128xf32> to vector<8x128xf32>
    %595 = tpu.concatenate %594, %594, %594, %594 in 1 : vector<8x128xf32>, vector<8x128xf32>, vector<8x128xf32>, vector<8x128xf32> -> vector<8x512xf32>
    %596 = arith.mulf %595, %592 : vector<8x512xf32>
    %597 = arith.addf %591, %596 : vector<8x512xf32>
    %c493_i32_284 = arith.constant 493 : i32
    %598 = tpu.dynamic_rotate %562 by %c493_i32_284 dim 1 : vector<8x512xf32>, i32 -> vector<8x512xf32>
    %c96 = arith.constant 96 : index
    %c0_285 = arith.constant 0 : index
    %c0_286 = arith.constant 0 : index
    %599 = vector.load %arg2[%c96, %c0_285, %c0_286] : memref<144x8x128xf32, #tpu.memory_space<vmem>>, vector<1x8x128xf32>
    %600 = vector.shape_cast %599 : vector<1x8x128xf32> to vector<8x128xf32>
    %601 = tpu.concatenate %600, %600, %600, %600 in 1 : vector<8x128xf32>, vector<8x128xf32>, vector<8x128xf32>, vector<8x128xf32> -> vector<8x512xf32>
    %602 = arith.mulf %601, %598 : vector<8x512xf32>
    %603 = arith.addf %597, %602 : vector<8x512xf32>
    %c492_i32_287 = arith.constant 492 : i32
    %604 = tpu.dynamic_rotate %562 by %c492_i32_287 dim 1 : vector<8x512xf32>, i32 -> vector<8x512xf32>
    %c97 = arith.constant 97 : index
    %c0_288 = arith.constant 0 : index
    %c0_289 = arith.constant 0 : index
    %605 = vector.load %arg2[%c97, %c0_288, %c0_289] : memref<144x8x128xf32, #tpu.memory_space<vmem>>, vector<1x8x128xf32>
    %606 = vector.shape_cast %605 : vector<1x8x128xf32> to vector<8x128xf32>
    %607 = tpu.concatenate %606, %606, %606, %606 in 1 : vector<8x128xf32>, vector<8x128xf32>, vector<8x128xf32>, vector<8x128xf32> -> vector<8x512xf32>
    %608 = arith.mulf %607, %604 : vector<8x512xf32>
    %609 = arith.addf %603, %608 : vector<8x512xf32>
    %c491_i32_290 = arith.constant 491 : i32
    %610 = tpu.dynamic_rotate %562 by %c491_i32_290 dim 1 : vector<8x512xf32>, i32 -> vector<8x512xf32>
    %c98 = arith.constant 98 : index
    %c0_291 = arith.constant 0 : index
    %c0_292 = arith.constant 0 : index
    %611 = vector.load %arg2[%c98, %c0_291, %c0_292] : memref<144x8x128xf32, #tpu.memory_space<vmem>>, vector<1x8x128xf32>
    %612 = vector.shape_cast %611 : vector<1x8x128xf32> to vector<8x128xf32>
    %613 = tpu.concatenate %612, %612, %612, %612 in 1 : vector<8x128xf32>, vector<8x128xf32>, vector<8x128xf32>, vector<8x128xf32> -> vector<8x512xf32>
    %614 = arith.mulf %613, %610 : vector<8x512xf32>
    %615 = arith.addf %609, %614 : vector<8x512xf32>
    %c2_i32_293 = arith.constant 2 : i32
    %616 = tpu.dynamic_rotate %451 by %c2_i32_293 dim 0 : vector<8x512xf32>, i32 -> vector<8x512xf32>
    %c21_i32_294 = arith.constant 21 : i32
    %617 = tpu.dynamic_rotate %616 by %c21_i32_294 dim 1 : vector<8x512xf32>, i32 -> vector<8x512xf32>
    %c99 = arith.constant 99 : index
    %c0_295 = arith.constant 0 : index
    %c0_296 = arith.constant 0 : index
    %618 = vector.load %arg2[%c99, %c0_295, %c0_296] : memref<144x8x128xf32, #tpu.memory_space<vmem>>, vector<1x8x128xf32>
    %619 = vector.shape_cast %618 : vector<1x8x128xf32> to vector<8x128xf32>
    %620 = tpu.concatenate %619, %619, %619, %619 in 1 : vector<8x128xf32>, vector<8x128xf32>, vector<8x128xf32>, vector<8x128xf32> -> vector<8x512xf32>
    %621 = arith.mulf %620, %617 : vector<8x512xf32>
    %622 = arith.addf %615, %621 : vector<8x512xf32>
    %c20_i32_297 = arith.constant 20 : i32
    %623 = tpu.dynamic_rotate %616 by %c20_i32_297 dim 1 : vector<8x512xf32>, i32 -> vector<8x512xf32>
    %c100 = arith.constant 100 : index
    %c0_298 = arith.constant 0 : index
    %c0_299 = arith.constant 0 : index
    %624 = vector.load %arg2[%c100, %c0_298, %c0_299] : memref<144x8x128xf32, #tpu.memory_space<vmem>>, vector<1x8x128xf32>
    %625 = vector.shape_cast %624 : vector<1x8x128xf32> to vector<8x128xf32>
    %626 = tpu.concatenate %625, %625, %625, %625 in 1 : vector<8x128xf32>, vector<8x128xf32>, vector<8x128xf32>, vector<8x128xf32> -> vector<8x512xf32>
    %627 = arith.mulf %626, %623 : vector<8x512xf32>
    %628 = arith.addf %622, %627 : vector<8x512xf32>
    %c19_i32_300 = arith.constant 19 : i32
    %629 = tpu.dynamic_rotate %616 by %c19_i32_300 dim 1 : vector<8x512xf32>, i32 -> vector<8x512xf32>
    %c101 = arith.constant 101 : index
    %c0_301 = arith.constant 0 : index
    %c0_302 = arith.constant 0 : index
    %630 = vector.load %arg2[%c101, %c0_301, %c0_302] : memref<144x8x128xf32, #tpu.memory_space<vmem>>, vector<1x8x128xf32>
    %631 = vector.shape_cast %630 : vector<1x8x128xf32> to vector<8x128xf32>
    %632 = tpu.concatenate %631, %631, %631, %631 in 1 : vector<8x128xf32>, vector<8x128xf32>, vector<8x128xf32>, vector<8x128xf32> -> vector<8x512xf32>
    %633 = arith.mulf %632, %629 : vector<8x512xf32>
    %634 = arith.addf %628, %633 : vector<8x512xf32>
    %c1_i32_303 = arith.constant 1 : i32
    %635 = tpu.dynamic_rotate %616 by %c1_i32_303 dim 1 : vector<8x512xf32>, i32 -> vector<8x512xf32>
    %c102 = arith.constant 102 : index
    %c0_304 = arith.constant 0 : index
    %c0_305 = arith.constant 0 : index
    %636 = vector.load %arg2[%c102, %c0_304, %c0_305] : memref<144x8x128xf32, #tpu.memory_space<vmem>>, vector<1x8x128xf32>
    %637 = vector.shape_cast %636 : vector<1x8x128xf32> to vector<8x128xf32>
    %638 = tpu.concatenate %637, %637, %637, %637 in 1 : vector<8x128xf32>, vector<8x128xf32>, vector<8x128xf32>, vector<8x128xf32> -> vector<8x512xf32>
    %639 = arith.mulf %638, %635 : vector<8x512xf32>
    %640 = arith.addf %634, %639 : vector<8x512xf32>
    %c103 = arith.constant 103 : index
    %c0_306 = arith.constant 0 : index
    %c0_307 = arith.constant 0 : index
    %641 = vector.load %arg2[%c103, %c0_306, %c0_307] : memref<144x8x128xf32, #tpu.memory_space<vmem>>, vector<1x8x128xf32>
    %642 = vector.shape_cast %641 : vector<1x8x128xf32> to vector<8x128xf32>
    %643 = tpu.concatenate %642, %642, %642, %642 in 1 : vector<8x128xf32>, vector<8x128xf32>, vector<8x128xf32>, vector<8x128xf32> -> vector<8x512xf32>
    %644 = arith.mulf %643, %616 : vector<8x512xf32>
    %645 = arith.addf %640, %644 : vector<8x512xf32>
    %c511_i32_308 = arith.constant 511 : i32
    %646 = tpu.dynamic_rotate %616 by %c511_i32_308 dim 1 : vector<8x512xf32>, i32 -> vector<8x512xf32>
    %c104 = arith.constant 104 : index
    %c0_309 = arith.constant 0 : index
    %c0_310 = arith.constant 0 : index
    %647 = vector.load %arg2[%c104, %c0_309, %c0_310] : memref<144x8x128xf32, #tpu.memory_space<vmem>>, vector<1x8x128xf32>
    %648 = vector.shape_cast %647 : vector<1x8x128xf32> to vector<8x128xf32>
    %649 = tpu.concatenate %648, %648, %648, %648 in 1 : vector<8x128xf32>, vector<8x128xf32>, vector<8x128xf32>, vector<8x128xf32> -> vector<8x512xf32>
    %650 = arith.mulf %649, %646 : vector<8x512xf32>
    %651 = arith.addf %645, %650 : vector<8x512xf32>
    %c493_i32_311 = arith.constant 493 : i32
    %652 = tpu.dynamic_rotate %616 by %c493_i32_311 dim 1 : vector<8x512xf32>, i32 -> vector<8x512xf32>
    %c105 = arith.constant 105 : index
    %c0_312 = arith.constant 0 : index
    %c0_313 = arith.constant 0 : index
    %653 = vector.load %arg2[%c105, %c0_312, %c0_313] : memref<144x8x128xf32, #tpu.memory_space<vmem>>, vector<1x8x128xf32>
    %654 = vector.shape_cast %653 : vector<1x8x128xf32> to vector<8x128xf32>
    %655 = tpu.concatenate %654, %654, %654, %654 in 1 : vector<8x128xf32>, vector<8x128xf32>, vector<8x128xf32>, vector<8x128xf32> -> vector<8x512xf32>
    %656 = arith.mulf %655, %652 : vector<8x512xf32>
    %657 = arith.addf %651, %656 : vector<8x512xf32>
    %c492_i32_314 = arith.constant 492 : i32
    %658 = tpu.dynamic_rotate %616 by %c492_i32_314 dim 1 : vector<8x512xf32>, i32 -> vector<8x512xf32>
    %c106 = arith.constant 106 : index
    %c0_315 = arith.constant 0 : index
    %c0_316 = arith.constant 0 : index
    %659 = vector.load %arg2[%c106, %c0_315, %c0_316] : memref<144x8x128xf32, #tpu.memory_space<vmem>>, vector<1x8x128xf32>
    %660 = vector.shape_cast %659 : vector<1x8x128xf32> to vector<8x128xf32>
    %661 = tpu.concatenate %660, %660, %660, %660 in 1 : vector<8x128xf32>, vector<8x128xf32>, vector<8x128xf32>, vector<8x128xf32> -> vector<8x512xf32>
    %662 = arith.mulf %661, %658 : vector<8x512xf32>
    %663 = arith.addf %657, %662 : vector<8x512xf32>
    %c491_i32_317 = arith.constant 491 : i32
    %664 = tpu.dynamic_rotate %616 by %c491_i32_317 dim 1 : vector<8x512xf32>, i32 -> vector<8x512xf32>
    %c107 = arith.constant 107 : index
    %c0_318 = arith.constant 0 : index
    %c0_319 = arith.constant 0 : index
    %665 = vector.load %arg2[%c107, %c0_318, %c0_319] : memref<144x8x128xf32, #tpu.memory_space<vmem>>, vector<1x8x128xf32>
    %666 = vector.shape_cast %665 : vector<1x8x128xf32> to vector<8x128xf32>
    %667 = tpu.concatenate %666, %666, %666, %666 in 1 : vector<8x128xf32>, vector<8x128xf32>, vector<8x128xf32>, vector<8x128xf32> -> vector<8x512xf32>
    %668 = arith.mulf %667, %664 : vector<8x512xf32>
    %669 = arith.addf %663, %668 : vector<8x512xf32>
    %cst_320 = arith.constant 0.000000e+00 : f32
    %670 = vector.broadcast %cst_320 : f32 to vector<8x512xf32>
    %671 = arith.cmpf oge, %669, %670 : vector<8x512xf32>
    %cst_321 = arith.constant 1.000000e-01 : f32
    %672 = vector.broadcast %cst_321 : f32 to vector<8x512xf32>
    %673 = arith.mulf %672, %669 : vector<8x512xf32>
    %674 = arith.select %671, %669, %673 : vector<8x512xi1>, vector<8x512xf32>
    %675 = arith.mulf %674, %0 : vector<8x512xf32>
    %c3_322 = arith.constant 3 : index
    %c0_323 = arith.constant 0 : index
    %c0_324 = arith.constant 0 : index
    %676 = vector.load %arg3[%c3_322, %c0_323, %c0_324] : memref<4x8x128xf32, #tpu.memory_space<vmem>>, vector<1x8x128xf32>
    %677 = vector.shape_cast %676 : vector<1x8x128xf32> to vector<8x128xf32>
    %678 = tpu.concatenate %677, %677, %677, %677 in 1 : vector<8x128xf32>, vector<8x128xf32>, vector<8x128xf32>, vector<8x128xf32> -> vector<8x512xf32>
    %c42_i32_325 = arith.constant 42 : i32
    %679 = tpu.dynamic_rotate %675 by %c42_i32_325 dim 1 : vector<8x512xf32>, i32 -> vector<8x512xf32>
    %c108 = arith.constant 108 : index
    %c0_326 = arith.constant 0 : index
    %c0_327 = arith.constant 0 : index
    %680 = vector.load %arg2[%c108, %c0_326, %c0_327] : memref<144x8x128xf32, #tpu.memory_space<vmem>>, vector<1x8x128xf32>
    %681 = vector.shape_cast %680 : vector<1x8x128xf32> to vector<8x128xf32>
    %682 = tpu.concatenate %681, %681, %681, %681 in 1 : vector<8x128xf32>, vector<8x128xf32>, vector<8x128xf32>, vector<8x128xf32> -> vector<8x512xf32>
    %683 = arith.mulf %682, %679 : vector<8x512xf32>
    %684 = arith.addf %678, %683 : vector<8x512xf32>
    %c40_i32_328 = arith.constant 40 : i32
    %685 = tpu.dynamic_rotate %675 by %c40_i32_328 dim 1 : vector<8x512xf32>, i32 -> vector<8x512xf32>
    %c109 = arith.constant 109 : index
    %c0_329 = arith.constant 0 : index
    %c0_330 = arith.constant 0 : index
    %686 = vector.load %arg2[%c109, %c0_329, %c0_330] : memref<144x8x128xf32, #tpu.memory_space<vmem>>, vector<1x8x128xf32>
    %687 = vector.shape_cast %686 : vector<1x8x128xf32> to vector<8x128xf32>
    %688 = tpu.concatenate %687, %687, %687, %687 in 1 : vector<8x128xf32>, vector<8x128xf32>, vector<8x128xf32>, vector<8x128xf32> -> vector<8x512xf32>
    %689 = arith.mulf %688, %685 : vector<8x512xf32>
    %690 = arith.addf %684, %689 : vector<8x512xf32>
    %c38_i32_331 = arith.constant 38 : i32
    %691 = tpu.dynamic_rotate %675 by %c38_i32_331 dim 1 : vector<8x512xf32>, i32 -> vector<8x512xf32>
    %c110 = arith.constant 110 : index
    %c0_332 = arith.constant 0 : index
    %c0_333 = arith.constant 0 : index
    %692 = vector.load %arg2[%c110, %c0_332, %c0_333] : memref<144x8x128xf32, #tpu.memory_space<vmem>>, vector<1x8x128xf32>
    %693 = vector.shape_cast %692 : vector<1x8x128xf32> to vector<8x128xf32>
    %694 = tpu.concatenate %693, %693, %693, %693 in 1 : vector<8x128xf32>, vector<8x128xf32>, vector<8x128xf32>, vector<8x128xf32> -> vector<8x512xf32>
    %695 = arith.mulf %694, %691 : vector<8x512xf32>
    %696 = arith.addf %690, %695 : vector<8x512xf32>
    %c2_i32_334 = arith.constant 2 : i32
    %697 = tpu.dynamic_rotate %675 by %c2_i32_334 dim 1 : vector<8x512xf32>, i32 -> vector<8x512xf32>
    %c111 = arith.constant 111 : index
    %c0_335 = arith.constant 0 : index
    %c0_336 = arith.constant 0 : index
    %698 = vector.load %arg2[%c111, %c0_335, %c0_336] : memref<144x8x128xf32, #tpu.memory_space<vmem>>, vector<1x8x128xf32>
    %699 = vector.shape_cast %698 : vector<1x8x128xf32> to vector<8x128xf32>
    %700 = tpu.concatenate %699, %699, %699, %699 in 1 : vector<8x128xf32>, vector<8x128xf32>, vector<8x128xf32>, vector<8x128xf32> -> vector<8x512xf32>
    %701 = arith.mulf %700, %697 : vector<8x512xf32>
    %702 = arith.addf %696, %701 : vector<8x512xf32>
    %c112 = arith.constant 112 : index
    %c0_337 = arith.constant 0 : index
    %c0_338 = arith.constant 0 : index
    %703 = vector.load %arg2[%c112, %c0_337, %c0_338] : memref<144x8x128xf32, #tpu.memory_space<vmem>>, vector<1x8x128xf32>
    %704 = vector.shape_cast %703 : vector<1x8x128xf32> to vector<8x128xf32>
    %705 = tpu.concatenate %704, %704, %704, %704 in 1 : vector<8x128xf32>, vector<8x128xf32>, vector<8x128xf32>, vector<8x128xf32> -> vector<8x512xf32>
    %706 = arith.mulf %705, %675 : vector<8x512xf32>
    %707 = arith.addf %702, %706 : vector<8x512xf32>
    %c510_i32_339 = arith.constant 510 : i32
    %708 = tpu.dynamic_rotate %675 by %c510_i32_339 dim 1 : vector<8x512xf32>, i32 -> vector<8x512xf32>
    %c113 = arith.constant 113 : index
    %c0_340 = arith.constant 0 : index
    %c0_341 = arith.constant 0 : index
    %709 = vector.load %arg2[%c113, %c0_340, %c0_341] : memref<144x8x128xf32, #tpu.memory_space<vmem>>, vector<1x8x128xf32>
    %710 = vector.shape_cast %709 : vector<1x8x128xf32> to vector<8x128xf32>
    %711 = tpu.concatenate %710, %710, %710, %710 in 1 : vector<8x128xf32>, vector<8x128xf32>, vector<8x128xf32>, vector<8x128xf32> -> vector<8x512xf32>
    %712 = arith.mulf %711, %708 : vector<8x512xf32>
    %713 = arith.addf %707, %712 : vector<8x512xf32>
    %c474_i32_342 = arith.constant 474 : i32
    %714 = tpu.dynamic_rotate %675 by %c474_i32_342 dim 1 : vector<8x512xf32>, i32 -> vector<8x512xf32>
    %c114 = arith.constant 114 : index
    %c0_343 = arith.constant 0 : index
    %c0_344 = arith.constant 0 : index
    %715 = vector.load %arg2[%c114, %c0_343, %c0_344] : memref<144x8x128xf32, #tpu.memory_space<vmem>>, vector<1x8x128xf32>
    %716 = vector.shape_cast %715 : vector<1x8x128xf32> to vector<8x128xf32>
    %717 = tpu.concatenate %716, %716, %716, %716 in 1 : vector<8x128xf32>, vector<8x128xf32>, vector<8x128xf32>, vector<8x128xf32> -> vector<8x512xf32>
    %718 = arith.mulf %717, %714 : vector<8x512xf32>
    %719 = arith.addf %713, %718 : vector<8x512xf32>
    %c472_i32_345 = arith.constant 472 : i32
    %720 = tpu.dynamic_rotate %675 by %c472_i32_345 dim 1 : vector<8x512xf32>, i32 -> vector<8x512xf32>
    %c115 = arith.constant 115 : index
    %c0_346 = arith.constant 0 : index
    %c0_347 = arith.constant 0 : index
    %721 = vector.load %arg2[%c115, %c0_346, %c0_347] : memref<144x8x128xf32, #tpu.memory_space<vmem>>, vector<1x8x128xf32>
    %722 = vector.shape_cast %721 : vector<1x8x128xf32> to vector<8x128xf32>
    %723 = tpu.concatenate %722, %722, %722, %722 in 1 : vector<8x128xf32>, vector<8x128xf32>, vector<8x128xf32>, vector<8x128xf32> -> vector<8x512xf32>
    %724 = arith.mulf %723, %720 : vector<8x512xf32>
    %725 = arith.addf %719, %724 : vector<8x512xf32>
    %c470_i32_348 = arith.constant 470 : i32
    %726 = tpu.dynamic_rotate %675 by %c470_i32_348 dim 1 : vector<8x512xf32>, i32 -> vector<8x512xf32>
    %c116 = arith.constant 116 : index
    %c0_349 = arith.constant 0 : index
    %c0_350 = arith.constant 0 : index
    %727 = vector.load %arg2[%c116, %c0_349, %c0_350] : memref<144x8x128xf32, #tpu.memory_space<vmem>>, vector<1x8x128xf32>
    %728 = vector.shape_cast %727 : vector<1x8x128xf32> to vector<8x128xf32>
    %729 = tpu.concatenate %728, %728, %728, %728 in 1 : vector<8x128xf32>, vector<8x128xf32>, vector<8x128xf32>, vector<8x128xf32> -> vector<8x512xf32>
    %730 = arith.mulf %729, %726 : vector<8x512xf32>
    %731 = arith.addf %725, %730 : vector<8x512xf32>
    %c6_i32_351 = arith.constant 6 : i32
    %732 = tpu.dynamic_rotate %675 by %c6_i32_351 dim 0 : vector<8x512xf32>, i32 -> vector<8x512xf32>
    %c42_i32_352 = arith.constant 42 : i32
    %733 = tpu.dynamic_rotate %732 by %c42_i32_352 dim 1 : vector<8x512xf32>, i32 -> vector<8x512xf32>
    %c117 = arith.constant 117 : index
    %c0_353 = arith.constant 0 : index
    %c0_354 = arith.constant 0 : index
    %734 = vector.load %arg2[%c117, %c0_353, %c0_354] : memref<144x8x128xf32, #tpu.memory_space<vmem>>, vector<1x8x128xf32>
    %735 = vector.shape_cast %734 : vector<1x8x128xf32> to vector<8x128xf32>
    %736 = tpu.concatenate %735, %735, %735, %735 in 1 : vector<8x128xf32>, vector<8x128xf32>, vector<8x128xf32>, vector<8x128xf32> -> vector<8x512xf32>
    %737 = arith.mulf %736, %733 : vector<8x512xf32>
    %738 = arith.addf %731, %737 : vector<8x512xf32>
    %c40_i32_355 = arith.constant 40 : i32
    %739 = tpu.dynamic_rotate %732 by %c40_i32_355 dim 1 : vector<8x512xf32>, i32 -> vector<8x512xf32>
    %c118 = arith.constant 118 : index
    %c0_356 = arith.constant 0 : index
    %c0_357 = arith.constant 0 : index
    %740 = vector.load %arg2[%c118, %c0_356, %c0_357] : memref<144x8x128xf32, #tpu.memory_space<vmem>>, vector<1x8x128xf32>
    %741 = vector.shape_cast %740 : vector<1x8x128xf32> to vector<8x128xf32>
    %742 = tpu.concatenate %741, %741, %741, %741 in 1 : vector<8x128xf32>, vector<8x128xf32>, vector<8x128xf32>, vector<8x128xf32> -> vector<8x512xf32>
    %743 = arith.mulf %742, %739 : vector<8x512xf32>
    %744 = arith.addf %738, %743 : vector<8x512xf32>
    %c38_i32_358 = arith.constant 38 : i32
    %745 = tpu.dynamic_rotate %732 by %c38_i32_358 dim 1 : vector<8x512xf32>, i32 -> vector<8x512xf32>
    %c119 = arith.constant 119 : index
    %c0_359 = arith.constant 0 : index
    %c0_360 = arith.constant 0 : index
    %746 = vector.load %arg2[%c119, %c0_359, %c0_360] : memref<144x8x128xf32, #tpu.memory_space<vmem>>, vector<1x8x128xf32>
    %747 = vector.shape_cast %746 : vector<1x8x128xf32> to vector<8x128xf32>
    %748 = tpu.concatenate %747, %747, %747, %747 in 1 : vector<8x128xf32>, vector<8x128xf32>, vector<8x128xf32>, vector<8x128xf32> -> vector<8x512xf32>
    %749 = arith.mulf %748, %745 : vector<8x512xf32>
    %750 = arith.addf %744, %749 : vector<8x512xf32>
    %c2_i32_361 = arith.constant 2 : i32
    %751 = tpu.dynamic_rotate %732 by %c2_i32_361 dim 1 : vector<8x512xf32>, i32 -> vector<8x512xf32>
    %c120 = arith.constant 120 : index
    %c0_362 = arith.constant 0 : index
    %c0_363 = arith.constant 0 : index
    %752 = vector.load %arg2[%c120, %c0_362, %c0_363] : memref<144x8x128xf32, #tpu.memory_space<vmem>>, vector<1x8x128xf32>
    %753 = vector.shape_cast %752 : vector<1x8x128xf32> to vector<8x128xf32>
    %754 = tpu.concatenate %753, %753, %753, %753 in 1 : vector<8x128xf32>, vector<8x128xf32>, vector<8x128xf32>, vector<8x128xf32> -> vector<8x512xf32>
    %755 = arith.mulf %754, %751 : vector<8x512xf32>
    %756 = arith.addf %750, %755 : vector<8x512xf32>
    %c121 = arith.constant 121 : index
    %c0_364 = arith.constant 0 : index
    %c0_365 = arith.constant 0 : index
    %757 = vector.load %arg2[%c121, %c0_364, %c0_365] : memref<144x8x128xf32, #tpu.memory_space<vmem>>, vector<1x8x128xf32>
    %758 = vector.shape_cast %757 : vector<1x8x128xf32> to vector<8x128xf32>
    %759 = tpu.concatenate %758, %758, %758, %758 in 1 : vector<8x128xf32>, vector<8x128xf32>, vector<8x128xf32>, vector<8x128xf32> -> vector<8x512xf32>
    %760 = arith.mulf %759, %732 : vector<8x512xf32>
    %761 = arith.addf %756, %760 : vector<8x512xf32>
    %c510_i32_366 = arith.constant 510 : i32
    %762 = tpu.dynamic_rotate %732 by %c510_i32_366 dim 1 : vector<8x512xf32>, i32 -> vector<8x512xf32>
    %c122 = arith.constant 122 : index
    %c0_367 = arith.constant 0 : index
    %c0_368 = arith.constant 0 : index
    %763 = vector.load %arg2[%c122, %c0_367, %c0_368] : memref<144x8x128xf32, #tpu.memory_space<vmem>>, vector<1x8x128xf32>
    %764 = vector.shape_cast %763 : vector<1x8x128xf32> to vector<8x128xf32>
    %765 = tpu.concatenate %764, %764, %764, %764 in 1 : vector<8x128xf32>, vector<8x128xf32>, vector<8x128xf32>, vector<8x128xf32> -> vector<8x512xf32>
    %766 = arith.mulf %765, %762 : vector<8x512xf32>
    %767 = arith.addf %761, %766 : vector<8x512xf32>
    %c474_i32_369 = arith.constant 474 : i32
    %768 = tpu.dynamic_rotate %732 by %c474_i32_369 dim 1 : vector<8x512xf32>, i32 -> vector<8x512xf32>
    %c123 = arith.constant 123 : index
    %c0_370 = arith.constant 0 : index
    %c0_371 = arith.constant 0 : index
    %769 = vector.load %arg2[%c123, %c0_370, %c0_371] : memref<144x8x128xf32, #tpu.memory_space<vmem>>, vector<1x8x128xf32>
    %770 = vector.shape_cast %769 : vector<1x8x128xf32> to vector<8x128xf32>
    %771 = tpu.concatenate %770, %770, %770, %770 in 1 : vector<8x128xf32>, vector<8x128xf32>, vector<8x128xf32>, vector<8x128xf32> -> vector<8x512xf32>
    %772 = arith.mulf %771, %768 : vector<8x512xf32>
    %773 = arith.addf %767, %772 : vector<8x512xf32>
    %c472_i32_372 = arith.constant 472 : i32
    %774 = tpu.dynamic_rotate %732 by %c472_i32_372 dim 1 : vector<8x512xf32>, i32 -> vector<8x512xf32>
    %c124 = arith.constant 124 : index
    %c0_373 = arith.constant 0 : index
    %c0_374 = arith.constant 0 : index
    %775 = vector.load %arg2[%c124, %c0_373, %c0_374] : memref<144x8x128xf32, #tpu.memory_space<vmem>>, vector<1x8x128xf32>
    %776 = vector.shape_cast %775 : vector<1x8x128xf32> to vector<8x128xf32>
    %777 = tpu.concatenate %776, %776, %776, %776 in 1 : vector<8x128xf32>, vector<8x128xf32>, vector<8x128xf32>, vector<8x128xf32> -> vector<8x512xf32>
    %778 = arith.mulf %777, %774 : vector<8x512xf32>
    %779 = arith.addf %773, %778 : vector<8x512xf32>
    %c470_i32_375 = arith.constant 470 : i32
    %780 = tpu.dynamic_rotate %732 by %c470_i32_375 dim 1 : vector<8x512xf32>, i32 -> vector<8x512xf32>
    %c125 = arith.constant 125 : index
    %c0_376 = arith.constant 0 : index
    %c0_377 = arith.constant 0 : index
    %781 = vector.load %arg2[%c125, %c0_376, %c0_377] : memref<144x8x128xf32, #tpu.memory_space<vmem>>, vector<1x8x128xf32>
    %782 = vector.shape_cast %781 : vector<1x8x128xf32> to vector<8x128xf32>
    %783 = tpu.concatenate %782, %782, %782, %782 in 1 : vector<8x128xf32>, vector<8x128xf32>, vector<8x128xf32>, vector<8x128xf32> -> vector<8x512xf32>
    %784 = arith.mulf %783, %780 : vector<8x512xf32>
    %785 = arith.addf %779, %784 : vector<8x512xf32>
    %c4_i32_378 = arith.constant 4 : i32
    %786 = tpu.dynamic_rotate %675 by %c4_i32_378 dim 0 : vector<8x512xf32>, i32 -> vector<8x512xf32>
    %c42_i32_379 = arith.constant 42 : i32
    %787 = tpu.dynamic_rotate %786 by %c42_i32_379 dim 1 : vector<8x512xf32>, i32 -> vector<8x512xf32>
    %c126 = arith.constant 126 : index
    %c0_380 = arith.constant 0 : index
    %c0_381 = arith.constant 0 : index
    %788 = vector.load %arg2[%c126, %c0_380, %c0_381] : memref<144x8x128xf32, #tpu.memory_space<vmem>>, vector<1x8x128xf32>
    %789 = vector.shape_cast %788 : vector<1x8x128xf32> to vector<8x128xf32>
    %790 = tpu.concatenate %789, %789, %789, %789 in 1 : vector<8x128xf32>, vector<8x128xf32>, vector<8x128xf32>, vector<8x128xf32> -> vector<8x512xf32>
    %791 = arith.mulf %790, %787 : vector<8x512xf32>
    %792 = arith.addf %785, %791 : vector<8x512xf32>
    %c40_i32_382 = arith.constant 40 : i32
    %793 = tpu.dynamic_rotate %786 by %c40_i32_382 dim 1 : vector<8x512xf32>, i32 -> vector<8x512xf32>
    %c127 = arith.constant 127 : index
    %c0_383 = arith.constant 0 : index
    %c0_384 = arith.constant 0 : index
    %794 = vector.load %arg2[%c127, %c0_383, %c0_384] : memref<144x8x128xf32, #tpu.memory_space<vmem>>, vector<1x8x128xf32>
    %795 = vector.shape_cast %794 : vector<1x8x128xf32> to vector<8x128xf32>
    %796 = tpu.concatenate %795, %795, %795, %795 in 1 : vector<8x128xf32>, vector<8x128xf32>, vector<8x128xf32>, vector<8x128xf32> -> vector<8x512xf32>
    %797 = arith.mulf %796, %793 : vector<8x512xf32>
    %798 = arith.addf %792, %797 : vector<8x512xf32>
    %c38_i32_385 = arith.constant 38 : i32
    %799 = tpu.dynamic_rotate %786 by %c38_i32_385 dim 1 : vector<8x512xf32>, i32 -> vector<8x512xf32>
    %c128 = arith.constant 128 : index
    %c0_386 = arith.constant 0 : index
    %c0_387 = arith.constant 0 : index
    %800 = vector.load %arg2[%c128, %c0_386, %c0_387] : memref<144x8x128xf32, #tpu.memory_space<vmem>>, vector<1x8x128xf32>
    %801 = vector.shape_cast %800 : vector<1x8x128xf32> to vector<8x128xf32>
    %802 = tpu.concatenate %801, %801, %801, %801 in 1 : vector<8x128xf32>, vector<8x128xf32>, vector<8x128xf32>, vector<8x128xf32> -> vector<8x512xf32>
    %803 = arith.mulf %802, %799 : vector<8x512xf32>
    %804 = arith.addf %798, %803 : vector<8x512xf32>
    %c2_i32_388 = arith.constant 2 : i32
    %805 = tpu.dynamic_rotate %786 by %c2_i32_388 dim 1 : vector<8x512xf32>, i32 -> vector<8x512xf32>
    %c129 = arith.constant 129 : index
    %c0_389 = arith.constant 0 : index
    %c0_390 = arith.constant 0 : index
    %806 = vector.load %arg2[%c129, %c0_389, %c0_390] : memref<144x8x128xf32, #tpu.memory_space<vmem>>, vector<1x8x128xf32>
    %807 = vector.shape_cast %806 : vector<1x8x128xf32> to vector<8x128xf32>
    %808 = tpu.concatenate %807, %807, %807, %807 in 1 : vector<8x128xf32>, vector<8x128xf32>, vector<8x128xf32>, vector<8x128xf32> -> vector<8x512xf32>
    %809 = arith.mulf %808, %805 : vector<8x512xf32>
    %810 = arith.addf %804, %809 : vector<8x512xf32>
    %c130 = arith.constant 130 : index
    %c0_391 = arith.constant 0 : index
    %c0_392 = arith.constant 0 : index
    %811 = vector.load %arg2[%c130, %c0_391, %c0_392] : memref<144x8x128xf32, #tpu.memory_space<vmem>>, vector<1x8x128xf32>
    %812 = vector.shape_cast %811 : vector<1x8x128xf32> to vector<8x128xf32>
    %813 = tpu.concatenate %812, %812, %812, %812 in 1 : vector<8x128xf32>, vector<8x128xf32>, vector<8x128xf32>, vector<8x128xf32> -> vector<8x512xf32>
    %814 = arith.mulf %813, %786 : vector<8x512xf32>
    %815 = arith.addf %810, %814 : vector<8x512xf32>
    %c510_i32_393 = arith.constant 510 : i32
    %816 = tpu.dynamic_rotate %786 by %c510_i32_393 dim 1 : vector<8x512xf32>, i32 -> vector<8x512xf32>
    %c131 = arith.constant 131 : index
    %c0_394 = arith.constant 0 : index
    %c0_395 = arith.constant 0 : index
    %817 = vector.load %arg2[%c131, %c0_394, %c0_395] : memref<144x8x128xf32, #tpu.memory_space<vmem>>, vector<1x8x128xf32>
    %818 = vector.shape_cast %817 : vector<1x8x128xf32> to vector<8x128xf32>
    %819 = tpu.concatenate %818, %818, %818, %818 in 1 : vector<8x128xf32>, vector<8x128xf32>, vector<8x128xf32>, vector<8x128xf32> -> vector<8x512xf32>
    %820 = arith.mulf %819, %816 : vector<8x512xf32>
    %821 = arith.addf %815, %820 : vector<8x512xf32>
    %c474_i32_396 = arith.constant 474 : i32
    %822 = tpu.dynamic_rotate %786 by %c474_i32_396 dim 1 : vector<8x512xf32>, i32 -> vector<8x512xf32>
    %c132 = arith.constant 132 : index
    %c0_397 = arith.constant 0 : index
    %c0_398 = arith.constant 0 : index
    %823 = vector.load %arg2[%c132, %c0_397, %c0_398] : memref<144x8x128xf32, #tpu.memory_space<vmem>>, vector<1x8x128xf32>
    %824 = vector.shape_cast %823 : vector<1x8x128xf32> to vector<8x128xf32>
    %825 = tpu.concatenate %824, %824, %824, %824 in 1 : vector<8x128xf32>, vector<8x128xf32>, vector<8x128xf32>, vector<8x128xf32> -> vector<8x512xf32>
    %826 = arith.mulf %825, %822 : vector<8x512xf32>
    %827 = arith.addf %821, %826 : vector<8x512xf32>
    %c472_i32_399 = arith.constant 472 : i32
    %828 = tpu.dynamic_rotate %786 by %c472_i32_399 dim 1 : vector<8x512xf32>, i32 -> vector<8x512xf32>
    %c133 = arith.constant 133 : index
    %c0_400 = arith.constant 0 : index
    %c0_401 = arith.constant 0 : index
    %829 = vector.load %arg2[%c133, %c0_400, %c0_401] : memref<144x8x128xf32, #tpu.memory_space<vmem>>, vector<1x8x128xf32>
    %830 = vector.shape_cast %829 : vector<1x8x128xf32> to vector<8x128xf32>
    %831 = tpu.concatenate %830, %830, %830, %830 in 1 : vector<8x128xf32>, vector<8x128xf32>, vector<8x128xf32>, vector<8x128xf32> -> vector<8x512xf32>
    %832 = arith.mulf %831, %828 : vector<8x512xf32>
    %833 = arith.addf %827, %832 : vector<8x512xf32>
    %c470_i32_402 = arith.constant 470 : i32
    %834 = tpu.dynamic_rotate %786 by %c470_i32_402 dim 1 : vector<8x512xf32>, i32 -> vector<8x512xf32>
    %c134 = arith.constant 134 : index
    %c0_403 = arith.constant 0 : index
    %c0_404 = arith.constant 0 : index
    %835 = vector.load %arg2[%c134, %c0_403, %c0_404] : memref<144x8x128xf32, #tpu.memory_space<vmem>>, vector<1x8x128xf32>
    %836 = vector.shape_cast %835 : vector<1x8x128xf32> to vector<8x128xf32>
    %837 = tpu.concatenate %836, %836, %836, %836 in 1 : vector<8x128xf32>, vector<8x128xf32>, vector<8x128xf32>, vector<8x128xf32> -> vector<8x512xf32>
    %838 = arith.mulf %837, %834 : vector<8x512xf32>
    %839 = arith.addf %833, %838 : vector<8x512xf32>
    %c2_i32_405 = arith.constant 2 : i32
    %840 = tpu.dynamic_rotate %675 by %c2_i32_405 dim 0 : vector<8x512xf32>, i32 -> vector<8x512xf32>
    %c42_i32_406 = arith.constant 42 : i32
    %841 = tpu.dynamic_rotate %840 by %c42_i32_406 dim 1 : vector<8x512xf32>, i32 -> vector<8x512xf32>
    %c135 = arith.constant 135 : index
    %c0_407 = arith.constant 0 : index
    %c0_408 = arith.constant 0 : index
    %842 = vector.load %arg2[%c135, %c0_407, %c0_408] : memref<144x8x128xf32, #tpu.memory_space<vmem>>, vector<1x8x128xf32>
    %843 = vector.shape_cast %842 : vector<1x8x128xf32> to vector<8x128xf32>
    %844 = tpu.concatenate %843, %843, %843, %843 in 1 : vector<8x128xf32>, vector<8x128xf32>, vector<8x128xf32>, vector<8x128xf32> -> vector<8x512xf32>
    %845 = arith.mulf %844, %841 : vector<8x512xf32>
    %846 = arith.addf %839, %845 : vector<8x512xf32>
    %c40_i32_409 = arith.constant 40 : i32
    %847 = tpu.dynamic_rotate %840 by %c40_i32_409 dim 1 : vector<8x512xf32>, i32 -> vector<8x512xf32>
    %c136 = arith.constant 136 : index
    %c0_410 = arith.constant 0 : index
    %c0_411 = arith.constant 0 : index
    %848 = vector.load %arg2[%c136, %c0_410, %c0_411] : memref<144x8x128xf32, #tpu.memory_space<vmem>>, vector<1x8x128xf32>
    %849 = vector.shape_cast %848 : vector<1x8x128xf32> to vector<8x128xf32>
    %850 = tpu.concatenate %849, %849, %849, %849 in 1 : vector<8x128xf32>, vector<8x128xf32>, vector<8x128xf32>, vector<8x128xf32> -> vector<8x512xf32>
    %851 = arith.mulf %850, %847 : vector<8x512xf32>
    %852 = arith.addf %846, %851 : vector<8x512xf32>
    %c38_i32_412 = arith.constant 38 : i32
    %853 = tpu.dynamic_rotate %840 by %c38_i32_412 dim 1 : vector<8x512xf32>, i32 -> vector<8x512xf32>
    %c137 = arith.constant 137 : index
    %c0_413 = arith.constant 0 : index
    %c0_414 = arith.constant 0 : index
    %854 = vector.load %arg2[%c137, %c0_413, %c0_414] : memref<144x8x128xf32, #tpu.memory_space<vmem>>, vector<1x8x128xf32>
    %855 = vector.shape_cast %854 : vector<1x8x128xf32> to vector<8x128xf32>
    %856 = tpu.concatenate %855, %855, %855, %855 in 1 : vector<8x128xf32>, vector<8x128xf32>, vector<8x128xf32>, vector<8x128xf32> -> vector<8x512xf32>
    %857 = arith.mulf %856, %853 : vector<8x512xf32>
    %858 = arith.addf %852, %857 : vector<8x512xf32>
    %c2_i32_415 = arith.constant 2 : i32
    %859 = tpu.dynamic_rotate %840 by %c2_i32_415 dim 1 : vector<8x512xf32>, i32 -> vector<8x512xf32>
    %c138 = arith.constant 138 : index
    %c0_416 = arith.constant 0 : index
    %c0_417 = arith.constant 0 : index
    %860 = vector.load %arg2[%c138, %c0_416, %c0_417] : memref<144x8x128xf32, #tpu.memory_space<vmem>>, vector<1x8x128xf32>
    %861 = vector.shape_cast %860 : vector<1x8x128xf32> to vector<8x128xf32>
    %862 = tpu.concatenate %861, %861, %861, %861 in 1 : vector<8x128xf32>, vector<8x128xf32>, vector<8x128xf32>, vector<8x128xf32> -> vector<8x512xf32>
    %863 = arith.mulf %862, %859 : vector<8x512xf32>
    %864 = arith.addf %858, %863 : vector<8x512xf32>
    %c139 = arith.constant 139 : index
    %c0_418 = arith.constant 0 : index
    %c0_419 = arith.constant 0 : index
    %865 = vector.load %arg2[%c139, %c0_418, %c0_419] : memref<144x8x128xf32, #tpu.memory_space<vmem>>, vector<1x8x128xf32>
    %866 = vector.shape_cast %865 : vector<1x8x128xf32> to vector<8x128xf32>
    %867 = tpu.concatenate %866, %866, %866, %866 in 1 : vector<8x128xf32>, vector<8x128xf32>, vector<8x128xf32>, vector<8x128xf32> -> vector<8x512xf32>
    %868 = arith.mulf %867, %840 : vector<8x512xf32>
    %869 = arith.addf %864, %868 : vector<8x512xf32>
    %c510_i32_420 = arith.constant 510 : i32
    %870 = tpu.dynamic_rotate %840 by %c510_i32_420 dim 1 : vector<8x512xf32>, i32 -> vector<8x512xf32>
    %c140 = arith.constant 140 : index
    %c0_421 = arith.constant 0 : index
    %c0_422 = arith.constant 0 : index
    %871 = vector.load %arg2[%c140, %c0_421, %c0_422] : memref<144x8x128xf32, #tpu.memory_space<vmem>>, vector<1x8x128xf32>
    %872 = vector.shape_cast %871 : vector<1x8x128xf32> to vector<8x128xf32>
    %873 = tpu.concatenate %872, %872, %872, %872 in 1 : vector<8x128xf32>, vector<8x128xf32>, vector<8x128xf32>, vector<8x128xf32> -> vector<8x512xf32>
    %874 = arith.mulf %873, %870 : vector<8x512xf32>
    %875 = arith.addf %869, %874 : vector<8x512xf32>
    %c474_i32_423 = arith.constant 474 : i32
    %876 = tpu.dynamic_rotate %840 by %c474_i32_423 dim 1 : vector<8x512xf32>, i32 -> vector<8x512xf32>
    %c141 = arith.constant 141 : index
    %c0_424 = arith.constant 0 : index
    %c0_425 = arith.constant 0 : index
    %877 = vector.load %arg2[%c141, %c0_424, %c0_425] : memref<144x8x128xf32, #tpu.memory_space<vmem>>, vector<1x8x128xf32>
    %878 = vector.shape_cast %877 : vector<1x8x128xf32> to vector<8x128xf32>
    %879 = tpu.concatenate %878, %878, %878, %878 in 1 : vector<8x128xf32>, vector<8x128xf32>, vector<8x128xf32>, vector<8x128xf32> -> vector<8x512xf32>
    %880 = arith.mulf %879, %876 : vector<8x512xf32>
    %881 = arith.addf %875, %880 : vector<8x512xf32>
    %c472_i32_426 = arith.constant 472 : i32
    %882 = tpu.dynamic_rotate %840 by %c472_i32_426 dim 1 : vector<8x512xf32>, i32 -> vector<8x512xf32>
    %c142 = arith.constant 142 : index
    %c0_427 = arith.constant 0 : index
    %c0_428 = arith.constant 0 : index
    %883 = vector.load %arg2[%c142, %c0_427, %c0_428] : memref<144x8x128xf32, #tpu.memory_space<vmem>>, vector<1x8x128xf32>
    %884 = vector.shape_cast %883 : vector<1x8x128xf32> to vector<8x128xf32>
    %885 = tpu.concatenate %884, %884, %884, %884 in 1 : vector<8x128xf32>, vector<8x128xf32>, vector<8x128xf32>, vector<8x128xf32> -> vector<8x512xf32>
    %886 = arith.mulf %885, %882 : vector<8x512xf32>
    %887 = arith.addf %881, %886 : vector<8x512xf32>
    %c470_i32_429 = arith.constant 470 : i32
    %888 = tpu.dynamic_rotate %840 by %c470_i32_429 dim 1 : vector<8x512xf32>, i32 -> vector<8x512xf32>
    %c143 = arith.constant 143 : index
    %c0_430 = arith.constant 0 : index
    %c0_431 = arith.constant 0 : index
    %889 = vector.load %arg2[%c143, %c0_430, %c0_431] : memref<144x8x128xf32, #tpu.memory_space<vmem>>, vector<1x8x128xf32>
    %890 = vector.shape_cast %889 : vector<1x8x128xf32> to vector<8x128xf32>
    %891 = tpu.concatenate %890, %890, %890, %890 in 1 : vector<8x128xf32>, vector<8x128xf32>, vector<8x128xf32>, vector<8x128xf32> -> vector<8x512xf32>
    %892 = arith.mulf %891, %888 : vector<8x512xf32>
    %893 = arith.addf %887, %892 : vector<8x512xf32>
    %894 = arith.addf %893, %451 : vector<8x512xf32>
    %cst_432 = arith.constant 0.000000e+00 : f32
    %895 = vector.broadcast %cst_432 : f32 to vector<8x512xf32>
    %896 = arith.cmpf oge, %894, %895 : vector<8x512xf32>
    %cst_433 = arith.constant 1.000000e-01 : f32
    %897 = vector.broadcast %cst_433 : f32 to vector<8x512xf32>
    %898 = arith.mulf %897, %894 : vector<8x512xf32>
    %899 = arith.select %896, %894, %898 : vector<8x512xi1>, vector<8x512xf32>
    %900 = arith.mulf %899, %0 : vector<8x512xf32>
    %901 = arith.addf %900, %2 : vector<8x512xf32>
    %c0_434 = arith.constant 0 : index
    %c0_435 = arith.constant 0 : index
    %c0_436 = arith.constant 0 : index
    %902 = vector.load %arg5[%c0_434, %c0_435, %c0_436] : memref<1x8x512xf32, #tpu.memory_space<vmem>>, vector<1x8x512xf32>
    %903 = vector.shape_cast %902 : vector<1x8x512xf32> to vector<8x512xf32>
    %904 = vector.shape_cast %901 : vector<8x512xf32> to vector<1x8x512xf32>
    tpu.vector_store %arg5[%c0_434, %c0_435, %c0_436], %904 {strides = array<i32>} : memref<1x8x512xf32, #tpu.memory_space<vmem>>, vector<1x8x512xf32>,
    return
  }
  func.func @transform_0(%arg0: i32) -> (i32, i32, i32) {
    %c0_i32 = arith.constant 0 : i32
    %c0_i32_0 = arith.constant 0 : i32
    %c0_i32_1 = arith.constant 0 : i32
    return %arg0, %c0_i32, %c0_i32_0 : i32, i32, i32
  }
  func.func @transform_1(%arg0: i32) -> (i32, i32, i32) {
    %c0_i32 = arith.constant 0 : i32
    %c0_i32_0 = arith.constant 0 : i32
    %c0_i32_1 = arith.constant 0 : i32
    %c0_i32_2 = arith.constant 0 : i32
    return %c0_i32, %c0_i32_0, %c0_i32_1 : i32, i32, i32
  }
  func.func @transform_2(%arg0: i32) -> (i32, i32, i32) {
    %c0_i32 = arith.constant 0 : i32
    %c0_i32_0 = arith.constant 0 : i32
    %c0_i32_1 = arith.constant 0 : i32
    %c0_i32_2 = arith.constant 0 : i32
    return %c0_i32, %c0_i32_0, %c0_i32_1 : i32, i32, i32
  }
  func.func @transform_3(%arg0: i32) -> (i32, i32) {
    %c0_i32 = arith.constant 0 : i32
    %c0_i32_0 = arith.constant 0 : i32
    %c0_i32_1 = arith.constant 0 : i32
    return %c0_i32, %c0_i32_0 : i32, i32
  }
  func.func @transform_4(%arg0: i32) -> (i32, i32, i32) {
    %c0_i32 = arith.constant 0 : i32
    %c0_i32_0 = arith.constant 0 : i32
    %c0_i32_1 = arith.constant 0 : i32
    return %arg0, %c0_i32, %c0_i32_0 : i32, i32, i32
  }
}

</mosaic_0001>

<llo_original>
// kernel: tpu_custom_call.1
$region0: #{tpu_custom_call.1}
  #allocation0 [shape = 'u32[]', space=smem, size = 0x4, offset = 0x4, fixed_abs, tag = 'smem constant byte address 0x4 - core index']
  #allocation1 [shape = 'u32[144,128]{1,0:T(1,128)}', space=vmem, size = 0x12000, scoped, tag = 'internal scratch']
  %s0 = inlined_call_operand.hbm [shape: f32[1,8,512], index: 0, kind: input, shape index: {}]
  %s1 = inlined_call_operand.hbm [shape: f32[144,8,128], index: 1, kind: input, shape index: {}]
  %s2 = inlined_call_operand.hbm [shape: f32[4,8,128], index: 2, kind: input, shape index: {}]
  %s3 = inlined_call_operand.hbm [shape: f32[8,512], index: 3, kind: input, shape index: {}]
  %s4 = inlined_call_operand.hbm [shape: f32[1,8,512], index: 4, kind: output, shape index: {}]
  %s5 = sld [smem:[#allocation0]]
  $region42: #{tpu_custom_call.1} parent=0
    _
  %s7 = ssub.s32 1, %s5
  %s8 = scalar_select 0, %s7, %s5
  $region1: #{tpu_custom_call.1} parent=0
    #allocation2 [shape = 'u8[16384]{0}', space=vmem, size = 0x4000, scoped, tag = 'input window, operand 0, single buffered']
    #allocation3 [shape = 's32[1]{0}', space=sflag, size = 0x4, scoped, tag = 'scoped memory for tpu_custom_call.1']
    #allocation4 [shape = 's32[1]{0}', space=sflag, size = 0x4, scoped, tag = 'scoped memory for tpu_custom_call.1']
    #allocation5 [shape = 'u8[589824]{0}', space=vmem, size = 0x90000, scoped, tag = 'input window, operand 1, single buffered']
    #allocation6 [shape = 's32[1]{0}', space=sflag, size = 0x4, scoped, tag = 'scoped memory for tpu_custom_call.1']
    #allocation7 [shape = 'u8[16384]{0}', space=vmem, size = 0x4000, scoped, tag = 'input window, operand 2, single buffered']
    #allocation8 [shape = 'u8[16384]{0}', space=vmem, size = 0x4000, scoped, tag = 'input window, operand 3, single buffered']
    #allocation9 [shape = 's32[1]{0}', space=sflag, size = 0x4, scoped, tag = 'scoped memory for tpu_custom_call.1']
    #allocation10 [shape = 'u8[16384]{0}', space=vmem, size = 0x4000, scoped, tag = 'output window, operand 0, single buffered']
    %9 = vsyncpa [#allocation3], 0
    %10 = vsyncpa [#allocation6], 0
    %11 = vsyncpa [#allocation9], 0
    %12 = vsyncpa [#allocation4], 0
    // Predicated region
    $region2: #{tpu_custom_call.1} parent=1 // pred_check
      _
    $region3: #{tpu_custom_call.1} parent=1 // pred_check_branch
      %14 = sbr.rel (0) target = $region5
    $region4: #{tpu_custom_call.1} parent=1 // pred_region
      %s16 = ssub.s32 512, 512
      %17 = vsyncadd [#allocation3], %s16
      %s19 = sshll.u32 [#allocation2], 4
      %s20 = int_to_ptr.vmem [resolvable:$true] %s19
      %22 = dma.hbm_to_vmem [thread:$0]  %s0, 512, %s20, [#allocation3]
    $region5: #{tpu_custom_call.1} parent=1 // pred_fallthru
      _
    // Predicated region
    $region6: #{tpu_custom_call.1} parent=1 // pred_check
      _
    $region7: #{tpu_custom_call.1} parent=1 // pred_check_branch
      %24 = sbr.rel (0) target = $region9
    $region8: #{tpu_custom_call.1} parent=1 // pred_region
      %s26 = ssub.s32 18432, 18432
      %27 = vsyncadd [#allocation6], %s26
      %s28 = sshll.u32 [#allocation5], 4
      %s29 = int_to_ptr.vmem [resolvable:$true] %s28
      %34 = dma.hbm_to_vmem [thread:$0]  %s1, 18432, %s29, [#allocation6], 128, 128, 8
    $region9: #{tpu_custom_call.1} parent=1 // pred_fallthru
      _
    // Predicated region
    $region10: #{tpu_custom_call.1} parent=1 // pred_check
      _
    $region11: #{tpu_custom_call.1} parent=1 // pred_check_branch
      %36 = sbr.rel (0) target = $region13
    $region12: #{tpu_custom_call.1} parent=1 // pred_region
      %s38 = ssub.s32 512, 512
      %39 = vsyncadd [#allocation6], %s38
      %s40 = sshll.u32 [#allocation7], 4
      %s41 = int_to_ptr.vmem [resolvable:$true] %s40
      %46 = dma.hbm_to_vmem [thread:$0]  %s2, 512, %s41, [#allocation6], 128, 128, 8
    $region13: #{tpu_custom_call.1} parent=1 // pred_fallthru
      _
    // Predicated region
    $region14: #{tpu_custom_call.1} parent=1 // pred_check
      _
    $region15: #{tpu_custom_call.1} parent=1 // pred_check_branch
      %48 = sbr.rel (0) target = $region17
    $region16: #{tpu_custom_call.1} parent=1 // pred_region
      %s50 = ssub.s32 512, 512
      %51 = vsyncadd [#allocation9], %s50
      %s53 = sshll.u32 [#allocation8], 4
      %s54 = int_to_ptr.vmem [resolvable:$true] %s53
      %56 = dma.hbm_to_vmem [thread:$0]  %s3, 512, %s54, [#allocation9]
    $region17: #{tpu_custom_call.1} parent=1 // pred_fallthru
      _
    // Predicated region
    $region18: #{tpu_custom_call.1} parent=1 // pred_check
      _
    $region19: #{tpu_custom_call.1} parent=1 // pred_check_branch
      %58 = sbr.rel (0) target = $region21
    $region20: #{tpu_custom_call.1} parent=1 // pred_region
      %59 = dma.done [#allocation3], 512
    $region21: #{tpu_custom_call.1} parent=1 // pred_fallthru
      _
    // Predicated region
    $region22: #{tpu_custom_call.1} parent=1 // pred_check
      _
    $region23: #{tpu_custom_call.1} parent=1 // pred_check_branch
      %61 = sbr.rel (0) target = $region25
    $region24: #{tpu_custom_call.1} parent=1 // pred_region
      %62 = dma.done [#allocation6], 18432
    $region25: #{tpu_custom_call.1} parent=1 // pred_fallthru
      _
    // Predicated region
    $region26: #{tpu_custom_call.1} parent=1 // pred_check
      _
    $region27: #{tpu_custom_call.1} parent=1 // pred_check_branch
      %64 = sbr.rel (0) target = $region29
    $region28: #{tpu_custom_call.1} parent=1 // pred_region
      %65 = dma.done [#allocation6], 512
    $region29: #{tpu_custom_call.1} parent=1 // pred_fallthru
      _
    // Predicated region
    $region30: #{tpu_custom_call.1} parent=1 // pred_check
      _
    $region31: #{tpu_custom_call.1} parent=1 // pred_check_branch
      %67 = sbr.rel (0) target = $region33
    $region32: #{tpu_custom_call.1} parent=1 // pred_region
      %68 = dma.done [#allocation9], 512
    $region33: #{tpu_custom_call.1} parent=1 // pred_fallthru
      _
    %v69 = vld [vmem:[#allocation8] sm:$0xff]
    %v70 = vld [vmem:[#allocation8 + $0x8] sm:$0xff]
    %v71 = vld [vmem:[#allocation8 + $0x10] sm:$0xff]
    %v72 = vld [vmem:[#allocation8 + $0x18] sm:$0xff]
    %v73 = vld [vmem:[#allocation2] sm:$0xff]
    %v74 = vld [vmem:[#allocation2 + $0x8] sm:$0xff]
    %v75 = vld [vmem:[#allocation2 + $0x10] sm:$0xff]
    %v76 = vld [vmem:[#allocation2 + $0x18] sm:$0xff]
    %v77 = vld [vmem:[#allocation7] sm:$0xff]
    %78 = vrot.lane.b32.xlu0 %v73, 21
    %v79 = vpop.permute.xlu0 %78
    %80 = vrot.lane.b32.xlu0 %v74, 21
    %v81 = vpop.permute.xlu0 %80
    %82 = vrot.lane.b32.xlu0 %v75, 21
    %v83 = vpop.permute.xlu0 %82
    %84 = vrot.lane.b32.xlu0 %v76, 21
    %v85 = vpop.permute.xlu0 %84
    %v86 = vlaneseq
    %v87 = vand.u32 %v86, 127
    %vm88 = vcmp.lt.s32.totalorder %v87, 21
    %v89 = vsel %vm88, %v83, %v85
    %v90 = vsel %vm88, %v81, %v83
    %v91 = vsel %vm88, %v79, %v81
    %v92 = vsel %vm88, %v85, %v79
    %v93 = vld [vmem:[#allocation5] sm:$0xff]
    %v94 = vmul.f32 %v93, %v92
    %v95 = vmul.f32 %v93, %v91
    %v96 = vmul.f32 %v93, %v90
    %v97 = vmul.f32 %v93, %v89
    %v98 = vadd.f32 %v77, %v94
    %v99 = vadd.f32 %v77, %v95
    %v100 = vadd.f32 %v77, %v96
    %v101 = vadd.f32 %v77, %v97
    %102 = vrot.lane.b32.xlu0 %v73, 20
    %v103 = vpop.permute.xlu0 %102
    %104 = vrot.lane.b32.xlu0 %v74, 20
    %v105 = vpop.permute.xlu0 %104
    %106 = vrot.lane.b32.xlu0 %v75, 20
    %v107 = vpop.permute.xlu0 %106
    %108 = vrot.lane.b32.xlu0 %v76, 20
    %v109 = vpop.permute.xlu0 %108
    %vm110 = vcmp.lt.s32.totalorder %v87, 20
    %v111 = vsel %vm110, %v107, %v109
    %v112 = vsel %vm110, %v105, %v107
    %v113 = vsel %vm110, %v103, %v105
    %v114 = vsel %vm110, %v109, %v103
    %s115 = scalar_lea.vmem [#allocation5], 8
    %v116 = vld [vmem:[%s115] sm:$0xff]
    %v117 = vmul.f32 %v116, %v114
    %v118 = vmul.f32 %v116, %v113
    %v119 = vmul.f32 %v116, %v112
    %v120 = vmul.f32 %v116, %v111
    %v121 = vadd.f32 %v98, %v117
    %v122 = vadd.f32 %v99, %v118
    %v123 = vadd.f32 %v100, %v119
    %v124 = vadd.f32 %v101, %v120
    %125 = vrot.lane.b32.xlu0 %v73, 19
    %v126 = vpop.permute.xlu0 %125
    %127 = vrot.lane.b32.xlu0 %v74, 19
    %v128 = vpop.permute.xlu0 %127
    %129 = vrot.lane.b32.xlu0 %v75, 19
    %v130 = vpop.permute.xlu0 %129
    %131 = vrot.lane.b32.xlu0 %v76, 19
    %v132 = vpop.permute.xlu0 %131
    %vm133 = vcmp.lt.s32.totalorder %v87, 19
    %v134 = vsel %vm133, %v130, %v132
    %v135 = vsel %vm133, %v128, %v130
    %v136 = vsel %vm133, %v126, %v128
    %v137 = vsel %vm133, %v132, %v126
    %s138 = scalar_lea.vmem [#allocation5], 16
    %v139 = vld [vmem:[%s138] sm:$0xff]
    %v140 = vmul.f32 %v139, %v137
    %v141 = vmul.f32 %v139, %v136
    %v142 = vmul.f32 %v139, %v135
    %v143 = vmul.f32 %v139, %v134
    %v144 = vadd.f32 %v121, %v140
    %v145 = vadd.f32 %v122, %v141
    %v146 = vadd.f32 %v123, %v142
    %v147 = vadd.f32 %v124, %v143
    %148 = vrot.lane.b32.xlu0 %v73, 1
    %v149 = vpop.permute.xlu0 %148
    %150 = vrot.lane.b32.xlu0 %v74, 1
    %v151 = vpop.permute.xlu0 %150
    %152 = vrot.lane.b32.xlu0 %v75, 1
    %v153 = vpop.permute.xlu0 %152
    %154 = vrot.lane.b32.xlu0 %v76, 1
    %v155 = vpop.permute.xlu0 %154
    %vm156 = vcmp.lt.s32.totalorder %v87, 1
    %v157 = vsel %vm156, %v153, %v155
    %v158 = vsel %vm156, %v151, %v153
    %v159 = vsel %vm156, %v149, %v151
    %v160 = vsel %vm156, %v155, %v149
    %s161 = scalar_lea.vmem [#allocation5], 24
    %v162 = vld [vmem:[%s161] sm:$0xff]
    %v163 = vmul.f32 %v162, %v160
    %v164 = vmul.f32 %v162, %v159
    %v165 = vmul.f32 %v162, %v158
    %v166 = vmul.f32 %v162, %v157
    %v167 = vadd.f32 %v144, %v163
    %v168 = vadd.f32 %v145, %v164
    %v169 = vadd.f32 %v146, %v165
    %v170 = vadd.f32 %v147, %v166
    %s171 = scalar_lea.vmem [#allocation5], 32
    %v172 = vld [vmem:[%s171] sm:$0xff]
    %v173 = vmul.f32 %v172, %v73
    %v174 = vmul.f32 %v172, %v74
    %v175 = vmul.f32 %v172, %v75
    %v176 = vmul.f32 %v172, %v76
    %v177 = vadd.f32 %v167, %v173
    %v178 = vadd.f32 %v168, %v174
    %v179 = vadd.f32 %v169, %v175
    %v180 = vadd.f32 %v170, %v176
    %181 = vrot.lane.b32.xlu0 %v73, 127
    %v182 = vpop.permute.xlu0 %181
    %183 = vrot.lane.b32.xlu0 %v74, 127
    %v184 = vpop.permute.xlu0 %183
    %185 = vrot.lane.b32.xlu0 %v75, 127
    %v186 = vpop.permute.xlu0 %185
    %187 = vrot.lane.b32.xlu0 %v76, 127
    %v188 = vpop.permute.xlu0 %187
    %vm189 = vcmp.lt.s32.totalorder %v87, 127
    %v190 = vsel %vm189, %v186, %v188
    %v191 = vsel %vm189, %v184, %v186
    %v192 = vsel %vm189, %v182, %v184
    %v193 = vsel %vm189, %v188, %v182
    %s194 = scalar_lea.vmem [#allocation5], 40
    %v195 = vld [vmem:[%s194] sm:$0xff]
    %v196 = vmul.f32 %v195, %v192
    %v197 = vmul.f32 %v195, %v191
    %v198 = vmul.f32 %v195, %v190
    %v199 = vmul.f32 %v195, %v193
    %v200 = vadd.f32 %v177, %v196
    %v201 = vadd.f32 %v178, %v197
    %v202 = vadd.f32 %v179, %v198
    %v203 = vadd.f32 %v180, %v199
    %204 = vrot.lane.b32.xlu0 %v73, 109
    %v205 = vpop.permute.xlu0 %204
    %206 = vrot.lane.b32.xlu0 %v74, 109
    %v207 = vpop.permute.xlu0 %206
    %208 = vrot.lane.b32.xlu0 %v75, 109
    %v209 = vpop.permute.xlu0 %208
    %210 = vrot.lane.b32.xlu0 %v76, 109
    %v211 = vpop.permute.xlu0 %210
    %vm212 = vcmp.lt.s32.totalorder %v87, 109
    %v213 = vsel %vm212, %v209, %v211
    %v214 = vsel %vm212, %v207, %v209
    %v215 = vsel %vm212, %v205, %v207
    %v216 = vsel %vm212, %v211, %v205
    %s217 = scalar_lea.vmem [#allocation5], 48
    %v218 = vld [vmem:[%s217] sm:$0xff]
    %v219 = vmul.f32 %v218, %v215
    %v220 = vmul.f32 %v218, %v214
    %v221 = vmul.f32 %v218, %v213
    %v222 = vmul.f32 %v218, %v216
    %v223 = vadd.f32 %v200, %v219
    %v224 = vadd.f32 %v201, %v220
    %v225 = vadd.f32 %v202, %v221
    %v226 = vadd.f32 %v203, %v222
    %227 = vrot.lane.b32.xlu0 %v73, 108
    %v228 = vpop.permute.xlu0 %227
    %229 = vrot.lane.b32.xlu0 %v74, 108
    %v230 = vpop.permute.xlu0 %229
    %231 = vrot.lane.b32.xlu0 %v75, 108
    %v232 = vpop.permute.xlu0 %231
    %233 = vrot.lane.b32.xlu0 %v76, 108
    %v234 = vpop.permute.xlu0 %233
    %vm235 = vcmp.lt.s32.totalorder %v87, 108
    %v236 = vsel %vm235, %v232, %v234
    %v237 = vsel %vm235, %v230, %v232
    %v238 = vsel %vm235, %v228, %v230
    %v239 = vsel %vm235, %v234, %v228
    %s240 = scalar_lea.vmem [#allocation5], 56
    %v241 = vld [vmem:[%s240] sm:$0xff]
    %v242 = vmul.f32 %v241, %v238
    %v243 = vmul.f32 %v241, %v237
    %v244 = vmul.f32 %v241, %v236
    %v245 = vmul.f32 %v241, %v239
    %v246 = vadd.f32 %v223, %v242
    %v247 = vadd.f32 %v224, %v243
    %v248 = vadd.f32 %v225, %v244
    %v249 = vadd.f32 %v226, %v245
    %250 = vrot.lane.b32.xlu0 %v73, 107
    %v251 = vpop.permute.xlu0 %250
    %252 = vrot.lane.b32.xlu0 %v74, 107
    %v253 = vpop.permute.xlu0 %252
    %254 = vrot.lane.b32.xlu0 %v75, 107
    %v255 = vpop.permute.xlu0 %254
    %256 = vrot.lane.b32.xlu0 %v76, 107
    %v257 = vpop.permute.xlu0 %256
    %vm258 = vcmp.lt.s32.totalorder %v87, 107
    %v259 = vsel %vm258, %v255, %v257
    %v260 = vsel %vm258, %v253, %v255
    %v261 = vsel %vm258, %v251, %v253
    %v262 = vsel %vm258, %v257, %v251
    %s263 = scalar_lea.vmem [#allocation5], 64
    %v264 = vld [vmem:[%s263] sm:$0xff]
    %v265 = vmul.f32 %v264, %v261
    %v266 = vmul.f32 %v264, %v260
    %v267 = vmul.f32 %v264, %v259
    %v268 = vmul.f32 %v264, %v262
    %v269 = vadd.f32 %v246, %v265
    %v270 = vadd.f32 %v247, %v266
    %v271 = vadd.f32 %v248, %v267
    %v272 = vadd.f32 %v249, %v268
    %v273 = vrot.slane %v73, 2
    %v274 = vrot.slane %v74, 2
    %v275 = vrot.slane %v75, 2
    %v276 = vrot.slane %v76, 2
    %277 = vrot.lane.b32.xlu0 %v273, 21
    %v278 = vpop.permute.xlu0 %277
    %279 = vrot.lane.b32.xlu0 %v274, 21
    %v280 = vpop.permute.xlu0 %279
    %281 = vrot.lane.b32.xlu0 %v275, 21
    %v282 = vpop.permute.xlu0 %281
    %283 = vrot.lane.b32.xlu0 %v276, 21
    %v284 = vpop.permute.xlu0 %283
    %v285 = vsel %vm88, %v282, %v284
    %v286 = vsel %vm88, %v280, %v282
    %v287 = vsel %vm88, %v278, %v280
    %v288 = vsel %vm88, %v284, %v278
    %s289 = scalar_lea.vmem [#allocation5], 72
    %v290 = vld [vmem:[%s289] sm:$0xff]
    %v291 = vmul.f32 %v290, %v288
    %v292 = vmul.f32 %v290, %v287
    %v293 = vmul.f32 %v290, %v286
    %v294 = vmul.f32 %v290, %v285
    %v295 = vadd.f32 %v269, %v291
    %v296 = vadd.f32 %v270, %v292
    %v297 = vadd.f32 %v271, %v293
    %v298 = vadd.f32 %v272, %v294
    %299 = vrot.lane.b32.xlu0 %v273, 20
    %v300 = vpop.permute.xlu0 %299
    %301 = vrot.lane.b32.xlu0 %v274, 20
    %v302 = vpop.permute.xlu0 %301
    %303 = vrot.lane.b32.xlu0 %v275, 20
    %v304 = vpop.permute.xlu0 %303
    %305 = vrot.lane.b32.xlu0 %v276, 20
    %v306 = vpop.permute.xlu0 %305
    %v307 = vsel %vm110, %v304, %v306
    %v308 = vsel %vm110, %v302, %v304
    %v309 = vsel %vm110, %v300, %v302
    %v310 = vsel %vm110, %v306, %v300
    %s311 = scalar_lea.vmem [#allocation5], 80
    %v312 = vld [vmem:[%s311] sm:$0xff]
    %v313 = vmul.f32 %v312, %v310
    %v314 = vmul.f32 %v312, %v309
    %v315 = vmul.f32 %v312, %v308
    %v316 = vmul.f32 %v312, %v307
    %v317 = vadd.f32 %v295, %v313
    %v318 = vadd.f32 %v296, %v314
    %v319 = vadd.f32 %v297, %v315
    %v320 = vadd.f32 %v298, %v316
    %321 = vrot.lane.b32.xlu0 %v273, 19
    %v322 = vpop.permute.xlu0 %321
    %323 = vrot.lane.b32.xlu0 %v274, 19
    %v324 = vpop.permute.xlu0 %323
    %325 = vrot.lane.b32.xlu0 %v275, 19
    %v326 = vpop.permute.xlu0 %325
    %327 = vrot.lane.b32.xlu0 %v276, 19
    %v328 = vpop.permute.xlu0 %327
    %v329 = vsel %vm133, %v326, %v328
    %v330 = vsel %vm133, %v324, %v326
    %v331 = vsel %vm133, %v322, %v324
    %v332 = vsel %vm133, %v328, %v322
    %s333 = scalar_lea.vmem [#allocation5], 88
    %v334 = vld [vmem:[%s333] sm:$0xff]
    %v335 = vmul.f32 %v334, %v332
    %v336 = vmul.f32 %v334, %v331
    %v337 = vmul.f32 %v334, %v330
    %v338 = vmul.f32 %v334, %v329
    %v339 = vadd.f32 %v317, %v335
    %v340 = vadd.f32 %v318, %v336
    %v341 = vadd.f32 %v319, %v337
    %v342 = vadd.f32 %v320, %v338
    %343 = vrot.lane.b32.xlu0 %v273, 1
    %v344 = vpop.permute.xlu0 %343
    %345 = vrot.lane.b32.xlu0 %v274, 1
    %v346 = vpop.permute.xlu0 %345
    %347 = vrot.lane.b32.xlu0 %v275, 1
    %v348 = vpop.permute.xlu0 %347
    %349 = vrot.lane.b32.xlu0 %v276, 1
    %v350 = vpop.permute.xlu0 %349
    %v351 = vsel %vm156, %v348, %v350
    %v352 = vsel %vm156, %v346, %v348
    %v353 = vsel %vm156, %v344, %v346
    %v354 = vsel %vm156, %v350, %v344
    %s355 = scalar_lea.vmem [#allocation5], 96
    %v356 = vld [vmem:[%s355] sm:$0xff]
    %v357 = vmul.f32 %v356, %v354
    %v358 = vmul.f32 %v356, %v353
    %v359 = vmul.f32 %v356, %v352
    %v360 = vmul.f32 %v356, %v351
    %v361 = vadd.f32 %v339, %v357
    %v362 = vadd.f32 %v340, %v358
    %v363 = vadd.f32 %v341, %v359
    %v364 = vadd.f32 %v342, %v360
    %s365 = scalar_lea.vmem [#allocation5], 104
    %v366 = vld [vmem:[%s365] sm:$0xff]
    %v367 = vmul.f32 %v366, %v273
    %v368 = vmul.f32 %v366, %v274
    %v369 = vmul.f32 %v366, %v275
    %v370 = vmul.f32 %v366, %v276
    %v371 = vadd.f32 %v361, %v367
    %v372 = vadd.f32 %v362, %v368
    %v373 = vadd.f32 %v363, %v369
    %v374 = vadd.f32 %v364, %v370
    %375 = vrot.lane.b32.xlu0 %v273, 127
    %v376 = vpop.permute.xlu0 %375
    %377 = vrot.lane.b32.xlu0 %v274, 127
    %v378 = vpop.permute.xlu0 %377
    %379 = vrot.lane.b32.xlu0 %v275, 127
    %v380 = vpop.permute.xlu0 %379
    %381 = vrot.lane.b32.xlu0 %v276, 127
    %v382 = vpop.permute.xlu0 %381
    %v383 = vsel %vm189, %v380, %v382
    %v384 = vsel %vm189, %v378, %v380
    %v385 = vsel %vm189, %v376, %v378
    %v386 = vsel %vm189, %v382, %v376
    %s387 = scalar_lea.vmem [#allocation5], 112
    %v388 = vld [vmem:[%s387] sm:$0xff]
    %v389 = vmul.f32 %v388, %v385
    %v390 = vmul.f32 %v388, %v384
    %v391 = vmul.f32 %v388, %v383
    %v392 = vmul.f32 %v388, %v386
    %v393 = vadd.f32 %v371, %v389
    %v394 = vadd.f32 %v372, %v390
    %v395 = vadd.f32 %v373, %v391
    %v396 = vadd.f32 %v374, %v392
    %397 = vrot.lane.b32.xlu0 %v273, 109
    %v398 = vpop.permute.xlu0 %397
    %399 = vrot.lane.b32.xlu0 %v274, 109
    %v400 = vpop.permute.xlu0 %399
    %401 = vrot.lane.b32.xlu0 %v275, 109
    %v402 = vpop.permute.xlu0 %401
    %403 = vrot.lane.b32.xlu0 %v276, 109
    %v404 = vpop.permute.xlu0 %403
    %v405 = vsel %vm212, %v402, %v404
    %v406 = vsel %vm212, %v400, %v402
    %v407 = vsel %vm212, %v398, %v400
    %v408 = vsel %vm212, %v404, %v398
    %s409 = scalar_lea.vmem [#allocation5], 120
    %v410 = vld [vmem:[%s409] sm:$0xff]
    %v411 = vmul.f32 %v410, %v407
    %v412 = vmul.f32 %v410, %v406
    %v413 = vmul.f32 %v410, %v405
    %v414 = vmul.f32 %v410, %v408
    %v415 = vadd.f32 %v393, %v411
    %v416 = vadd.f32 %v394, %v412
    %v417 = vadd.f32 %v395, %v413
    %v418 = vadd.f32 %v396, %v414
    %419 = vrot.lane.b32.xlu0 %v273, 108
    %v420 = vpop.permute.xlu0 %419
    %421 = vrot.lane.b32.xlu0 %v274, 108
    %v422 = vpop.permute.xlu0 %421
    %423 = vrot.lane.b32.xlu0 %v275, 108
    %v424 = vpop.permute.xlu0 %423
    %425 = vrot.lane.b32.xlu0 %v276, 108
    %v426 = vpop.permute.xlu0 %425
    %v427 = vsel %vm235, %v424, %v426
    %v428 = vsel %vm235, %v422, %v424
    %v429 = vsel %vm235, %v420, %v422
    %v430 = vsel %vm235, %v426, %v420
    %s431 = scalar_lea.vmem [#allocation5], 128
    %v432 = vld [vmem:[%s431] sm:$0xff]
    %v433 = vmul.f32 %v432, %v429
    %v434 = vmul.f32 %v432, %v428
    %v435 = vmul.f32 %v432, %v427
    %v436 = vmul.f32 %v432, %v430
    %v437 = vadd.f32 %v415, %v433
    %v438 = vadd.f32 %v416, %v434
    %v439 = vadd.f32 %v417, %v435
    %v440 = vadd.f32 %v418, %v436
    %441 = vrot.lane.b32.xlu0 %v273, 107
    %v442 = vpop.permute.xlu0 %441
    %443 = vrot.lane.b32.xlu0 %v274, 107
    %v444 = vpop.permute.xlu0 %443
    %445 = vrot.lane.b32.xlu0 %v275, 107
    %v446 = vpop.permute.xlu0 %445
    %447 = vrot.lane.b32.xlu0 %v276, 107
    %v448 = vpop.permute.xlu0 %447
    %v449 = vsel %vm258, %v446, %v448
    %v450 = vsel %vm258, %v444, %v446
    %v451 = vsel %vm258, %v442, %v444
    %v452 = vsel %vm258, %v448, %v442
    %s453 = scalar_lea.vmem [#allocation5], 136
    %v454 = vld [vmem:[%s453] sm:$0xff]
    %v455 = vmul.f32 %v454, %v451
    %v456 = vmul.f32 %v454, %v450
    %v457 = vmul.f32 %v454, %v449
    %v458 = vmul.f32 %v454, %v452
    %v459 = vadd.f32 %v437, %v455
    %v460 = vadd.f32 %v438, %v456
    %v461 = vadd.f32 %v439, %v457
    %v462 = vadd.f32 %v440, %v458
    %v463 = vrot.slane %v73, 4
    %v464 = vrot.slane %v74, 4
    %v465 = vrot.slane %v75, 4
    %v466 = vrot.slane %v76, 4
    %467 = vrot.lane.b32.xlu0 %v463, 21
    %v468 = vpop.permute.xlu0 %467
    %469 = vrot.lane.b32.xlu0 %v464, 21
    %v470 = vpop.permute.xlu0 %469
    %471 = vrot.lane.b32.xlu0 %v465, 21
    %v472 = vpop.permute.xlu0 %471
    %473 = vrot.lane.b32.xlu0 %v466, 21
    %v474 = vpop.permute.xlu0 %473
    %v475 = vsel %vm88, %v472, %v474
    %v476 = vsel %vm88, %v470, %v472
    %v477 = vsel %vm88, %v468, %v470
    %v478 = vsel %vm88, %v474, %v468
    %s479 = scalar_lea.vmem [#allocation5], 144
    %v480 = vld [vmem:[%s479] sm:$0xff]
    %v481 = vmul.f32 %v480, %v478
    %v482 = vmul.f32 %v480, %v477
    %v483 = vmul.f32 %v480, %v476
    %v484 = vmul.f32 %v480, %v475
    %v485 = vadd.f32 %v459, %v481
    %v486 = vadd.f32 %v460, %v482
    %v487 = vadd.f32 %v461, %v483
    %v488 = vadd.f32 %v462, %v484
    %489 = vrot.lane.b32.xlu0 %v463, 20
    %v490 = vpop.permute.xlu0 %489
    %491 = vrot.lane.b32.xlu0 %v464, 20
    %v492 = vpop.permute.xlu0 %491
    %493 = vrot.lane.b32.xlu0 %v465, 20
    %v494 = vpop.permute.xlu0 %493
    %495 = vrot.lane.b32.xlu0 %v466, 20
    %v496 = vpop.permute.xlu0 %495
    %v497 = vsel %vm110, %v494, %v496
    %v498 = vsel %vm110, %v492, %v494
    %v499 = vsel %vm110, %v490, %v492
    %v500 = vsel %vm110, %v496, %v490
    %s501 = scalar_lea.vmem [#allocation5], 152
    %v502 = vld [vmem:[%s501] sm:$0xff]
    %v503 = vmul.f32 %v502, %v500
    %v504 = vmul.f32 %v502, %v499
    %v505 = vmul.f32 %v502, %v498
    %v506 = vmul.f32 %v502, %v497
    %v507 = vadd.f32 %v485, %v503
    %v508 = vadd.f32 %v486, %v504
    %v509 = vadd.f32 %v487, %v505
    %v510 = vadd.f32 %v488, %v506
    %511 = vrot.lane.b32.xlu0 %v463, 19
    %v512 = vpop.permute.xlu0 %511
    %513 = vrot.lane.b32.xlu0 %v464, 19
    %v514 = vpop.permute.xlu0 %513
    %515 = vrot.lane.b32.xlu0 %v465, 19
    %v516 = vpop.permute.xlu0 %515
    %517 = vrot.lane.b32.xlu0 %v466, 19
    %v518 = vpop.permute.xlu0 %517
    %v519 = vsel %vm133, %v516, %v518
    %v520 = vsel %vm133, %v514, %v516
    %v521 = vsel %vm133, %v512, %v514
    %v522 = vsel %vm133, %v518, %v512
    %s523 = scalar_lea.vmem [#allocation5], 160
    %v524 = vld [vmem:[%s523] sm:$0xff]
    %v525 = vmul.f32 %v524, %v522
    %v526 = vmul.f32 %v524, %v521
    %v527 = vmul.f32 %v524, %v520
    %v528 = vmul.f32 %v524, %v519
    %v529 = vadd.f32 %v507, %v525
    %v530 = vadd.f32 %v508, %v526
    %v531 = vadd.f32 %v509, %v527
    %v532 = vadd.f32 %v510, %v528
    %533 = vrot.lane.b32.xlu0 %v463, 1
    %v534 = vpop.permute.xlu0 %533
    %535 = vrot.lane.b32.xlu0 %v464, 1
    %v536 = vpop.permute.xlu0 %535
    %537 = vrot.lane.b32.xlu0 %v465, 1
    %v538 = vpop.permute.xlu0 %537
    %539 = vrot.lane.b32.xlu0 %v466, 1
    %v540 = vpop.permute.xlu0 %539
    %v541 = vsel %vm156, %v538, %v540
    %v542 = vsel %vm156, %v536, %v538
    %v543 = vsel %vm156, %v534, %v536
    %v544 = vsel %vm156, %v540, %v534
    %s545 = scalar_lea.vmem [#allocation5], 168
    %v546 = vld [vmem:[%s545] sm:$0xff]
    %v547 = vmul.f32 %v546, %v544
    %v548 = vmul.f32 %v546, %v543
    %v549 = vmul.f32 %v546, %v542
    %v550 = vmul.f32 %v546, %v541
    %v551 = vadd.f32 %v529, %v547
    %v552 = vadd.f32 %v530, %v548
    %v553 = vadd.f32 %v531, %v549
    %v554 = vadd.f32 %v532, %v550
    %s555 = scalar_lea.vmem [#allocation5], 176
    %v556 = vld [vmem:[%s555] sm:$0xff]
    %v557 = vmul.f32 %v556, %v463
    %v558 = vmul.f32 %v556, %v464
    %v559 = vmul.f32 %v556, %v465
    %v560 = vmul.f32 %v556, %v466
    %v561 = vadd.f32 %v551, %v557
    %v562 = vadd.f32 %v552, %v558
    %v563 = vadd.f32 %v553, %v559
    %v564 = vadd.f32 %v554, %v560
    %565 = vrot.lane.b32.xlu0 %v463, 127
    %v566 = vpop.permute.xlu0 %565
    %567 = vrot.lane.b32.xlu0 %v464, 127
    %v568 = vpop.permute.xlu0 %567
    %569 = vrot.lane.b32.xlu0 %v465, 127
    %v570 = vpop.permute.xlu0 %569
    %571 = vrot.lane.b32.xlu0 %v466, 127
    %v572 = vpop.permute.xlu0 %571
    %v573 = vsel %vm189, %v570, %v572
    %v574 = vsel %vm189, %v568, %v570
    %v575 = vsel %vm189, %v566, %v568
    %v576 = vsel %vm189, %v572, %v566
    %s577 = scalar_lea.vmem [#allocation5], 184
    %v578 = vld [vmem:[%s577] sm:$0xff]
    %v579 = vmul.f32 %v578, %v575
    %v580 = vmul.f32 %v578, %v574
    %v581 = vmul.f32 %v578, %v573
    %v582 = vmul.f32 %v578, %v576
    %v583 = vadd.f32 %v561, %v579
    %v584 = vadd.f32 %v562, %v580
    %v585 = vadd.f32 %v563, %v581
    %v586 = vadd.f32 %v564, %v582
    %587 = vrot.lane.b32.xlu0 %v463, 109
    %v588 = vpop.permute.xlu0 %587
    %589 = vrot.lane.b32.xlu0 %v464, 109
    %v590 = vpop.permute.xlu0 %589
    %591 = vrot.lane.b32.xlu0 %v465, 109
    %v592 = vpop.permute.xlu0 %591
    %593 = vrot.lane.b32.xlu0 %v466, 109
    %v594 = vpop.permute.xlu0 %593
    %v595 = vsel %vm212, %v592, %v594
    %v596 = vsel %vm212, %v590, %v592
    %v597 = vsel %vm212, %v588, %v590
    %v598 = vsel %vm212, %v594, %v588
    %s599 = scalar_lea.vmem [#allocation5], 192
    %v600 = vld [vmem:[%s599] sm:$0xff]
    %v601 = vmul.f32 %v600, %v597
    %v602 = vmul.f32 %v600, %v596
    %v603 = vmul.f32 %v600, %v595
    %v604 = vmul.f32 %v600, %v598
    %v605 = vadd.f32 %v583, %v601
    %v606 = vadd.f32 %v584, %v602
    %v607 = vadd.f32 %v585, %v603
    %v608 = vadd.f32 %v586, %v604
    %609 = vrot.lane.b32.xlu0 %v463, 108
    %v610 = vpop.permute.xlu0 %609
    %611 = vrot.lane.b32.xlu0 %v464, 108
    %v612 = vpop.permute.xlu0 %611
    %613 = vrot.lane.b32.xlu0 %v465, 108
    %v614 = vpop.permute.xlu0 %613
    %615 = vrot.lane.b32.xlu0 %v466, 108
    %v616 = vpop.permute.xlu0 %615
    %v617 = vsel %vm235, %v614, %v616
    %v618 = vsel %vm235, %v612, %v614
    %v619 = vsel %vm235, %v610, %v612
    %v620 = vsel %vm235, %v616, %v610
    %s621 = scalar_lea.vmem [#allocation5], 200
    %v622 = vld [vmem:[%s621] sm:$0xff]
    %v623 = vmul.f32 %v622, %v619
    %v624 = vmul.f32 %v622, %v618
    %v625 = vmul.f32 %v622, %v617
    %v626 = vmul.f32 %v622, %v620
    %v627 = vadd.f32 %v605, %v623
    %v628 = vadd.f32 %v606, %v624
    %v629 = vadd.f32 %v607, %v625
    %v630 = vadd.f32 %v608, %v626
    %631 = vrot.lane.b32.xlu0 %v463, 107
    %v632 = vpop.permute.xlu0 %631
    %633 = vrot.lane.b32.xlu0 %v464, 107
    %v634 = vpop.permute.xlu0 %633
    %635 = vrot.lane.b32.xlu0 %v465, 107
    %v636 = vpop.permute.xlu0 %635
    %637 = vrot.lane.b32.xlu0 %v466, 107
    %v638 = vpop.permute.xlu0 %637
    %v639 = vsel %vm258, %v636, %v638
    %v640 = vsel %vm258, %v634, %v636
    %v641 = vsel %vm258, %v632, %v634
    %v642 = vsel %vm258, %v638, %v632
    %s643 = scalar_lea.vmem [#allocation5], 208
    %v644 = vld [vmem:[%s643] sm:$0xff]
    %v645 = vmul.f32 %v644, %v641
    %v646 = vmul.f32 %v644, %v640
    %v647 = vmul.f32 %v644, %v639
    %v648 = vmul.f32 %v644, %v642
    %v649 = vadd.f32 %v627, %v645
    %v650 = vadd.f32 %v628, %v646
    %v651 = vadd.f32 %v629, %v647
    %v652 = vadd.f32 %v630, %v648
    %v653 = vrot.slane %v73, 6
    %v654 = vrot.slane %v74, 6
    %v655 = vrot.slane %v75, 6
    %v656 = vrot.slane %v76, 6
    %657 = vrot.lane.b32.xlu0 %v653, 21
    %v658 = vpop.permute.xlu0 %657
    %659 = vrot.lane.b32.xlu0 %v654, 21
    %v660 = vpop.permute.xlu0 %659
    %661 = vrot.lane.b32.xlu0 %v655, 21
    %v662 = vpop.permute.xlu0 %661
    %663 = vrot.lane.b32.xlu0 %v656, 21
    %v664 = vpop.permute.xlu0 %663
    %v665 = vsel %vm88, %v662, %v664
    %v666 = vsel %vm88, %v660, %v662
    %v667 = vsel %vm88, %v658, %v660
    %v668 = vsel %vm88, %v664, %v658
    %s669 = scalar_lea.vmem [#allocation5], 216
    %v670 = vld [vmem:[%s669] sm:$0xff]
    %v671 = vmul.f32 %v670, %v668
    %v672 = vmul.f32 %v670, %v667
    %v673 = vmul.f32 %v670, %v666
    %v674 = vmul.f32 %v670, %v665
    %v675 = vadd.f32 %v649, %v671
    %v676 = vadd.f32 %v650, %v672
    %v677 = vadd.f32 %v651, %v673
    %v678 = vadd.f32 %v652, %v674
    %679 = vrot.lane.b32.xlu0 %v653, 20
    %v680 = vpop.permute.xlu0 %679
    %681 = vrot.lane.b32.xlu0 %v654, 20
    %v682 = vpop.permute.xlu0 %681
    %683 = vrot.lane.b32.xlu0 %v655, 20
    %v684 = vpop.permute.xlu0 %683
    %685 = vrot.lane.b32.xlu0 %v656, 20
    %v686 = vpop.permute.xlu0 %685
    %v687 = vsel %vm110, %v684, %v686
    %v688 = vsel %vm110, %v682, %v684
    %v689 = vsel %vm110, %v680, %v682
    %v690 = vsel %vm110, %v686, %v680
    %s691 = scalar_lea.vmem [#allocation5], 224
    %v692 = vld [vmem:[%s691] sm:$0xff]
    %v693 = vmul.f32 %v692, %v690
    %v694 = vmul.f32 %v692, %v689
    %v695 = vmul.f32 %v692, %v688
    %v696 = vmul.f32 %v692, %v687
    %v697 = vadd.f32 %v675, %v693
    %v698 = vadd.f32 %v676, %v694
    %v699 = vadd.f32 %v677, %v695
    %v700 = vadd.f32 %v678, %v696
    %701 = vrot.lane.b32.xlu0 %v653, 19
    %v702 = vpop.permute.xlu0 %701
    %703 = vrot.lane.b32.xlu0 %v654, 19
    %v704 = vpop.permute.xlu0 %703
    %705 = vrot.lane.b32.xlu0 %v655, 19
    %v706 = vpop.permute.xlu0 %705
    %707 = vrot.lane.b32.xlu0 %v656, 19
    %v708 = vpop.permute.xlu0 %707
    %v709 = vsel %vm133, %v706, %v708
    %v710 = vsel %vm133, %v704, %v706
    %v711 = vsel %vm133, %v702, %v704
    %v712 = vsel %vm133, %v708, %v702
    %s713 = scalar_lea.vmem [#allocation5], 232
    %v714 = vld [vmem:[%s713] sm:$0xff]
    %v715 = vmul.f32 %v714, %v712
    %v716 = vmul.f32 %v714, %v711
    %v717 = vmul.f32 %v714, %v710
    %v718 = vmul.f32 %v714, %v709
    %v719 = vadd.f32 %v697, %v715
    %v720 = vadd.f32 %v698, %v716
    %v721 = vadd.f32 %v699, %v717
    %v722 = vadd.f32 %v700, %v718
    %723 = vrot.lane.b32.xlu0 %v653, 1
    %v724 = vpop.permute.xlu0 %723
    %725 = vrot.lane.b32.xlu0 %v654, 1
    %v726 = vpop.permute.xlu0 %725
    %727 = vrot.lane.b32.xlu0 %v655, 1
    %v728 = vpop.permute.xlu0 %727
    %729 = vrot.lane.b32.xlu0 %v656, 1
    %v730 = vpop.permute.xlu0 %729
    %v731 = vsel %vm156, %v728, %v730
    %v732 = vsel %vm156, %v726, %v728
    %v733 = vsel %vm156, %v724, %v726
    %v734 = vsel %vm156, %v730, %v724
    %s735 = scalar_lea.vmem [#allocation5], 240
    %v736 = vld [vmem:[%s735] sm:$0xff]
    %v737 = vmul.f32 %v736, %v734
    %v738 = vmul.f32 %v736, %v733
    %v739 = vmul.f32 %v736, %v732
    %v740 = vmul.f32 %v736, %v731
    %v741 = vadd.f32 %v719, %v737
    %v742 = vadd.f32 %v720, %v738
    %v743 = vadd.f32 %v721, %v739
    %v744 = vadd.f32 %v722, %v740
    %s745 = scalar_lea.vmem [#allocation5], 248
    %v746 = vld [vmem:[%s745] sm:$0xff]
    %v747 = vmul.f32 %v746, %v653
    %v748 = vmul.f32 %v746, %v654
    %v749 = vmul.f32 %v746, %v655
    %v750 = vmul.f32 %v746, %v656
    %v751 = vadd.f32 %v741, %v747
    %v752 = vadd.f32 %v742, %v748
    %v753 = vadd.f32 %v743, %v749
    %v754 = vadd.f32 %v744, %v750
    %755 = vrot.lane.b32.xlu0 %v653, 127
    %v756 = vpop.permute.xlu0 %755
    %757 = vrot.lane.b32.xlu0 %v654, 127
    %v758 = vpop.permute.xlu0 %757
    %759 = vrot.lane.b32.xlu0 %v655, 127
    %v760 = vpop.permute.xlu0 %759
    %761 = vrot.lane.b32.xlu0 %v656, 127
    %v762 = vpop.permute.xlu0 %761
    %v763 = vsel %vm189, %v760, %v762
    %v764 = vsel %vm189, %v758, %v760
    %v765 = vsel %vm189, %v756, %v758
    %v766 = vsel %vm189, %v762, %v756
    %s767 = scalar_lea.vmem [#allocation5], 256
    %v768 = vld [vmem:[%s767] sm:$0xff]
    %v769 = vmul.f32 %v768, %v765
    %v770 = vmul.f32 %v768, %v764
    %v771 = vmul.f32 %v768, %v763
    %v772 = vmul.f32 %v768, %v766
    %v773 = vadd.f32 %v751, %v769
    %v774 = vadd.f32 %v752, %v770
    %v775 = vadd.f32 %v753, %v771
    %v776 = vadd.f32 %v754, %v772
    %777 = vrot.lane.b32.xlu0 %v653, 109
    %v778 = vpop.permute.xlu0 %777
    %779 = vrot.lane.b32.xlu0 %v654, 109
    %v780 = vpop.permute.xlu0 %779
    %781 = vrot.lane.b32.xlu0 %v655, 109
    %v782 = vpop.permute.xlu0 %781
    %783 = vrot.lane.b32.xlu0 %v656, 109
    %v784 = vpop.permute.xlu0 %783
    %v785 = vsel %vm212, %v782, %v784
    %v786 = vsel %vm212, %v780, %v782
    %v787 = vsel %vm212, %v778, %v780
    %v788 = vsel %vm212, %v784, %v778
    %s789 = scalar_lea.vmem [#allocation5], 264
    %v790 = vld [vmem:[%s789] sm:$0xff]
    %v791 = vmul.f32 %v790, %v787
    %v792 = vmul.f32 %v790, %v786
    %v793 = vmul.f32 %v790, %v785
    %v794 = vmul.f32 %v790, %v788
    %v795 = vadd.f32 %v773, %v791
    %v796 = vadd.f32 %v774, %v792
    %v797 = vadd.f32 %v775, %v793
    %v798 = vadd.f32 %v776, %v794
    %799 = vrot.lane.b32.xlu0 %v653, 108
    %v800 = vpop.permute.xlu0 %799
    %801 = vrot.lane.b32.xlu0 %v654, 108
    %v802 = vpop.permute.xlu0 %801
    %803 = vrot.lane.b32.xlu0 %v655, 108
    %v804 = vpop.permute.xlu0 %803
    %805 = vrot.lane.b32.xlu0 %v656, 108
    %v806 = vpop.permute.xlu0 %805
    %v807 = vsel %vm235, %v804, %v806
    %v808 = vsel %vm235, %v802, %v804
    %v809 = vsel %vm235, %v800, %v802
    %v810 = vsel %vm235, %v806, %v800
    %s811 = scalar_lea.vmem [#allocation5], 272
    %v812 = vld [vmem:[%s811] sm:$0xff]
    %v813 = vmul.f32 %v812, %v809
    %v814 = vmul.f32 %v812, %v808
    %v815 = vmul.f32 %v812, %v807
    %v816 = vmul.f32 %v812, %v810
    %v817 = vadd.f32 %v795, %v813
    %v818 = vadd.f32 %v796, %v814
    %v819 = vadd.f32 %v797, %v815
    %v820 = vadd.f32 %v798, %v816
    %821 = vrot.lane.b32.xlu0 %v653, 107
    %v822 = vpop.permute.xlu0 %821
    %823 = vrot.lane.b32.xlu0 %v654, 107
    %v824 = vpop.permute.xlu0 %823
    %825 = vrot.lane.b32.xlu0 %v655, 107
    %v826 = vpop.permute.xlu0 %825
    %827 = vrot.lane.b32.xlu0 %v656, 107
    %v828 = vpop.permute.xlu0 %827
    %v829 = vsel %vm258, %v826, %v828
    %v830 = vsel %vm258, %v824, %v826
    %v831 = vsel %vm258, %v822, %v824
    %v832 = vsel %vm258, %v828, %v822
    %s833 = scalar_lea.vmem [#allocation5], 280
    %v834 = vld [vmem:[%s833] sm:$0xff]
    %v835 = vmul.f32 %v834, %v831
    %v836 = vmul.f32 %v834, %v830
    %v837 = vmul.f32 %v834, %v829
    %v838 = vmul.f32 %v834, %v832
    %v839 = vadd.f32 %v817, %v835
    %v840 = vadd.f32 %v818, %v836
    %v841 = vadd.f32 %v819, %v837
    %v842 = vadd.f32 %v820, %v838
    %vm843 = vcmp.ge.f32.partialorder %v839, 0.0
    %vm844 = vcmp.ge.f32.partialorder %v840, 0.0
    %vm845 = vcmp.ge.f32.partialorder %v841, 0.0
    %vm846 = vcmp.ge.f32.partialorder %v842, 0.0
    %v847 = vmul.f32 %v839, 0.1
    %v848 = vmul.f32 %v840, 0.1
    %v849 = vmul.f32 %v841, 0.1
    %v850 = vmul.f32 %v842, 0.1
    %v851 = vsel %vm843, %v839, %v847
    %v852 = vsel %vm844, %v840, %v848
    %v853 = vsel %vm845, %v841, %v849
    %v854 = vsel %vm846, %v842, %v850
    %v855 = vmul.f32 %v851, %v69
    %v856 = vmul.f32 %v852, %v70
    %v857 = vmul.f32 %v853, %v71
    %v858 = vmul.f32 %v854, %v72
    %s859 = scalar_lea.vmem [#allocation7], 8
    %v860 = vld [vmem:[%s859] sm:$0xff]
    %861 = vrot.lane.b32.xlu0 %v855, 42
    %v862 = vpop.permute.xlu0 %861
    %863 = vrot.lane.b32.xlu0 %v856, 42
    %v864 = vpop.permute.xlu0 %863
    %865 = vrot.lane.b32.xlu0 %v857, 42
    %v866 = vpop.permute.xlu0 %865
    %867 = vrot.lane.b32.xlu0 %v858, 42
    %v868 = vpop.permute.xlu0 %867
    %vm869 = vcmp.lt.s32.totalorder %v87, 42
    %v870 = vsel %vm869, %v866, %v868
    %v871 = vsel %vm869, %v864, %v866
    %v872 = vsel %vm869, %v862, %v864
    %v873 = vsel %vm869, %v868, %v862
    %s874 = scalar_lea.vmem [#allocation5], 288
    %v875 = vld [vmem:[%s874] sm:$0xff]
    %v876 = vmul.f32 %v875, %v873
    %v877 = vmul.f32 %v875, %v872
    %v878 = vmul.f32 %v875, %v871
    %v879 = vmul.f32 %v875, %v870
    %v880 = vadd.f32 %v860, %v876
    %v881 = vadd.f32 %v860, %v877
    %v882 = vadd.f32 %v860, %v878
    %v883 = vadd.f32 %v860, %v879
    %884 = vrot.lane.b32.xlu0 %v855, 40
    %v885 = vpop.permute.xlu0 %884
    %886 = vrot.lane.b32.xlu0 %v856, 40
    %v887 = vpop.permute.xlu0 %886
    %888 = vrot.lane.b32.xlu0 %v857, 40
    %v889 = vpop.permute.xlu0 %888
    %890 = vrot.lane.b32.xlu0 %v858, 40
    %v891 = vpop.permute.xlu0 %890
    %vm892 = vcmp.lt.s32.totalorder %v87, 40
    %v893 = vsel %vm892, %v889, %v891
    %v894 = vsel %vm892, %v887, %v889
    %v895 = vsel %vm892, %v885, %v887
    %v896 = vsel %vm892, %v891, %v885
    %s897 = scalar_lea.vmem [#allocation5], 296
    %v898 = vld [vmem:[%s897] sm:$0xff]
    %v899 = vmul.f32 %v898, %v896
    %v900 = vmul.f32 %v898, %v895
    %v901 = vmul.f32 %v898, %v894
    %v902 = vmul.f32 %v898, %v893
    %v903 = vadd.f32 %v880, %v899
    %v904 = vadd.f32 %v881, %v900
    %v905 = vadd.f32 %v882, %v901
    %v906 = vadd.f32 %v883, %v902
    %907 = vrot.lane.b32.xlu0 %v855, 38
    %v908 = vpop.permute.xlu0 %907
    %909 = vrot.lane.b32.xlu0 %v856, 38
    %v910 = vpop.permute.xlu0 %909
    %911 = vrot.lane.b32.xlu0 %v857, 38
    %v912 = vpop.permute.xlu0 %911
    %913 = vrot.lane.b32.xlu0 %v858, 38
    %v914 = vpop.permute.xlu0 %913
    %vm915 = vcmp.lt.s32.totalorder %v87, 38
    %v916 = vsel %vm915, %v912, %v914
    %v917 = vsel %vm915, %v910, %v912
    %v918 = vsel %vm915, %v908, %v910
    %v919 = vsel %vm915, %v914, %v908
    %s920 = scalar_lea.vmem [#allocation5], 304
    %v921 = vld [vmem:[%s920] sm:$0xff]
    %v922 = vmul.f32 %v921, %v919
    %v923 = vmul.f32 %v921, %v918
    %v924 = vmul.f32 %v921, %v917
    %v925 = vmul.f32 %v921, %v916
    %v926 = vadd.f32 %v903, %v922
    %v927 = vadd.f32 %v904, %v923
    %v928 = vadd.f32 %v905, %v924
    %v929 = vadd.f32 %v906, %v925
    %930 = vrot.lane.b32.xlu0 %v855, 2
    %v931 = vpop.permute.xlu0 %930
    %932 = vrot.lane.b32.xlu0 %v856, 2
    %v933 = vpop.permute.xlu0 %932
    %934 = vrot.lane.b32.xlu0 %v857, 2
    %v935 = vpop.permute.xlu0 %934
    %936 = vrot.lane.b32.xlu0 %v858, 2
    %v937 = vpop.permute.xlu0 %936
    %vm938 = vcmp.lt.s32.totalorder %v87, 2
    %v939 = vsel %vm938, %v935, %v937
    %v940 = vsel %vm938, %v933, %v935
    %v941 = vsel %vm938, %v931, %v933
    %v942 = vsel %vm938, %v937, %v931
    %s943 = scalar_lea.vmem [#allocation5], 312
    %v944 = vld [vmem:[%s943] sm:$0xff]
    %v945 = vmul.f32 %v944, %v942
    %v946 = vmul.f32 %v944, %v941
    %v947 = vmul.f32 %v944, %v940
    %v948 = vmul.f32 %v944, %v939
    %v949 = vadd.f32 %v926, %v945
    %v950 = vadd.f32 %v927, %v946
    %v951 = vadd.f32 %v928, %v947
    %v952 = vadd.f32 %v929, %v948
    %s953 = scalar_lea.vmem [#allocation5], 320
    %v954 = vld [vmem:[%s953] sm:$0xff]
    %v955 = vmul.f32 %v954, %v855
    %v956 = vmul.f32 %v954, %v856
    %v957 = vmul.f32 %v954, %v857
    %v958 = vmul.f32 %v954, %v858
    %v959 = vadd.f32 %v949, %v955
    %v960 = vadd.f32 %v950, %v956
    %v961 = vadd.f32 %v951, %v957
    %v962 = vadd.f32 %v952, %v958
    %963 = vrot.lane.b32.xlu0 %v855, 126
    %v964 = vpop.permute.xlu0 %963
    %965 = vrot.lane.b32.xlu0 %v856, 126
    %v966 = vpop.permute.xlu0 %965
    %967 = vrot.lane.b32.xlu0 %v857, 126
    %v968 = vpop.permute.xlu0 %967
    %969 = vrot.lane.b32.xlu0 %v858, 126
    %v970 = vpop.permute.xlu0 %969
    %vm971 = vcmp.lt.s32.totalorder %v87, 126
    %v972 = vsel %vm971, %v968, %v970
    %v973 = vsel %vm971, %v966, %v968
    %v974 = vsel %vm971, %v964, %v966
    %v975 = vsel %vm971, %v970, %v964
    %s976 = scalar_lea.vmem [#allocation5], 328
    %v977 = vld [vmem:[%s976] sm:$0xff]
    %v978 = vmul.f32 %v977, %v974
    %v979 = vmul.f32 %v977, %v973
    %v980 = vmul.f32 %v977, %v972
    %v981 = vmul.f32 %v977, %v975
    %v982 = vadd.f32 %v959, %v978
    %v983 = vadd.f32 %v960, %v979
    %v984 = vadd.f32 %v961, %v980
    %v985 = vadd.f32 %v962, %v981
    %986 = vrot.lane.b32.xlu0 %v855, 90
    %v987 = vpop.permute.xlu0 %986
    %988 = vrot.lane.b32.xlu0 %v856, 90
    %v989 = vpop.permute.xlu0 %988
    %990 = vrot.lane.b32.xlu0 %v857, 90
    %v991 = vpop.permute.xlu0 %990
    %992 = vrot.lane.b32.xlu0 %v858, 90
    %v993 = vpop.permute.xlu0 %992
    %vm994 = vcmp.lt.s32.totalorder %v87, 90
    %v995 = vsel %vm994, %v991, %v993
    %v996 = vsel %vm994, %v989, %v991
    %v997 = vsel %vm994, %v987, %v989
    %v998 = vsel %vm994, %v993, %v987
    %s999 = scalar_lea.vmem [#allocation5], 336
    %v1000 = vld [vmem:[%s999] sm:$0xff]
    %v1001 = vmul.f32 %v1000, %v997
    %v1002 = vmul.f32 %v1000, %v996
    %v1003 = vmul.f32 %v1000, %v995
    %v1004 = vmul.f32 %v1000, %v998
    %v1005 = vadd.f32 %v982, %v1001
    %v1006 = vadd.f32 %v983, %v1002
    %v1007 = vadd.f32 %v984, %v1003
    %v1008 = vadd.f32 %v985, %v1004
    %1009 = vrot.lane.b32.xlu0 %v855, 88
    %v1010 = vpop.permute.xlu0 %1009
    %1011 = vrot.lane.b32.xlu0 %v856, 88
    %v1012 = vpop.permute.xlu0 %1011
    %1013 = vrot.lane.b32.xlu0 %v857, 88
    %v1014 = vpop.permute.xlu0 %1013
    %1015 = vrot.lane.b32.xlu0 %v858, 88
    %v1016 = vpop.permute.xlu0 %1015
    %vm1017 = vcmp.lt.s32.totalorder %v87, 88
    %v1018 = vsel %vm1017, %v1014, %v1016
    %v1019 = vsel %vm1017, %v1012, %v1014
    %v1020 = vsel %vm1017, %v1010, %v1012
    %v1021 = vsel %vm1017, %v1016, %v1010
    %s1022 = scalar_lea.vmem [#allocation5], 344
    %v1023 = vld [vmem:[%s1022] sm:$0xff]
    %v1024 = vmul.f32 %v1023, %v1020
    %v1025 = vmul.f32 %v1023, %v1019
    %v1026 = vmul.f32 %v1023, %v1018
    %v1027 = vmul.f32 %v1023, %v1021
    %v1028 = vadd.f32 %v1005, %v1024
    %v1029 = vadd.f32 %v1006, %v1025
    %v1030 = vadd.f32 %v1007, %v1026
    %v1031 = vadd.f32 %v1008, %v1027
    %1032 = vrot.lane.b32.xlu0 %v855, 86
    %v1033 = vpop.permute.xlu0 %1032
    %1034 = vrot.lane.b32.xlu0 %v856, 86
    %v1035 = vpop.permute.xlu0 %1034
    %1036 = vrot.lane.b32.xlu0 %v857, 86
    %v1037 = vpop.permute.xlu0 %1036
    %1038 = vrot.lane.b32.xlu0 %v858, 86
    %v1039 = vpop.permute.xlu0 %1038
    %vm1040 = vcmp.lt.s32.totalorder %v87, 86
    %v1041 = vsel %vm1040, %v1037, %v1039
    %v1042 = vsel %vm1040, %v1035, %v1037
    %v1043 = vsel %vm1040, %v1033, %v1035
    %v1044 = vsel %vm1040, %v1039, %v1033
    %s1045 = scalar_lea.vmem [#allocation5], 352
    %v1046 = vld [vmem:[%s1045] sm:$0xff]
    %v1047 = vmul.f32 %v1046, %v1043
    %v1048 = vmul.f32 %v1046, %v1042
    %v1049 = vmul.f32 %v1046, %v1041
    %v1050 = vmul.f32 %v1046, %v1044
    %v1051 = vadd.f32 %v1028, %v1047
    %v1052 = vadd.f32 %v1029, %v1048
    %v1053 = vadd.f32 %v1030, %v1049
    %v1054 = vadd.f32 %v1031, %v1050
    %v1055 = vrot.slane %v855, 2
    %v1056 = vrot.slane %v856, 2
    %v1057 = vrot.slane %v857, 2
    %v1058 = vrot.slane %v858, 2
    %1059 = vrot.lane.b32.xlu0 %v1055, 42
    %v1060 = vpop.permute.xlu0 %1059
    %1061 = vrot.lane.b32.xlu0 %v1056, 42
    %v1062 = vpop.permute.xlu0 %1061
    %1063 = vrot.lane.b32.xlu0 %v1057, 42
    %v1064 = vpop.permute.xlu0 %1063
    %1065 = vrot.lane.b32.xlu0 %v1058, 42
    %v1066 = vpop.permute.xlu0 %1065
    %v1067 = vsel %vm869, %v1064, %v1066
    %v1068 = vsel %vm869, %v1062, %v1064
    %v1069 = vsel %vm869, %v1060, %v1062
    %v1070 = vsel %vm869, %v1066, %v1060
    %s1071 = scalar_lea.vmem [#allocation5], 360
    %v1072 = vld [vmem:[%s1071] sm:$0xff]
    %v1073 = vmul.f32 %v1072, %v1070
    %v1074 = vmul.f32 %v1072, %v1069
    %v1075 = vmul.f32 %v1072, %v1068
    %v1076 = vmul.f32 %v1072, %v1067
    %v1077 = vadd.f32 %v1051, %v1073
    %v1078 = vadd.f32 %v1052, %v1074
    %v1079 = vadd.f32 %v1053, %v1075
    %v1080 = vadd.f32 %v1054, %v1076
    %1081 = vrot.lane.b32.xlu0 %v1055, 40
    %v1082 = vpop.permute.xlu0 %1081
    %1083 = vrot.lane.b32.xlu0 %v1056, 40
    %v1084 = vpop.permute.xlu0 %1083
    %1085 = vrot.lane.b32.xlu0 %v1057, 40
    %v1086 = vpop.permute.xlu0 %1085
    %1087 = vrot.lane.b32.xlu0 %v1058, 40
    %v1088 = vpop.permute.xlu0 %1087
    %v1089 = vsel %vm892, %v1086, %v1088
    %v1090 = vsel %vm892, %v1084, %v1086
    %v1091 = vsel %vm892, %v1082, %v1084
    %v1092 = vsel %vm892, %v1088, %v1082
    %s1093 = scalar_lea.vmem [#allocation5], 368
    %v1094 = vld [vmem:[%s1093] sm:$0xff]
    %v1095 = vmul.f32 %v1094, %v1092
    %v1096 = vmul.f32 %v1094, %v1091
    %v1097 = vmul.f32 %v1094, %v1090
    %v1098 = vmul.f32 %v1094, %v1089
    %v1099 = vadd.f32 %v1077, %v1095
    %v1100 = vadd.f32 %v1078, %v1096
    %v1101 = vadd.f32 %v1079, %v1097
    %v1102 = vadd.f32 %v1080, %v1098
    %1103 = vrot.lane.b32.xlu0 %v1055, 38
    %v1104 = vpop.permute.xlu0 %1103
    %1105 = vrot.lane.b32.xlu0 %v1056, 38
    %v1106 = vpop.permute.xlu0 %1105
    %1107 = vrot.lane.b32.xlu0 %v1057, 38
    %v1108 = vpop.permute.xlu0 %1107
    %1109 = vrot.lane.b32.xlu0 %v1058, 38
    %v1110 = vpop.permute.xlu0 %1109
    %v1111 = vsel %vm915, %v1108, %v1110
    %v1112 = vsel %vm915, %v1106, %v1108
    %v1113 = vsel %vm915, %v1104, %v1106
    %v1114 = vsel %vm915, %v1110, %v1104
    %s1115 = scalar_lea.vmem [#allocation5], 376
    %v1116 = vld [vmem:[%s1115] sm:$0xff]
    %v1117 = vmul.f32 %v1116, %v1114
    %v1118 = vmul.f32 %v1116, %v1113
    %v1119 = vmul.f32 %v1116, %v1112
    %v1120 = vmul.f32 %v1116, %v1111
    %v1121 = vadd.f32 %v1099, %v1117
    %v1122 = vadd.f32 %v1100, %v1118
    %v1123 = vadd.f32 %v1101, %v1119
    %v1124 = vadd.f32 %v1102, %v1120
    %1125 = vrot.lane.b32.xlu0 %v1055, 2
    %v1126 = vpop.permute.xlu0 %1125
    %1127 = vrot.lane.b32.xlu0 %v1056, 2
    %v1128 = vpop.permute.xlu0 %1127
    %1129 = vrot.lane.b32.xlu0 %v1057, 2
    %v1130 = vpop.permute.xlu0 %1129
    %1131 = vrot.lane.b32.xlu0 %v1058, 2
    %v1132 = vpop.permute.xlu0 %1131
    %v1133 = vsel %vm938, %v1130, %v1132
    %v1134 = vsel %vm938, %v1128, %v1130
    %v1135 = vsel %vm938, %v1126, %v1128
    %v1136 = vsel %vm938, %v1132, %v1126
    %s1137 = scalar_lea.vmem [#allocation5], 384
    %v1138 = vld [vmem:[%s1137] sm:$0xff]
    %v1139 = vmul.f32 %v1138, %v1136
    %v1140 = vmul.f32 %v1138, %v1135
    %v1141 = vmul.f32 %v1138, %v1134
    %v1142 = vmul.f32 %v1138, %v1133
    %v1143 = vadd.f32 %v1121, %v1139
    %v1144 = vadd.f32 %v1122, %v1140
    %v1145 = vadd.f32 %v1123, %v1141
    %v1146 = vadd.f32 %v1124, %v1142
    %s1147 = scalar_lea.vmem [#allocation5], 392
    %v1148 = vld [vmem:[%s1147] sm:$0xff]
    %v1149 = vmul.f32 %v1148, %v1055
    %v1150 = vmul.f32 %v1148, %v1056
    %v1151 = vmul.f32 %v1148, %v1057
    %v1152 = vmul.f32 %v1148, %v1058
    %v1153 = vadd.f32 %v1143, %v1149
    %v1154 = vadd.f32 %v1144, %v1150
    %v1155 = vadd.f32 %v1145, %v1151
    %v1156 = vadd.f32 %v1146, %v1152
    %1157 = vrot.lane.b32.xlu0 %v1055, 126
    %v1158 = vpop.permute.xlu0 %1157
    %1159 = vrot.lane.b32.xlu0 %v1056, 126
    %v1160 = vpop.permute.xlu0 %1159
    %1161 = vrot.lane.b32.xlu0 %v1057, 126
    %v1162 = vpop.permute.xlu0 %1161
    %1163 = vrot.lane.b32.xlu0 %v1058, 126
    %v1164 = vpop.permute.xlu0 %1163
    %v1165 = vsel %vm971, %v1162, %v1164
    %v1166 = vsel %vm971, %v1160, %v1162
    %v1167 = vsel %vm971, %v1158, %v1160
    %v1168 = vsel %vm971, %v1164, %v1158
    %s1169 = scalar_lea.vmem [#allocation5], 400
    %v1170 = vld [vmem:[%s1169] sm:$0xff]
    %v1171 = vmul.f32 %v1170, %v1167
    %v1172 = vmul.f32 %v1170, %v1166
    %v1173 = vmul.f32 %v1170, %v1165
    %v1174 = vmul.f32 %v1170, %v1168
    %v1175 = vadd.f32 %v1153, %v1171
    %v1176 = vadd.f32 %v1154, %v1172
    %v1177 = vadd.f32 %v1155, %v1173
    %v1178 = vadd.f32 %v1156, %v1174
    %1179 = vrot.lane.b32.xlu0 %v1055, 90
    %v1180 = vpop.permute.xlu0 %1179
    %1181 = vrot.lane.b32.xlu0 %v1056, 90
    %v1182 = vpop.permute.xlu0 %1181
    %1183 = vrot.lane.b32.xlu0 %v1057, 90
    %v1184 = vpop.permute.xlu0 %1183
    %1185 = vrot.lane.b32.xlu0 %v1058, 90
    %v1186 = vpop.permute.xlu0 %1185
    %v1187 = vsel %vm994, %v1184, %v1186
    %v1188 = vsel %vm994, %v1182, %v1184
    %v1189 = vsel %vm994, %v1180, %v1182
    %v1190 = vsel %vm994, %v1186, %v1180
    %s1191 = scalar_lea.vmem [#allocation5], 408
    %v1192 = vld [vmem:[%s1191] sm:$0xff]
    %v1193 = vmul.f32 %v1192, %v1189
    %v1194 = vmul.f32 %v1192, %v1188
    %v1195 = vmul.f32 %v1192, %v1187
    %v1196 = vmul.f32 %v1192, %v1190
    %v1197 = vadd.f32 %v1175, %v1193
    %v1198 = vadd.f32 %v1176, %v1194
    %v1199 = vadd.f32 %v1177, %v1195
    %v1200 = vadd.f32 %v1178, %v1196
    %1201 = vrot.lane.b32.xlu0 %v1055, 88
    %v1202 = vpop.permute.xlu0 %1201
    %1203 = vrot.lane.b32.xlu0 %v1056, 88
    %v1204 = vpop.permute.xlu0 %1203
    %1205 = vrot.lane.b32.xlu0 %v1057, 88
    %v1206 = vpop.permute.xlu0 %1205
    %1207 = vrot.lane.b32.xlu0 %v1058, 88
    %v1208 = vpop.permute.xlu0 %1207
    %v1209 = vsel %vm1017, %v1206, %v1208
    %v1210 = vsel %vm1017, %v1204, %v1206
    %v1211 = vsel %vm1017, %v1202, %v1204
    %v1212 = vsel %vm1017, %v1208, %v1202
    %s1213 = scalar_lea.vmem [#allocation5], 416
    %v1214 = vld [vmem:[%s1213] sm:$0xff]
    %v1215 = vmul.f32 %v1214, %v1211
    %v1216 = vmul.f32 %v1214, %v1210
    %v1217 = vmul.f32 %v1214, %v1209
    %v1218 = vmul.f32 %v1214, %v1212
    %v1219 = vadd.f32 %v1197, %v1215
    %v1220 = vadd.f32 %v1198, %v1216
    %v1221 = vadd.f32 %v1199, %v1217
    %v1222 = vadd.f32 %v1200, %v1218
    %1223 = vrot.lane.b32.xlu0 %v1055, 86
    %v1224 = vpop.permute.xlu0 %1223
    %1225 = vrot.lane.b32.xlu0 %v1056, 86
    %v1226 = vpop.permute.xlu0 %1225
    %1227 = vrot.lane.b32.xlu0 %v1057, 86
    %v1228 = vpop.permute.xlu0 %1227
    %1229 = vrot.lane.b32.xlu0 %v1058, 86
    %v1230 = vpop.permute.xlu0 %1229
    %v1231 = vsel %vm1040, %v1228, %v1230
    %v1232 = vsel %vm1040, %v1226, %v1228
    %v1233 = vsel %vm1040, %v1224, %v1226
    %v1234 = vsel %vm1040, %v1230, %v1224
    %s1235 = scalar_lea.vmem [#allocation5], 424
    %v1236 = vld [vmem:[%s1235] sm:$0xff]
    %v1237 = vmul.f32 %v1236, %v1233
    %v1238 = vmul.f32 %v1236, %v1232
    %v1239 = vmul.f32 %v1236, %v1231
    %v1240 = vmul.f32 %v1236, %v1234
    %v1241 = vadd.f32 %v1219, %v1237
    %v1242 = vadd.f32 %v1220, %v1238
    %v1243 = vadd.f32 %v1221, %v1239
    %v1244 = vadd.f32 %v1222, %v1240
    %v1245 = vrot.slane %v855, 4
    %v1246 = vrot.slane %v856, 4
    %v1247 = vrot.slane %v857, 4
    %v1248 = vrot.slane %v858, 4
    %1249 = vrot.lane.b32.xlu0 %v1245, 42
    %v1250 = vpop.permute.xlu0 %1249
    %1251 = vrot.lane.b32.xlu0 %v1246, 42
    %v1252 = vpop.permute.xlu0 %1251
    %1253 = vrot.lane.b32.xlu0 %v1247, 42
    %v1254 = vpop.permute.xlu0 %1253
    %1255 = vrot.lane.b32.xlu0 %v1248, 42
    %v1256 = vpop.permute.xlu0 %1255
    %v1257 = vsel %vm869, %v1254, %v1256
    %v1258 = vsel %vm869, %v1252, %v1254
    %v1259 = vsel %vm869, %v1250, %v1252
    %v1260 = vsel %vm869, %v1256, %v1250
    %s1261 = scalar_lea.vmem [#allocation5], 432
    %v1262 = vld [vmem:[%s1261] sm:$0xff]
    %v1263 = vmul.f32 %v1262, %v1260
    %v1264 = vmul.f32 %v1262, %v1259
    %v1265 = vmul.f32 %v1262, %v1258
    %v1266 = vmul.f32 %v1262, %v1257
    %v1267 = vadd.f32 %v1241, %v1263
    %v1268 = vadd.f32 %v1242, %v1264
    %v1269 = vadd.f32 %v1243, %v1265
    %v1270 = vadd.f32 %v1244, %v1266
    %1271 = vrot.lane.b32.xlu0 %v1245, 40
    %v1272 = vpop.permute.xlu0 %1271
    %1273 = vrot.lane.b32.xlu0 %v1246, 40
    %v1274 = vpop.permute.xlu0 %1273
    %1275 = vrot.lane.b32.xlu0 %v1247, 40
    %v1276 = vpop.permute.xlu0 %1275
    %1277 = vrot.lane.b32.xlu0 %v1248, 40
    %v1278 = vpop.permute.xlu0 %1277
    %v1279 = vsel %vm892, %v1276, %v1278
    %v1280 = vsel %vm892, %v1274, %v1276
    %v1281 = vsel %vm892, %v1272, %v1274
    %v1282 = vsel %vm892, %v1278, %v1272
    %s1283 = scalar_lea.vmem [#allocation5], 440
    %v1284 = vld [vmem:[%s1283] sm:$0xff]
    %v1285 = vmul.f32 %v1284, %v1282
    %v1286 = vmul.f32 %v1284, %v1281
    %v1287 = vmul.f32 %v1284, %v1280
    %v1288 = vmul.f32 %v1284, %v1279
    %v1289 = vadd.f32 %v1267, %v1285
    %v1290 = vadd.f32 %v1268, %v1286
    %v1291 = vadd.f32 %v1269, %v1287
    %v1292 = vadd.f32 %v1270, %v1288
    %1293 = vrot.lane.b32.xlu0 %v1245, 38
    %v1294 = vpop.permute.xlu0 %1293
    %1295 = vrot.lane.b32.xlu0 %v1246, 38
    %v1296 = vpop.permute.xlu0 %1295
    %1297 = vrot.lane.b32.xlu0 %v1247, 38
    %v1298 = vpop.permute.xlu0 %1297
    %1299 = vrot.lane.b32.xlu0 %v1248, 38
    %v1300 = vpop.permute.xlu0 %1299
    %v1301 = vsel %vm915, %v1298, %v1300
    %v1302 = vsel %vm915, %v1296, %v1298
    %v1303 = vsel %vm915, %v1294, %v1296
    %v1304 = vsel %vm915, %v1300, %v1294
    %s1305 = scalar_lea.vmem [#allocation5], 448
    %v1306 = vld [vmem:[%s1305] sm:$0xff]
    %v1307 = vmul.f32 %v1306, %v1304
    %v1308 = vmul.f32 %v1306, %v1303
    %v1309 = vmul.f32 %v1306, %v1302
    %v1310 = vmul.f32 %v1306, %v1301
    %v1311 = vadd.f32 %v1289, %v1307
    %v1312 = vadd.f32 %v1290, %v1308
    %v1313 = vadd.f32 %v1291, %v1309
    %v1314 = vadd.f32 %v1292, %v1310
    %1315 = vrot.lane.b32.xlu0 %v1245, 2
    %v1316 = vpop.permute.xlu0 %1315
    %1317 = vrot.lane.b32.xlu0 %v1246, 2
    %v1318 = vpop.permute.xlu0 %1317
    %1319 = vrot.lane.b32.xlu0 %v1247, 2
    %v1320 = vpop.permute.xlu0 %1319
    %1321 = vrot.lane.b32.xlu0 %v1248, 2
    %v1322 = vpop.permute.xlu0 %1321
    %v1323 = vsel %vm938, %v1320, %v1322
    %v1324 = vsel %vm938, %v1318, %v1320
    %v1325 = vsel %vm938, %v1316, %v1318
    %v1326 = vsel %vm938, %v1322, %v1316
    %s1327 = scalar_lea.vmem [#allocation5], 456
    %v1328 = vld [vmem:[%s1327] sm:$0xff]
    %v1329 = vmul.f32 %v1328, %v1326
    %v1330 = vmul.f32 %v1328, %v1325
    %v1331 = vmul.f32 %v1328, %v1324
    %v1332 = vmul.f32 %v1328, %v1323
    %v1333 = vadd.f32 %v1311, %v1329
    %v1334 = vadd.f32 %v1312, %v1330
    %v1335 = vadd.f32 %v1313, %v1331
    %v1336 = vadd.f32 %v1314, %v1332
    %s1337 = scalar_lea.vmem [#allocation5], 464
    %v1338 = vld [vmem:[%s1337] sm:$0xff]
    %v1339 = vmul.f32 %v1338, %v1245
    %v1340 = vmul.f32 %v1338, %v1246
    %v1341 = vmul.f32 %v1338, %v1247
    %v1342 = vmul.f32 %v1338, %v1248
    %v1343 = vadd.f32 %v1333, %v1339
    %v1344 = vadd.f32 %v1334, %v1340
    %v1345 = vadd.f32 %v1335, %v1341
    %v1346 = vadd.f32 %v1336, %v1342
    %1347 = vrot.lane.b32.xlu0 %v1245, 126
    %v1348 = vpop.permute.xlu0 %1347
    %1349 = vrot.lane.b32.xlu0 %v1246, 126
    %v1350 = vpop.permute.xlu0 %1349
    %1351 = vrot.lane.b32.xlu0 %v1247, 126
    %v1352 = vpop.permute.xlu0 %1351
    %1353 = vrot.lane.b32.xlu0 %v1248, 126
    %v1354 = vpop.permute.xlu0 %1353
    %v1355 = vsel %vm971, %v1352, %v1354
    %v1356 = vsel %vm971, %v1350, %v1352
    %v1357 = vsel %vm971, %v1348, %v1350
    %v1358 = vsel %vm971, %v1354, %v1348
    %s1359 = scalar_lea.vmem [#allocation5], 472
    %v1360 = vld [vmem:[%s1359] sm:$0xff]
    %v1361 = vmul.f32 %v1360, %v1357
    %v1362 = vmul.f32 %v1360, %v1356
    %v1363 = vmul.f32 %v1360, %v1355
    %v1364 = vmul.f32 %v1360, %v1358
    %v1365 = vadd.f32 %v1343, %v1361
    %v1366 = vadd.f32 %v1344, %v1362
    %v1367 = vadd.f32 %v1345, %v1363
    %v1368 = vadd.f32 %v1346, %v1364
    %1369 = vrot.lane.b32.xlu0 %v1245, 90
    %v1370 = vpop.permute.xlu0 %1369
    %1371 = vrot.lane.b32.xlu0 %v1246, 90
    %v1372 = vpop.permute.xlu0 %1371
    %1373 = vrot.lane.b32.xlu0 %v1247, 90
    %v1374 = vpop.permute.xlu0 %1373
    %1375 = vrot.lane.b32.xlu0 %v1248, 90
    %v1376 = vpop.permute.xlu0 %1375
    %v1377 = vsel %vm994, %v1374, %v1376
    %v1378 = vsel %vm994, %v1372, %v1374
    %v1379 = vsel %vm994, %v1370, %v1372
    %v1380 = vsel %vm994, %v1376, %v1370
    %s1381 = scalar_lea.vmem [#allocation5], 480
    %v1382 = vld [vmem:[%s1381] sm:$0xff]
    %v1383 = vmul.f32 %v1382, %v1379
    %v1384 = vmul.f32 %v1382, %v1378
    %v1385 = vmul.f32 %v1382, %v1377
    %v1386 = vmul.f32 %v1382, %v1380
    %v1387 = vadd.f32 %v1365, %v1383
    %v1388 = vadd.f32 %v1366, %v1384
    %v1389 = vadd.f32 %v1367, %v1385
    %v1390 = vadd.f32 %v1368, %v1386
    %1391 = vrot.lane.b32.xlu0 %v1245, 88
    %v1392 = vpop.permute.xlu0 %1391
    %1393 = vrot.lane.b32.xlu0 %v1246, 88
    %v1394 = vpop.permute.xlu0 %1393
    %1395 = vrot.lane.b32.xlu0 %v1247, 88
    %v1396 = vpop.permute.xlu0 %1395
    %1397 = vrot.lane.b32.xlu0 %v1248, 88
    %v1398 = vpop.permute.xlu0 %1397
    %v1399 = vsel %vm1017, %v1396, %v1398
    %v1400 = vsel %vm1017, %v1394, %v1396
    %v1401 = vsel %vm1017, %v1392, %v1394
    %v1402 = vsel %vm1017, %v1398, %v1392
    %s1403 = scalar_lea.vmem [#allocation5], 488
    %v1404 = vld [vmem:[%s1403] sm:$0xff]
    %v1405 = vmul.f32 %v1404, %v1401
    %v1406 = vmul.f32 %v1404, %v1400
    %v1407 = vmul.f32 %v1404, %v1399
    %v1408 = vmul.f32 %v1404, %v1402
    %v1409 = vadd.f32 %v1387, %v1405
    %v1410 = vadd.f32 %v1388, %v1406
    %v1411 = vadd.f32 %v1389, %v1407
    %v1412 = vadd.f32 %v1390, %v1408
    %1413 = vrot.lane.b32.xlu0 %v1245, 86
    %v1414 = vpop.permute.xlu0 %1413
    %1415 = vrot.lane.b32.xlu0 %v1246, 86
    %v1416 = vpop.permute.xlu0 %1415
    %1417 = vrot.lane.b32.xlu0 %v1247, 86
    %v1418 = vpop.permute.xlu0 %1417
    %1419 = vrot.lane.b32.xlu0 %v1248, 86
    %v1420 = vpop.permute.xlu0 %1419
    %v1421 = vsel %vm1040, %v1418, %v1420
    %v1422 = vsel %vm1040, %v1416, %v1418
    %v1423 = vsel %vm1040, %v1414, %v1416
    %v1424 = vsel %vm1040, %v1420, %v1414
    %s1425 = scalar_lea.vmem [#allocation5], 496
    %v1426 = vld [vmem:[%s1425] sm:$0xff]
    %v1427 = vmul.f32 %v1426, %v1423
    %v1428 = vmul.f32 %v1426, %v1422
    %v1429 = vmul.f32 %v1426, %v1421
    %v1430 = vmul.f32 %v1426, %v1424
    %v1431 = vadd.f32 %v1409, %v1427
    %v1432 = vadd.f32 %v1410, %v1428
    %v1433 = vadd.f32 %v1411, %v1429
    %v1434 = vadd.f32 %v1412, %v1430
    %v1435 = vrot.slane %v855, 6
    %v1436 = vrot.slane %v856, 6
    %v1437 = vrot.slane %v857, 6
    %v1438 = vrot.slane %v858, 6
    %1439 = vrot.lane.b32.xlu0 %v1435, 42
    %v1440 = vpop.permute.xlu0 %1439
    %1441 = vrot.lane.b32.xlu0 %v1436, 42
    %v1442 = vpop.permute.xlu0 %1441
    %1443 = vrot.lane.b32.xlu0 %v1437, 42
    %v1444 = vpop.permute.xlu0 %1443
    %1445 = vrot.lane.b32.xlu0 %v1438, 42
    %v1446 = vpop.permute.xlu0 %1445
    %v1447 = vsel %vm869, %v1444, %v1446
    %v1448 = vsel %vm869, %v1442, %v1444
    %v1449 = vsel %vm869, %v1440, %v1442
    %v1450 = vsel %vm869, %v1446, %v1440
    %s1451 = scalar_lea.vmem [#allocation5], 504
    %v1452 = vld [vmem:[%s1451] sm:$0xff]
    %v1453 = vmul.f32 %v1452, %v1450
    %v1454 = vmul.f32 %v1452, %v1449
    %v1455 = vmul.f32 %v1452, %v1448
    %v1456 = vmul.f32 %v1452, %v1447
    %v1457 = vadd.f32 %v1431, %v1453
    %v1458 = vadd.f32 %v1432, %v1454
    %v1459 = vadd.f32 %v1433, %v1455
    %v1460 = vadd.f32 %v1434, %v1456
    %1461 = vrot.lane.b32.xlu0 %v1435, 40
    %v1462 = vpop.permute.xlu0 %1461
    %1463 = vrot.lane.b32.xlu0 %v1436, 40
    %v1464 = vpop.permute.xlu0 %1463
    %1465 = vrot.lane.b32.xlu0 %v1437, 40
    %v1466 = vpop.permute.xlu0 %1465
    %1467 = vrot.lane.b32.xlu0 %v1438, 40
    %v1468 = vpop.permute.xlu0 %1467
    %v1469 = vsel %vm892, %v1466, %v1468
    %v1470 = vsel %vm892, %v1464, %v1466
    %v1471 = vsel %vm892, %v1462, %v1464
    %v1472 = vsel %vm892, %v1468, %v1462
    %s1473 = scalar_lea.vmem [#allocation5], 512
    %v1474 = vld [vmem:[%s1473] sm:$0xff]
    %v1475 = vmul.f32 %v1474, %v1472
    %v1476 = vmul.f32 %v1474, %v1471
    %v1477 = vmul.f32 %v1474, %v1470
    %v1478 = vmul.f32 %v1474, %v1469
    %v1479 = vadd.f32 %v1457, %v1475
    %v1480 = vadd.f32 %v1458, %v1476
    %v1481 = vadd.f32 %v1459, %v1477
    %v1482 = vadd.f32 %v1460, %v1478
    %1483 = vrot.lane.b32.xlu0 %v1435, 38
    %v1484 = vpop.permute.xlu0 %1483
    %1485 = vrot.lane.b32.xlu0 %v1436, 38
    %v1486 = vpop.permute.xlu0 %1485
    %1487 = vrot.lane.b32.xlu0 %v1437, 38
    %v1488 = vpop.permute.xlu0 %1487
    %1489 = vrot.lane.b32.xlu0 %v1438, 38
    %v1490 = vpop.permute.xlu0 %1489
    %v1491 = vsel %vm915, %v1488, %v1490
    %v1492 = vsel %vm915, %v1486, %v1488
    %v1493 = vsel %vm915, %v1484, %v1486
    %v1494 = vsel %vm915, %v1490, %v1484
    %s1495 = scalar_lea.vmem [#allocation5], 520
    %v1496 = vld [vmem:[%s1495] sm:$0xff]
    %v1497 = vmul.f32 %v1496, %v1494
    %v1498 = vmul.f32 %v1496, %v1493
    %v1499 = vmul.f32 %v1496, %v1492
    %v1500 = vmul.f32 %v1496, %v1491
    %v1501 = vadd.f32 %v1479, %v1497
    %v1502 = vadd.f32 %v1480, %v1498
    %v1503 = vadd.f32 %v1481, %v1499
    %v1504 = vadd.f32 %v1482, %v1500
    %1505 = vrot.lane.b32.xlu0 %v1435, 2
    %v1506 = vpop.permute.xlu0 %1505
    %1507 = vrot.lane.b32.xlu0 %v1436, 2
    %v1508 = vpop.permute.xlu0 %1507
    %1509 = vrot.lane.b32.xlu0 %v1437, 2
    %v1510 = vpop.permute.xlu0 %1509
    %1511 = vrot.lane.b32.xlu0 %v1438, 2
    %v1512 = vpop.permute.xlu0 %1511
    %v1513 = vsel %vm938, %v1510, %v1512
    %v1514 = vsel %vm938, %v1508, %v1510
    %v1515 = vsel %vm938, %v1506, %v1508
    %v1516 = vsel %vm938, %v1512, %v1506
    %s1517 = scalar_lea.vmem [#allocation5], 528
    %v1518 = vld [vmem:[%s1517] sm:$0xff]
    %v1519 = vmul.f32 %v1518, %v1516
    %v1520 = vmul.f32 %v1518, %v1515
    %v1521 = vmul.f32 %v1518, %v1514
    %v1522 = vmul.f32 %v1518, %v1513
    %v1523 = vadd.f32 %v1501, %v1519
    %v1524 = vadd.f32 %v1502, %v1520
    %v1525 = vadd.f32 %v1503, %v1521
    %v1526 = vadd.f32 %v1504, %v1522
    %s1527 = scalar_lea.vmem [#allocation5], 536
    %v1528 = vld [vmem:[%s1527] sm:$0xff]
    %v1529 = vmul.f32 %v1528, %v1435
    %v1530 = vmul.f32 %v1528, %v1436
    %v1531 = vmul.f32 %v1528, %v1437
    %v1532 = vmul.f32 %v1528, %v1438
    %v1533 = vadd.f32 %v1523, %v1529
    %v1534 = vadd.f32 %v1524, %v1530
    %v1535 = vadd.f32 %v1525, %v1531
    %v1536 = vadd.f32 %v1526, %v1532
    %1537 = vrot.lane.b32.xlu0 %v1435, 126
    %v1538 = vpop.permute.xlu0 %1537
    %1539 = vrot.lane.b32.xlu0 %v1436, 126
    %v1540 = vpop.permute.xlu0 %1539
    %1541 = vrot.lane.b32.xlu0 %v1437, 126
    %v1542 = vpop.permute.xlu0 %1541
    %1543 = vrot.lane.b32.xlu0 %v1438, 126
    %v1544 = vpop.permute.xlu0 %1543
    %v1545 = vsel %vm971, %v1542, %v1544
    %v1546 = vsel %vm971, %v1540, %v1542
    %v1547 = vsel %vm971, %v1538, %v1540
    %v1548 = vsel %vm971, %v1544, %v1538
    %s1549 = scalar_lea.vmem [#allocation5], 544
    %v1550 = vld [vmem:[%s1549] sm:$0xff]
    %v1551 = vmul.f32 %v1550, %v1547
    %v1552 = vmul.f32 %v1550, %v1546
    %v1553 = vmul.f32 %v1550, %v1545
    %v1554 = vmul.f32 %v1550, %v1548
    %v1555 = vadd.f32 %v1533, %v1551
    %v1556 = vadd.f32 %v1534, %v1552
    %v1557 = vadd.f32 %v1535, %v1553
    %v1558 = vadd.f32 %v1536, %v1554
    %1559 = vrot.lane.b32.xlu0 %v1435, 90
    %v1560 = vpop.permute.xlu0 %1559
    %1561 = vrot.lane.b32.xlu0 %v1436, 90
    %v1562 = vpop.permute.xlu0 %1561
    %1563 = vrot.lane.b32.xlu0 %v1437, 90
    %v1564 = vpop.permute.xlu0 %1563
    %1565 = vrot.lane.b32.xlu0 %v1438, 90
    %v1566 = vpop.permute.xlu0 %1565
    %v1567 = vsel %vm994, %v1564, %v1566
    %v1568 = vsel %vm994, %v1562, %v1564
    %v1569 = vsel %vm994, %v1560, %v1562
    %v1570 = vsel %vm994, %v1566, %v1560
    %s1571 = scalar_lea.vmem [#allocation5], 552
    %v1572 = vld [vmem:[%s1571] sm:$0xff]
    %v1573 = vmul.f32 %v1572, %v1569
    %v1574 = vmul.f32 %v1572, %v1568
    %v1575 = vmul.f32 %v1572, %v1567
    %v1576 = vmul.f32 %v1572, %v1570
    %v1577 = vadd.f32 %v1555, %v1573
    %v1578 = vadd.f32 %v1556, %v1574
    %v1579 = vadd.f32 %v1557, %v1575
    %v1580 = vadd.f32 %v1558, %v1576
    %1581 = vrot.lane.b32.xlu0 %v1435, 88
    %v1582 = vpop.permute.xlu0 %1581
    %1583 = vrot.lane.b32.xlu0 %v1436, 88
    %v1584 = vpop.permute.xlu0 %1583
    %1585 = vrot.lane.b32.xlu0 %v1437, 88
    %v1586 = vpop.permute.xlu0 %1585
    %1587 = vrot.lane.b32.xlu0 %v1438, 88
    %v1588 = vpop.permute.xlu0 %1587
    %v1589 = vsel %vm1017, %v1586, %v1588
    %v1590 = vsel %vm1017, %v1584, %v1586
    %v1591 = vsel %vm1017, %v1582, %v1584
    %v1592 = vsel %vm1017, %v1588, %v1582
    %s1593 = scalar_lea.vmem [#allocation5], 560
    %v1594 = vld [vmem:[%s1593] sm:$0xff]
    %v1595 = vmul.f32 %v1594, %v1591
    %v1596 = vmul.f32 %v1594, %v1590
    %v1597 = vmul.f32 %v1594, %v1589
    %v1598 = vmul.f32 %v1594, %v1592
    %v1599 = vadd.f32 %v1577, %v1595
    %v1600 = vadd.f32 %v1578, %v1596
    %v1601 = vadd.f32 %v1579, %v1597
    %v1602 = vadd.f32 %v1580, %v1598
    %1603 = vrot.lane.b32.xlu0 %v1435, 86
    %v1604 = vpop.permute.xlu0 %1603
    %1605 = vrot.lane.b32.xlu0 %v1436, 86
    %v1606 = vpop.permute.xlu0 %1605
    %1607 = vrot.lane.b32.xlu0 %v1437, 86
    %v1608 = vpop.permute.xlu0 %1607
    %1609 = vrot.lane.b32.xlu0 %v1438, 86
    %v1610 = vpop.permute.xlu0 %1609
    %v1611 = vsel %vm1040, %v1608, %v1610
    %v1612 = vsel %vm1040, %v1606, %v1608
    %v1613 = vsel %vm1040, %v1604, %v1606
    %v1614 = vsel %vm1040, %v1610, %v1604
    %s1615 = scalar_lea.vmem [#allocation5], 568
    %v1616 = vld [vmem:[%s1615] sm:$0xff]
    %v1617 = vmul.f32 %v1616, %v1613
    %v1618 = vmul.f32 %v1616, %v1612
    %v1619 = vmul.f32 %v1616, %v1611
    %v1620 = vmul.f32 %v1616, %v1614
    %v1621 = vadd.f32 %v1599, %v1617
    %v1622 = vadd.f32 %v1600, %v1618
    %v1623 = vadd.f32 %v1601, %v1619
    %v1624 = vadd.f32 %v1602, %v1620
    %v1625 = vadd.f32 %v1621, %v73
    %v1626 = vadd.f32 %v1622, %v74
    %v1627 = vadd.f32 %v1623, %v75
    %v1628 = vadd.f32 %v1624, %v76
    %vm1629 = vcmp.ge.f32.partialorder %v1625, 0.0
    %vm1630 = vcmp.ge.f32.partialorder %v1626, 0.0
    %vm1631 = vcmp.ge.f32.partialorder %v1627, 0.0
    %vm1632 = vcmp.ge.f32.partialorder %v1628, 0.0
    %v1633 = vmul.f32 %v1625, 0.1
    %v1634 = vmul.f32 %v1626, 0.1
    %v1635 = vmul.f32 %v1627, 0.1
    %v1636 = vmul.f32 %v1628, 0.1
    %v1637 = vsel %vm1629, %v1625, %v1633
    %v1638 = vsel %vm1630, %v1626, %v1634
    %v1639 = vsel %vm1631, %v1627, %v1635
    %v1640 = vsel %vm1632, %v1628, %v1636
    %v1641 = vmul.f32 %v1637, %v69
    %v1642 = vmul.f32 %v1638, %v70
    %v1643 = vmul.f32 %v1639, %v71
    %v1644 = vmul.f32 %v1640, %v72
    %s1645 = scalar_lea.vmem [#allocation7], 16
    %v1646 = vld [vmem:[%s1645] sm:$0xff]
    %1647 = vrot.lane.b32.xlu0 %v1641, 21
    %v1648 = vpop.permute.xlu0 %1647
    %1649 = vrot.lane.b32.xlu0 %v1642, 21
    %v1650 = vpop.permute.xlu0 %1649
    %1651 = vrot.lane.b32.xlu0 %v1643, 21
    %v1652 = vpop.permute.xlu0 %1651
    %1653 = vrot.lane.b32.xlu0 %v1644, 21
    %v1654 = vpop.permute.xlu0 %1653
    %v1655 = vsel %vm88, %v1652, %v1654
    %v1656 = vsel %vm88, %v1650, %v1652
    %v1657 = vsel %vm88, %v1648, %v1650
    %v1658 = vsel %vm88, %v1654, %v1648
    %s1659 = scalar_lea.vmem [#allocation5], 576
    %v1660 = vld [vmem:[%s1659] sm:$0xff]
    %v1661 = vmul.f32 %v1660, %v1658
    %v1662 = vmul.f32 %v1660, %v1657
    %v1663 = vmul.f32 %v1660, %v1656
    %v1664 = vmul.f32 %v1660, %v1655
    %v1665 = vadd.f32 %v1646, %v1661
    %v1666 = vadd.f32 %v1646, %v1662
    %v1667 = vadd.f32 %v1646, %v1663
    %v1668 = vadd.f32 %v1646, %v1664
    %1669 = vrot.lane.b32.xlu0 %v1641, 20
    %v1670 = vpop.permute.xlu0 %1669
    %1671 = vrot.lane.b32.xlu0 %v1642, 20
    %v1672 = vpop.permute.xlu0 %1671
    %1673 = vrot.lane.b32.xlu0 %v1643, 20
    %v1674 = vpop.permute.xlu0 %1673
    %1675 = vrot.lane.b32.xlu0 %v1644, 20
    %v1676 = vpop.permute.xlu0 %1675
    %v1677 = vsel %vm110, %v1674, %v1676
    %v1678 = vsel %vm110, %v1672, %v1674
    %v1679 = vsel %vm110, %v1670, %v1672
    %v1680 = vsel %vm110, %v1676, %v1670
    %s1681 = scalar_lea.vmem [#allocation5], 584
    %v1682 = vld [vmem:[%s1681] sm:$0xff]
    %v1683 = vmul.f32 %v1682, %v1680
    %v1684 = vmul.f32 %v1682, %v1679
    %v1685 = vmul.f32 %v1682, %v1678
    %v1686 = vmul.f32 %v1682, %v1677
    %v1687 = vadd.f32 %v1665, %v1683
    %v1688 = vadd.f32 %v1666, %v1684
    %v1689 = vadd.f32 %v1667, %v1685
    %v1690 = vadd.f32 %v1668, %v1686
    %1691 = vrot.lane.b32.xlu0 %v1641, 19
    %v1692 = vpop.permute.xlu0 %1691
    %1693 = vrot.lane.b32.xlu0 %v1642, 19
    %v1694 = vpop.permute.xlu0 %1693
    %1695 = vrot.lane.b32.xlu0 %v1643, 19
    %v1696 = vpop.permute.xlu0 %1695
    %1697 = vrot.lane.b32.xlu0 %v1644, 19
    %v1698 = vpop.permute.xlu0 %1697
    %v1699 = vsel %vm133, %v1696, %v1698
    %v1700 = vsel %vm133, %v1694, %v1696
    %v1701 = vsel %vm133, %v1692, %v1694
    %v1702 = vsel %vm133, %v1698, %v1692
    %s1703 = scalar_lea.vmem [#allocation5], 592
    %v1704 = vld [vmem:[%s1703] sm:$0xff]
    %v1705 = vmul.f32 %v1704, %v1702
    %v1706 = vmul.f32 %v1704, %v1701
    %v1707 = vmul.f32 %v1704, %v1700
    %v1708 = vmul.f32 %v1704, %v1699
    %v1709 = vadd.f32 %v1687, %v1705
    %v1710 = vadd.f32 %v1688, %v1706
    %v1711 = vadd.f32 %v1689, %v1707
    %v1712 = vadd.f32 %v1690, %v1708
    %1713 = vrot.lane.b32.xlu0 %v1641, 1
    %v1714 = vpop.permute.xlu0 %1713
    %1715 = vrot.lane.b32.xlu0 %v1642, 1
    %v1716 = vpop.permute.xlu0 %1715
    %1717 = vrot.lane.b32.xlu0 %v1643, 1
    %v1718 = vpop.permute.xlu0 %1717
    %1719 = vrot.lane.b32.xlu0 %v1644, 1
    %v1720 = vpop.permute.xlu0 %1719
    %v1721 = vsel %vm156, %v1718, %v1720
    %v1722 = vsel %vm156, %v1716, %v1718
    %v1723 = vsel %vm156, %v1714, %v1716
    %v1724 = vsel %vm156, %v1720, %v1714
    %s1725 = scalar_lea.vmem [#allocation5], 600
    %v1726 = vld [vmem:[%s1725] sm:$0xff]
    %v1727 = vmul.f32 %v1726, %v1724
    %v1728 = vmul.f32 %v1726, %v1723
    %v1729 = vmul.f32 %v1726, %v1722
    %v1730 = vmul.f32 %v1726, %v1721
    %v1731 = vadd.f32 %v1709, %v1727
    %v1732 = vadd.f32 %v1710, %v1728
    %v1733 = vadd.f32 %v1711, %v1729
    %v1734 = vadd.f32 %v1712, %v1730
    %s1735 = scalar_lea.vmem [#allocation5], 608
    %v1736 = vld [vmem:[%s1735] sm:$0xff]
    %v1737 = vmul.f32 %v1736, %v1641
    %v1738 = vmul.f32 %v1736, %v1642
    %v1739 = vmul.f32 %v1736, %v1643
    %v1740 = vmul.f32 %v1736, %v1644
    %v1741 = vadd.f32 %v1731, %v1737
    %v1742 = vadd.f32 %v1732, %v1738
    %v1743 = vadd.f32 %v1733, %v1739
    %v1744 = vadd.f32 %v1734, %v1740
    %1745 = vrot.lane.b32.xlu0 %v1641, 127
    %v1746 = vpop.permute.xlu0 %1745
    %1747 = vrot.lane.b32.xlu0 %v1642, 127
    %v1748 = vpop.permute.xlu0 %1747
    %1749 = vrot.lane.b32.xlu0 %v1643, 127
    %v1750 = vpop.permute.xlu0 %1749
    %1751 = vrot.lane.b32.xlu0 %v1644, 127
    %v1752 = vpop.permute.xlu0 %1751
    %v1753 = vsel %vm189, %v1750, %v1752
    %v1754 = vsel %vm189, %v1748, %v1750
    %v1755 = vsel %vm189, %v1746, %v1748
    %v1756 = vsel %vm189, %v1752, %v1746
    %s1757 = scalar_lea.vmem [#allocation5], 616
    %v1758 = vld [vmem:[%s1757] sm:$0xff]
    %v1759 = vmul.f32 %v1758, %v1755
    %v1760 = vmul.f32 %v1758, %v1754
    %v1761 = vmul.f32 %v1758, %v1753
    %v1762 = vmul.f32 %v1758, %v1756
    %v1763 = vadd.f32 %v1741, %v1759
    %v1764 = vadd.f32 %v1742, %v1760
    %v1765 = vadd.f32 %v1743, %v1761
    %v1766 = vadd.f32 %v1744, %v1762
    %1767 = vrot.lane.b32.xlu0 %v1641, 109
    %v1768 = vpop.permute.xlu0 %1767
    %1769 = vrot.lane.b32.xlu0 %v1642, 109
    %v1770 = vpop.permute.xlu0 %1769
    %1771 = vrot.lane.b32.xlu0 %v1643, 109
    %v1772 = vpop.permute.xlu0 %1771
    %1773 = vrot.lane.b32.xlu0 %v1644, 109
    %v1774 = vpop.permute.xlu0 %1773
    %v1775 = vsel %vm212, %v1772, %v1774
    %v1776 = vsel %vm212, %v1770, %v1772
    %v1777 = vsel %vm212, %v1768, %v1770
    %v1778 = vsel %vm212, %v1774, %v1768
    %s1779 = scalar_lea.vmem [#allocation5], 624
    %v1780 = vld [vmem:[%s1779] sm:$0xff]
    %v1781 = vmul.f32 %v1780, %v1777
    %v1782 = vmul.f32 %v1780, %v1776
    %v1783 = vmul.f32 %v1780, %v1775
    %v1784 = vmul.f32 %v1780, %v1778
    %v1785 = vadd.f32 %v1763, %v1781
    %v1786 = vadd.f32 %v1764, %v1782
    %v1787 = vadd.f32 %v1765, %v1783
    %v1788 = vadd.f32 %v1766, %v1784
    %1789 = vrot.lane.b32.xlu0 %v1641, 108
    %v1790 = vpop.permute.xlu0 %1789
    %1791 = vrot.lane.b32.xlu0 %v1642, 108
    %v1792 = vpop.permute.xlu0 %1791
    %1793 = vrot.lane.b32.xlu0 %v1643, 108
    %v1794 = vpop.permute.xlu0 %1793
    %1795 = vrot.lane.b32.xlu0 %v1644, 108
    %v1796 = vpop.permute.xlu0 %1795
    %v1797 = vsel %vm235, %v1794, %v1796
    %v1798 = vsel %vm235, %v1792, %v1794
    %v1799 = vsel %vm235, %v1790, %v1792
    %v1800 = vsel %vm235, %v1796, %v1790
    %s1801 = scalar_lea.vmem [#allocation5], 632
    %v1802 = vld [vmem:[%s1801] sm:$0xff]
    %v1803 = vmul.f32 %v1802, %v1799
    %v1804 = vmul.f32 %v1802, %v1798
    %v1805 = vmul.f32 %v1802, %v1797
    %v1806 = vmul.f32 %v1802, %v1800
    %v1807 = vadd.f32 %v1785, %v1803
    %v1808 = vadd.f32 %v1786, %v1804
    %v1809 = vadd.f32 %v1787, %v1805
    %v1810 = vadd.f32 %v1788, %v1806
    %1811 = vrot.lane.b32.xlu0 %v1641, 107
    %v1812 = vpop.permute.xlu0 %1811
    %1813 = vrot.lane.b32.xlu0 %v1642, 107
    %v1814 = vpop.permute.xlu0 %1813
    %1815 = vrot.lane.b32.xlu0 %v1643, 107
    %v1816 = vpop.permute.xlu0 %1815
    %1817 = vrot.lane.b32.xlu0 %v1644, 107
    %v1818 = vpop.permute.xlu0 %1817
    %v1819 = vsel %vm258, %v1816, %v1818
    %v1820 = vsel %vm258, %v1814, %v1816
    %v1821 = vsel %vm258, %v1812, %v1814
    %v1822 = vsel %vm258, %v1818, %v1812
    %s1823 = scalar_lea.vmem [#allocation5], 640
    %v1824 = vld [vmem:[%s1823] sm:$0xff]
    %v1825 = vmul.f32 %v1824, %v1821
    %v1826 = vmul.f32 %v1824, %v1820
    %v1827 = vmul.f32 %v1824, %v1819
    %v1828 = vmul.f32 %v1824, %v1822
    %v1829 = vadd.f32 %v1807, %v1825
    %v1830 = vadd.f32 %v1808, %v1826
    %v1831 = vadd.f32 %v1809, %v1827
    %v1832 = vadd.f32 %v1810, %v1828
    %v1833 = vrot.slane %v1641, 2
    %v1834 = vrot.slane %v1642, 2
    %v1835 = vrot.slane %v1643, 2
    %v1836 = vrot.slane %v1644, 2
    %1837 = vrot.lane.b32.xlu0 %v1833, 21
    %v1838 = vpop.permute.xlu0 %1837
    %1839 = vrot.lane.b32.xlu0 %v1834, 21
    %v1840 = vpop.permute.xlu0 %1839
    %1841 = vrot.lane.b32.xlu0 %v1835, 21
    %v1842 = vpop.permute.xlu0 %1841
    %1843 = vrot.lane.b32.xlu0 %v1836, 21
    %v1844 = vpop.permute.xlu0 %1843
    %v1845 = vsel %vm88, %v1842, %v1844
    %v1846 = vsel %vm88, %v1840, %v1842
    %v1847 = vsel %vm88, %v1838, %v1840
    %v1848 = vsel %vm88, %v1844, %v1838
    %s1849 = scalar_lea.vmem [#allocation5], 648
    %v1850 = vld [vmem:[%s1849] sm:$0xff]
    %v1851 = vmul.f32 %v1850, %v1848
    %v1852 = vmul.f32 %v1850, %v1847
    %v1853 = vmul.f32 %v1850, %v1846
    %v1854 = vmul.f32 %v1850, %v1845
    %v1855 = vadd.f32 %v1829, %v1851
    %v1856 = vadd.f32 %v1830, %v1852
    %v1857 = vadd.f32 %v1831, %v1853
    %v1858 = vadd.f32 %v1832, %v1854
    %1859 = vrot.lane.b32.xlu0 %v1833, 20
    %v1860 = vpop.permute.xlu0 %1859
    %1861 = vrot.lane.b32.xlu0 %v1834, 20
    %v1862 = vpop.permute.xlu0 %1861
    %1863 = vrot.lane.b32.xlu0 %v1835, 20
    %v1864 = vpop.permute.xlu0 %1863
    %1865 = vrot.lane.b32.xlu0 %v1836, 20
    %v1866 = vpop.permute.xlu0 %1865
    %v1867 = vsel %vm110, %v1864, %v1866
    %v1868 = vsel %vm110, %v1862, %v1864
    %v1869 = vsel %vm110, %v1860, %v1862
    %v1870 = vsel %vm110, %v1866, %v1860
    %s1871 = scalar_lea.vmem [#allocation5], 656
    %v1872 = vld [vmem:[%s1871] sm:$0xff]
    %v1873 = vmul.f32 %v1872, %v1870
    %v1874 = vmul.f32 %v1872, %v1869
    %v1875 = vmul.f32 %v1872, %v1868
    %v1876 = vmul.f32 %v1872, %v1867
    %v1877 = vadd.f32 %v1855, %v1873
    %v1878 = vadd.f32 %v1856, %v1874
    %v1879 = vadd.f32 %v1857, %v1875
    %v1880 = vadd.f32 %v1858, %v1876
    %1881 = vrot.lane.b32.xlu0 %v1833, 19
    %v1882 = vpop.permute.xlu0 %1881
    %1883 = vrot.lane.b32.xlu0 %v1834, 19
    %v1884 = vpop.permute.xlu0 %1883
    %1885 = vrot.lane.b32.xlu0 %v1835, 19
    %v1886 = vpop.permute.xlu0 %1885
    %1887 = vrot.lane.b32.xlu0 %v1836, 19
    %v1888 = vpop.permute.xlu0 %1887
    %v1889 = vsel %vm133, %v1886, %v1888
    %v1890 = vsel %vm133, %v1884, %v1886
    %v1891 = vsel %vm133, %v1882, %v1884
    %v1892 = vsel %vm133, %v1888, %v1882
    %s1893 = scalar_lea.vmem [#allocation5], 664
    %v1894 = vld [vmem:[%s1893] sm:$0xff]
    %v1895 = vmul.f32 %v1894, %v1892
    %v1896 = vmul.f32 %v1894, %v1891
    %v1897 = vmul.f32 %v1894, %v1890
    %v1898 = vmul.f32 %v1894, %v1889
    %v1899 = vadd.f32 %v1877, %v1895
    %v1900 = vadd.f32 %v1878, %v1896
    %v1901 = vadd.f32 %v1879, %v1897
    %v1902 = vadd.f32 %v1880, %v1898
    %1903 = vrot.lane.b32.xlu0 %v1833, 1
    %v1904 = vpop.permute.xlu0 %1903
    %1905 = vrot.lane.b32.xlu0 %v1834, 1
    %v1906 = vpop.permute.xlu0 %1905
    %1907 = vrot.lane.b32.xlu0 %v1835, 1
    %v1908 = vpop.permute.xlu0 %1907
    %1909 = vrot.lane.b32.xlu0 %v1836, 1
    %v1910 = vpop.permute.xlu0 %1909
    %v1911 = vsel %vm156, %v1908, %v1910
    %v1912 = vsel %vm156, %v1906, %v1908
    %v1913 = vsel %vm156, %v1904, %v1906
    %v1914 = vsel %vm156, %v1910, %v1904
    %s1915 = scalar_lea.vmem [#allocation5], 672
    %v1916 = vld [vmem:[%s1915] sm:$0xff]
    %v1917 = vmul.f32 %v1916, %v1914
    %v1918 = vmul.f32 %v1916, %v1913
    %v1919 = vmul.f32 %v1916, %v1912
    %v1920 = vmul.f32 %v1916, %v1911
    %v1921 = vadd.f32 %v1899, %v1917
    %v1922 = vadd.f32 %v1900, %v1918
    %v1923 = vadd.f32 %v1901, %v1919
    %v1924 = vadd.f32 %v1902, %v1920
    %s1925 = scalar_lea.vmem [#allocation5], 680
    %v1926 = vld [vmem:[%s1925] sm:$0xff]
    %v1927 = vmul.f32 %v1926, %v1833
    %v1928 = vmul.f32 %v1926, %v1834
    %v1929 = vmul.f32 %v1926, %v1835
    %v1930 = vmul.f32 %v1926, %v1836
    %v1931 = vadd.f32 %v1921, %v1927
    %v1932 = vadd.f32 %v1922, %v1928
    %v1933 = vadd.f32 %v1923, %v1929
    %v1934 = vadd.f32 %v1924, %v1930
    %1935 = vrot.lane.b32.xlu0 %v1833, 127
    %v1936 = vpop.permute.xlu0 %1935
    %1937 = vrot.lane.b32.xlu0 %v1834, 127
    %v1938 = vpop.permute.xlu0 %1937
    %1939 = vrot.lane.b32.xlu0 %v1835, 127
    %v1940 = vpop.permute.xlu0 %1939
    %1941 = vrot.lane.b32.xlu0 %v1836, 127
    %v1942 = vpop.permute.xlu0 %1941
    %v1943 = vsel %vm189, %v1940, %v1942
    %v1944 = vsel %vm189, %v1938, %v1940
    %v1945 = vsel %vm189, %v1936, %v1938
    %v1946 = vsel %vm189, %v1942, %v1936
    %s1947 = scalar_lea.vmem [#allocation5], 688
    %v1948 = vld [vmem:[%s1947] sm:$0xff]
    %v1949 = vmul.f32 %v1948, %v1945
    %v1950 = vmul.f32 %v1948, %v1944
    %v1951 = vmul.f32 %v1948, %v1943
    %v1952 = vmul.f32 %v1948, %v1946
    %v1953 = vadd.f32 %v1931, %v1949
    %v1954 = vadd.f32 %v1932, %v1950
    %v1955 = vadd.f32 %v1933, %v1951
    %v1956 = vadd.f32 %v1934, %v1952
    %1957 = vrot.lane.b32.xlu0 %v1833, 109
    %v1958 = vpop.permute.xlu0 %1957
    %1959 = vrot.lane.b32.xlu0 %v1834, 109
    %v1960 = vpop.permute.xlu0 %1959
    %1961 = vrot.lane.b32.xlu0 %v1835, 109
    %v1962 = vpop.permute.xlu0 %1961
    %1963 = vrot.lane.b32.xlu0 %v1836, 109
    %v1964 = vpop.permute.xlu0 %1963
    %v1965 = vsel %vm212, %v1962, %v1964
    %v1966 = vsel %vm212, %v1960, %v1962
    %v1967 = vsel %vm212, %v1958, %v1960
    %v1968 = vsel %vm212, %v1964, %v1958
    %s1969 = scalar_lea.vmem [#allocation5], 696
    %v1970 = vld [vmem:[%s1969] sm:$0xff]
    %v1971 = vmul.f32 %v1970, %v1967
    %v1972 = vmul.f32 %v1970, %v1966
    %v1973 = vmul.f32 %v1970, %v1965
    %v1974 = vmul.f32 %v1970, %v1968
    %v1975 = vadd.f32 %v1953, %v1971
    %v1976 = vadd.f32 %v1954, %v1972
    %v1977 = vadd.f32 %v1955, %v1973
    %v1978 = vadd.f32 %v1956, %v1974
    %1979 = vrot.lane.b32.xlu0 %v1833, 108
    %v1980 = vpop.permute.xlu0 %1979
    %1981 = vrot.lane.b32.xlu0 %v1834, 108
    %v1982 = vpop.permute.xlu0 %1981
    %1983 = vrot.lane.b32.xlu0 %v1835, 108
    %v1984 = vpop.permute.xlu0 %1983
    %1985 = vrot.lane.b32.xlu0 %v1836, 108
    %v1986 = vpop.permute.xlu0 %1985
    %v1987 = vsel %vm235, %v1984, %v1986
    %v1988 = vsel %vm235, %v1982, %v1984
    %v1989 = vsel %vm235, %v1980, %v1982
    %v1990 = vsel %vm235, %v1986, %v1980
    %s1991 = scalar_lea.vmem [#allocation5], 704
    %v1992 = vld [vmem:[%s1991] sm:$0xff]
    %v1993 = vmul.f32 %v1992, %v1989
    %v1994 = vmul.f32 %v1992, %v1988
    %v1995 = vmul.f32 %v1992, %v1987
    %v1996 = vmul.f32 %v1992, %v1990
    %v1997 = vadd.f32 %v1975, %v1993
    %v1998 = vadd.f32 %v1976, %v1994
    %v1999 = vadd.f32 %v1977, %v1995
    %v2000 = vadd.f32 %v1978, %v1996
    %2001 = vrot.lane.b32.xlu0 %v1833, 107
    %v2002 = vpop.permute.xlu0 %2001
    %2003 = vrot.lane.b32.xlu0 %v1834, 107
    %v2004 = vpop.permute.xlu0 %2003
    %2005 = vrot.lane.b32.xlu0 %v1835, 107
    %v2006 = vpop.permute.xlu0 %2005
    %2007 = vrot.lane.b32.xlu0 %v1836, 107
    %v2008 = vpop.permute.xlu0 %2007
    %v2009 = vsel %vm258, %v2006, %v2008
    %v2010 = vsel %vm258, %v2004, %v2006
    %v2011 = vsel %vm258, %v2002, %v2004
    %v2012 = vsel %vm258, %v2008, %v2002
    %s2013 = scalar_lea.vmem [#allocation5], 712
    %v2014 = vld [vmem:[%s2013] sm:$0xff]
    %v2015 = vmul.f32 %v2014, %v2011
    %v2016 = vmul.f32 %v2014, %v2010
    %v2017 = vmul.f32 %v2014, %v2009
    %v2018 = vmul.f32 %v2014, %v2012
    %v2019 = vadd.f32 %v1997, %v2015
    %v2020 = vadd.f32 %v1998, %v2016
    %v2021 = vadd.f32 %v1999, %v2017
    %v2022 = vadd.f32 %v2000, %v2018
    %v2023 = vrot.slane %v1641, 4
    %v2024 = vrot.slane %v1642, 4
    %v2025 = vrot.slane %v1643, 4
    %v2026 = vrot.slane %v1644, 4
    %2027 = vrot.lane.b32.xlu0 %v2023, 21
    %v2028 = vpop.permute.xlu0 %2027
    %2029 = vrot.lane.b32.xlu0 %v2024, 21
    %v2030 = vpop.permute.xlu0 %2029
    %2031 = vrot.lane.b32.xlu0 %v2025, 21
    %v2032 = vpop.permute.xlu0 %2031
    %2033 = vrot.lane.b32.xlu0 %v2026, 21
    %v2034 = vpop.permute.xlu0 %2033
    %v2035 = vsel %vm88, %v2032, %v2034
    %v2036 = vsel %vm88, %v2030, %v2032
    %v2037 = vsel %vm88, %v2028, %v2030
    %v2038 = vsel %vm88, %v2034, %v2028
    %s2039 = scalar_lea.vmem [#allocation5], 720
    %v2040 = vld [vmem:[%s2039] sm:$0xff]
    %v2041 = vmul.f32 %v2040, %v2038
    %v2042 = vmul.f32 %v2040, %v2037
    %v2043 = vmul.f32 %v2040, %v2036
    %v2044 = vmul.f32 %v2040, %v2035
    %v2045 = vadd.f32 %v2019, %v2041
    %v2046 = vadd.f32 %v2020, %v2042
    %v2047 = vadd.f32 %v2021, %v2043
    %v2048 = vadd.f32 %v2022, %v2044
    %2049 = vrot.lane.b32.xlu0 %v2023, 20
    %v2050 = vpop.permute.xlu0 %2049
    %2051 = vrot.lane.b32.xlu0 %v2024, 20
    %v2052 = vpop.permute.xlu0 %2051
    %2053 = vrot.lane.b32.xlu0 %v2025, 20
    %v2054 = vpop.permute.xlu0 %2053
    %2055 = vrot.lane.b32.xlu0 %v2026, 20
    %v2056 = vpop.permute.xlu0 %2055
    %v2057 = vsel %vm110, %v2054, %v2056
    %v2058 = vsel %vm110, %v2052, %v2054
    %v2059 = vsel %vm110, %v2050, %v2052
    %v2060 = vsel %vm110, %v2056, %v2050
    %s2061 = scalar_lea.vmem [#allocation5], 728
    %v2062 = vld [vmem:[%s2061] sm:$0xff]
    %v2063 = vmul.f32 %v2062, %v2060
    %v2064 = vmul.f32 %v2062, %v2059
    %v2065 = vmul.f32 %v2062, %v2058
    %v2066 = vmul.f32 %v2062, %v2057
    %v2067 = vadd.f32 %v2045, %v2063
    %v2068 = vadd.f32 %v2046, %v2064
    %v2069 = vadd.f32 %v2047, %v2065
    %v2070 = vadd.f32 %v2048, %v2066
    %2071 = vrot.lane.b32.xlu0 %v2023, 19
    %v2072 = vpop.permute.xlu0 %2071
    %2073 = vrot.lane.b32.xlu0 %v2024, 19
    %v2074 = vpop.permute.xlu0 %2073
    %2075 = vrot.lane.b32.xlu0 %v2025, 19
    %v2076 = vpop.permute.xlu0 %2075
    %2077 = vrot.lane.b32.xlu0 %v2026, 19
    %v2078 = vpop.permute.xlu0 %2077
    %v2079 = vsel %vm133, %v2076, %v2078
    %v2080 = vsel %vm133, %v2074, %v2076
    %v2081 = vsel %vm133, %v2072, %v2074
    %v2082 = vsel %vm133, %v2078, %v2072
    %s2083 = scalar_lea.vmem [#allocation5], 736
    %v2084 = vld [vmem:[%s2083] sm:$0xff]
    %v2085 = vmul.f32 %v2084, %v2082
    %v2086 = vmul.f32 %v2084, %v2081
    %v2087 = vmul.f32 %v2084, %v2080
    %v2088 = vmul.f32 %v2084, %v2079
    %v2089 = vadd.f32 %v2067, %v2085
    %v2090 = vadd.f32 %v2068, %v2086
    %v2091 = vadd.f32 %v2069, %v2087
    %v2092 = vadd.f32 %v2070, %v2088
    %2093 = vrot.lane.b32.xlu0 %v2023, 1
    %v2094 = vpop.permute.xlu0 %2093
    %2095 = vrot.lane.b32.xlu0 %v2024, 1
    %v2096 = vpop.permute.xlu0 %2095
    %2097 = vrot.lane.b32.xlu0 %v2025, 1
    %v2098 = vpop.permute.xlu0 %2097
    %2099 = vrot.lane.b32.xlu0 %v2026, 1
    %v2100 = vpop.permute.xlu0 %2099
    %v2101 = vsel %vm156, %v2098, %v2100
    %v2102 = vsel %vm156, %v2096, %v2098
    %v2103 = vsel %vm156, %v2094, %v2096
    %v2104 = vsel %vm156, %v2100, %v2094
    %s2105 = scalar_lea.vmem [#allocation5], 744
    %v2106 = vld [vmem:[%s2105] sm:$0xff]
    %v2107 = vmul.f32 %v2106, %v2104
    %v2108 = vmul.f32 %v2106, %v2103
    %v2109 = vmul.f32 %v2106, %v2102
    %v2110 = vmul.f32 %v2106, %v2101
    %v2111 = vadd.f32 %v2089, %v2107
    %v2112 = vadd.f32 %v2090, %v2108
    %v2113 = vadd.f32 %v2091, %v2109
    %v2114 = vadd.f32 %v2092, %v2110
    %s2115 = scalar_lea.vmem [#allocation5], 752
    %v2116 = vld [vmem:[%s2115] sm:$0xff]
    %v2117 = vmul.f32 %v2116, %v2023
    %v2118 = vmul.f32 %v2116, %v2024
    %v2119 = vmul.f32 %v2116, %v2025
    %v2120 = vmul.f32 %v2116, %v2026
    %v2121 = vadd.f32 %v2111, %v2117
    %v2122 = vadd.f32 %v2112, %v2118
    %v2123 = vadd.f32 %v2113, %v2119
    %v2124 = vadd.f32 %v2114, %v2120
    %2125 = vrot.lane.b32.xlu0 %v2023, 127
    %v2126 = vpop.permute.xlu0 %2125
    %2127 = vrot.lane.b32.xlu0 %v2024, 127
    %v2128 = vpop.permute.xlu0 %2127
    %2129 = vrot.lane.b32.xlu0 %v2025, 127
    %v2130 = vpop.permute.xlu0 %2129
    %2131 = vrot.lane.b32.xlu0 %v2026, 127
    %v2132 = vpop.permute.xlu0 %2131
    %v2133 = vsel %vm189, %v2130, %v2132
    %v2134 = vsel %vm189, %v2128, %v2130
    %v2135 = vsel %vm189, %v2126, %v2128
    %v2136 = vsel %vm189, %v2132, %v2126
    %s2137 = scalar_lea.vmem [#allocation5], 760
    %v2138 = vld [vmem:[%s2137] sm:$0xff]
    %v2139 = vmul.f32 %v2138, %v2135
    %v2140 = vmul.f32 %v2138, %v2134
    %v2141 = vmul.f32 %v2138, %v2133
    %v2142 = vmul.f32 %v2138, %v2136
    %v2143 = vadd.f32 %v2121, %v2139
    %v2144 = vadd.f32 %v2122, %v2140
    %v2145 = vadd.f32 %v2123, %v2141
    %v2146 = vadd.f32 %v2124, %v2142
    %2147 = vrot.lane.b32.xlu0 %v2023, 109
    %v2148 = vpop.permute.xlu0 %2147
    %2149 = vrot.lane.b32.xlu0 %v2024, 109
    %v2150 = vpop.permute.xlu0 %2149
    %2151 = vrot.lane.b32.xlu0 %v2025, 109
    %v2152 = vpop.permute.xlu0 %2151
    %2153 = vrot.lane.b32.xlu0 %v2026, 109
    %v2154 = vpop.permute.xlu0 %2153
    %v2155 = vsel %vm212, %v2152, %v2154
    %v2156 = vsel %vm212, %v2150, %v2152
    %v2157 = vsel %vm212, %v2148, %v2150
    %v2158 = vsel %vm212, %v2154, %v2148
    %s2159 = scalar_lea.vmem [#allocation5], 768
    %v2160 = vld [vmem:[%s2159] sm:$0xff]
    %v2161 = vmul.f32 %v2160, %v2157
    %v2162 = vmul.f32 %v2160, %v2156
    %v2163 = vmul.f32 %v2160, %v2155
    %v2164 = vmul.f32 %v2160, %v2158
    %v2165 = vadd.f32 %v2143, %v2161
    %v2166 = vadd.f32 %v2144, %v2162
    %v2167 = vadd.f32 %v2145, %v2163
    %v2168 = vadd.f32 %v2146, %v2164
    %2169 = vrot.lane.b32.xlu0 %v2023, 108
    %v2170 = vpop.permute.xlu0 %2169
    %2171 = vrot.lane.b32.xlu0 %v2024, 108
    %v2172 = vpop.permute.xlu0 %2171
    %2173 = vrot.lane.b32.xlu0 %v2025, 108
    %v2174 = vpop.permute.xlu0 %2173
    %2175 = vrot.lane.b32.xlu0 %v2026, 108
    %v2176 = vpop.permute.xlu0 %2175
    %v2177 = vsel %vm235, %v2174, %v2176
    %v2178 = vsel %vm235, %v2172, %v2174
    %v2179 = vsel %vm235, %v2170, %v2172
    %v2180 = vsel %vm235, %v2176, %v2170
    %s2181 = scalar_lea.vmem [#allocation5], 776
    %v2182 = vld [vmem:[%s2181] sm:$0xff]
    %v2183 = vmul.f32 %v2182, %v2179
    %v2184 = vmul.f32 %v2182, %v2178
    %v2185 = vmul.f32 %v2182, %v2177
    %v2186 = vmul.f32 %v2182, %v2180
    %v2187 = vadd.f32 %v2165, %v2183
    %v2188 = vadd.f32 %v2166, %v2184
    %v2189 = vadd.f32 %v2167, %v2185
    %v2190 = vadd.f32 %v2168, %v2186
    %2191 = vrot.lane.b32.xlu0 %v2023, 107
    %v2192 = vpop.permute.xlu0 %2191
    %2193 = vrot.lane.b32.xlu0 %v2024, 107
    %v2194 = vpop.permute.xlu0 %2193
    %2195 = vrot.lane.b32.xlu0 %v2025, 107
    %v2196 = vpop.permute.xlu0 %2195
    %2197 = vrot.lane.b32.xlu0 %v2026, 107
    %v2198 = vpop.permute.xlu0 %2197
    %v2199 = vsel %vm258, %v2196, %v2198
    %v2200 = vsel %vm258, %v2194, %v2196
    %v2201 = vsel %vm258, %v2192, %v2194
    %v2202 = vsel %vm258, %v2198, %v2192
    %s2203 = scalar_lea.vmem [#allocation5], 784
    %v2204 = vld [vmem:[%s2203] sm:$0xff]
    %v2205 = vmul.f32 %v2204, %v2201
    %v2206 = vmul.f32 %v2204, %v2200
    %v2207 = vmul.f32 %v2204, %v2199
    %v2208 = vmul.f32 %v2204, %v2202
    %v2209 = vadd.f32 %v2187, %v2205
    %v2210 = vadd.f32 %v2188, %v2206
    %v2211 = vadd.f32 %v2189, %v2207
    %v2212 = vadd.f32 %v2190, %v2208
    %v2213 = vrot.slane %v1641, 6
    %v2214 = vrot.slane %v1642, 6
    %v2215 = vrot.slane %v1643, 6
    %v2216 = vrot.slane %v1644, 6
    %2217 = vrot.lane.b32.xlu0 %v2213, 21
    %v2218 = vpop.permute.xlu0 %2217
    %2219 = vrot.lane.b32.xlu0 %v2214, 21
    %v2220 = vpop.permute.xlu0 %2219
    %2221 = vrot.lane.b32.xlu0 %v2215, 21
    %v2222 = vpop.permute.xlu0 %2221
    %2223 = vrot.lane.b32.xlu0 %v2216, 21
    %v2224 = vpop.permute.xlu0 %2223
    %v2225 = vsel %vm88, %v2222, %v2224
    %v2226 = vsel %vm88, %v2220, %v2222
    %v2227 = vsel %vm88, %v2218, %v2220
    %v2228 = vsel %vm88, %v2224, %v2218
    %s2229 = scalar_lea.vmem [#allocation5], 792
    %v2230 = vld [vmem:[%s2229] sm:$0xff]
    %v2231 = vmul.f32 %v2230, %v2228
    %v2232 = vmul.f32 %v2230, %v2227
    %v2233 = vmul.f32 %v2230, %v2226
    %v2234 = vmul.f32 %v2230, %v2225
    %v2235 = vadd.f32 %v2209, %v2231
    %v2236 = vadd.f32 %v2210, %v2232
    %v2237 = vadd.f32 %v2211, %v2233
    %v2238 = vadd.f32 %v2212, %v2234
    %2239 = vrot.lane.b32.xlu0 %v2213, 20
    %v2240 = vpop.permute.xlu0 %2239
    %2241 = vrot.lane.b32.xlu0 %v2214, 20
    %v2242 = vpop.permute.xlu0 %2241
    %2243 = vrot.lane.b32.xlu0 %v2215, 20
    %v2244 = vpop.permute.xlu0 %2243
    %2245 = vrot.lane.b32.xlu0 %v2216, 20
    %v2246 = vpop.permute.xlu0 %2245
    %v2247 = vsel %vm110, %v2244, %v2246
    %v2248 = vsel %vm110, %v2242, %v2244
    %v2249 = vsel %vm110, %v2240, %v2242
    %v2250 = vsel %vm110, %v2246, %v2240
    %s2251 = scalar_lea.vmem [#allocation5], 800
    %v2252 = vld [vmem:[%s2251] sm:$0xff]
    %v2253 = vmul.f32 %v2252, %v2250
    %v2254 = vmul.f32 %v2252, %v2249
    %v2255 = vmul.f32 %v2252, %v2248
    %v2256 = vmul.f32 %v2252, %v2247
    %v2257 = vadd.f32 %v2235, %v2253
    %v2258 = vadd.f32 %v2236, %v2254
    %v2259 = vadd.f32 %v2237, %v2255
    %v2260 = vadd.f32 %v2238, %v2256
    %2261 = vrot.lane.b32.xlu0 %v2213, 19
    %v2262 = vpop.permute.xlu0 %2261
    %2263 = vrot.lane.b32.xlu0 %v2214, 19
    %v2264 = vpop.permute.xlu0 %2263
    %2265 = vrot.lane.b32.xlu0 %v2215, 19
    %v2266 = vpop.permute.xlu0 %2265
    %2267 = vrot.lane.b32.xlu0 %v2216, 19
    %v2268 = vpop.permute.xlu0 %2267
    %v2269 = vsel %vm133, %v2266, %v2268
    %v2270 = vsel %vm133, %v2264, %v2266
    %v2271 = vsel %vm133, %v2262, %v2264
    %v2272 = vsel %vm133, %v2268, %v2262
    %s2273 = scalar_lea.vmem [#allocation5], 808
    %v2274 = vld [vmem:[%s2273] sm:$0xff]
    %v2275 = vmul.f32 %v2274, %v2272
    %v2276 = vmul.f32 %v2274, %v2271
    %v2277 = vmul.f32 %v2274, %v2270
    %v2278 = vmul.f32 %v2274, %v2269
    %v2279 = vadd.f32 %v2257, %v2275
    %v2280 = vadd.f32 %v2258, %v2276
    %v2281 = vadd.f32 %v2259, %v2277
    %v2282 = vadd.f32 %v2260, %v2278
    %2283 = vrot.lane.b32.xlu0 %v2213, 1
    %v2284 = vpop.permute.xlu0 %2283
    %2285 = vrot.lane.b32.xlu0 %v2214, 1
    %v2286 = vpop.permute.xlu0 %2285
    %2287 = vrot.lane.b32.xlu0 %v2215, 1
    %v2288 = vpop.permute.xlu0 %2287
    %2289 = vrot.lane.b32.xlu0 %v2216, 1
    %v2290 = vpop.permute.xlu0 %2289
    %v2291 = vsel %vm156, %v2288, %v2290
    %v2292 = vsel %vm156, %v2286, %v2288
    %v2293 = vsel %vm156, %v2284, %v2286
    %v2294 = vsel %vm156, %v2290, %v2284
    %s2295 = scalar_lea.vmem [#allocation5], 816
    %v2296 = vld [vmem:[%s2295] sm:$0xff]
    %v2297 = vmul.f32 %v2296, %v2294
    %v2298 = vmul.f32 %v2296, %v2293
    %v2299 = vmul.f32 %v2296, %v2292
    %v2300 = vmul.f32 %v2296, %v2291
    %v2301 = vadd.f32 %v2279, %v2297
    %v2302 = vadd.f32 %v2280, %v2298
    %v2303 = vadd.f32 %v2281, %v2299
    %v2304 = vadd.f32 %v2282, %v2300
    %s2305 = scalar_lea.vmem [#allocation5], 824
    %v2306 = vld [vmem:[%s2305] sm:$0xff]
    %v2307 = vmul.f32 %v2306, %v2213
    %v2308 = vmul.f32 %v2306, %v2214
    %v2309 = vmul.f32 %v2306, %v2215
    %v2310 = vmul.f32 %v2306, %v2216
    %v2311 = vadd.f32 %v2301, %v2307
    %v2312 = vadd.f32 %v2302, %v2308
    %v2313 = vadd.f32 %v2303, %v2309
    %v2314 = vadd.f32 %v2304, %v2310
    %2315 = vrot.lane.b32.xlu0 %v2213, 127
    %v2316 = vpop.permute.xlu0 %2315
    %2317 = vrot.lane.b32.xlu0 %v2214, 127
    %v2318 = vpop.permute.xlu0 %2317
    %2319 = vrot.lane.b32.xlu0 %v2215, 127
    %v2320 = vpop.permute.xlu0 %2319
    %2321 = vrot.lane.b32.xlu0 %v2216, 127
    %v2322 = vpop.permute.xlu0 %2321
    %v2323 = vsel %vm189, %v2320, %v2322
    %v2324 = vsel %vm189, %v2318, %v2320
    %v2325 = vsel %vm189, %v2316, %v2318
    %v2326 = vsel %vm189, %v2322, %v2316
    %s2327 = scalar_lea.vmem [#allocation5], 832
    %v2328 = vld [vmem:[%s2327] sm:$0xff]
    %v2329 = vmul.f32 %v2328, %v2325
    %v2330 = vmul.f32 %v2328, %v2324
    %v2331 = vmul.f32 %v2328, %v2323
    %v2332 = vmul.f32 %v2328, %v2326
    %v2333 = vadd.f32 %v2311, %v2329
    %v2334 = vadd.f32 %v2312, %v2330
    %v2335 = vadd.f32 %v2313, %v2331
    %v2336 = vadd.f32 %v2314, %v2332
    %2337 = vrot.lane.b32.xlu0 %v2213, 109
    %v2338 = vpop.permute.xlu0 %2337
    %2339 = vrot.lane.b32.xlu0 %v2214, 109
    %v2340 = vpop.permute.xlu0 %2339
    %2341 = vrot.lane.b32.xlu0 %v2215, 109
    %v2342 = vpop.permute.xlu0 %2341
    %2343 = vrot.lane.b32.xlu0 %v2216, 109
    %v2344 = vpop.permute.xlu0 %2343
    %v2345 = vsel %vm212, %v2342, %v2344
    %v2346 = vsel %vm212, %v2340, %v2342
    %v2347 = vsel %vm212, %v2338, %v2340
    %v2348 = vsel %vm212, %v2344, %v2338
    %s2349 = scalar_lea.vmem [#allocation5], 840
    %v2350 = vld [vmem:[%s2349] sm:$0xff]
    %v2351 = vmul.f32 %v2350, %v2347
    %v2352 = vmul.f32 %v2350, %v2346
    %v2353 = vmul.f32 %v2350, %v2345
    %v2354 = vmul.f32 %v2350, %v2348
    %v2355 = vadd.f32 %v2333, %v2351
    %v2356 = vadd.f32 %v2334, %v2352
    %v2357 = vadd.f32 %v2335, %v2353
    %v2358 = vadd.f32 %v2336, %v2354
    %2359 = vrot.lane.b32.xlu0 %v2213, 108
    %v2360 = vpop.permute.xlu0 %2359
    %2361 = vrot.lane.b32.xlu0 %v2214, 108
    %v2362 = vpop.permute.xlu0 %2361
    %2363 = vrot.lane.b32.xlu0 %v2215, 108
    %v2364 = vpop.permute.xlu0 %2363
    %2365 = vrot.lane.b32.xlu0 %v2216, 108
    %v2366 = vpop.permute.xlu0 %2365
    %v2367 = vsel %vm235, %v2364, %v2366
    %v2368 = vsel %vm235, %v2362, %v2364
    %v2369 = vsel %vm235, %v2360, %v2362
    %v2370 = vsel %vm235, %v2366, %v2360
    %s2371 = scalar_lea.vmem [#allocation5], 848
    %v2372 = vld [vmem:[%s2371] sm:$0xff]
    %v2373 = vmul.f32 %v2372, %v2369
    %v2374 = vmul.f32 %v2372, %v2368
    %v2375 = vmul.f32 %v2372, %v2367
    %v2376 = vmul.f32 %v2372, %v2370
    %v2377 = vadd.f32 %v2355, %v2373
    %v2378 = vadd.f32 %v2356, %v2374
    %v2379 = vadd.f32 %v2357, %v2375
    %v2380 = vadd.f32 %v2358, %v2376
    %2381 = vrot.lane.b32.xlu0 %v2213, 107
    %v2382 = vpop.permute.xlu0 %2381
    %2383 = vrot.lane.b32.xlu0 %v2214, 107
    %v2384 = vpop.permute.xlu0 %2383
    %2385 = vrot.lane.b32.xlu0 %v2215, 107
    %v2386 = vpop.permute.xlu0 %2385
    %2387 = vrot.lane.b32.xlu0 %v2216, 107
    %v2388 = vpop.permute.xlu0 %2387
    %v2389 = vsel %vm258, %v2386, %v2388
    %v2390 = vsel %vm258, %v2384, %v2386
    %v2391 = vsel %vm258, %v2382, %v2384
    %v2392 = vsel %vm258, %v2388, %v2382
    %s2393 = scalar_lea.vmem [#allocation5], 856
    %v2394 = vld [vmem:[%s2393] sm:$0xff]
    %v2395 = vmul.f32 %v2394, %v2391
    %v2396 = vmul.f32 %v2394, %v2390
    %v2397 = vmul.f32 %v2394, %v2389
    %v2398 = vmul.f32 %v2394, %v2392
    %v2399 = vadd.f32 %v2377, %v2395
    %v2400 = vadd.f32 %v2378, %v2396
    %v2401 = vadd.f32 %v2379, %v2397
    %v2402 = vadd.f32 %v2380, %v2398
    %vm2403 = vcmp.ge.f32.partialorder %v2399, 0.0
    %vm2404 = vcmp.ge.f32.partialorder %v2400, 0.0
    %vm2405 = vcmp.ge.f32.partialorder %v2401, 0.0
    %vm2406 = vcmp.ge.f32.partialorder %v2402, 0.0
    %v2407 = vmul.f32 %v2399, 0.1
    %v2408 = vmul.f32 %v2400, 0.1
    %v2409 = vmul.f32 %v2401, 0.1
    %v2410 = vmul.f32 %v2402, 0.1
    %v2411 = vsel %vm2403, %v2399, %v2407
    %v2412 = vsel %vm2404, %v2400, %v2408
    %v2413 = vsel %vm2405, %v2401, %v2409
    %v2414 = vsel %vm2406, %v2402, %v2410
    %v2415 = vmul.f32 %v2411, %v69
    %v2416 = vmul.f32 %v2412, %v70
    %v2417 = vmul.f32 %v2413, %v71
    %v2418 = vmul.f32 %v2414, %v72
    %s2419 = scalar_lea.vmem [#allocation7], 24
    %v2420 = vld [vmem:[%s2419] sm:$0xff]
    %2421 = vrot.lane.b32.xlu0 %v2415, 42
    %v2422 = vpop.permute.xlu0 %2421
    %2423 = vrot.lane.b32.xlu0 %v2416, 42
    %v2424 = vpop.permute.xlu0 %2423
    %2425 = vrot.lane.b32.xlu0 %v2417, 42
    %v2426 = vpop.permute.xlu0 %2425
    %2427 = vrot.lane.b32.xlu0 %v2418, 42
    %v2428 = vpop.permute.xlu0 %2427
    %v2429 = vsel %vm869, %v2426, %v2428
    %v2430 = vsel %vm869, %v2424, %v2426
    %v2431 = vsel %vm869, %v2422, %v2424
    %v2432 = vsel %vm869, %v2428, %v2422
    %s2433 = scalar_lea.vmem [#allocation5], 864
    %v2434 = vld [vmem:[%s2433] sm:$0xff]
    %v2435 = vmul.f32 %v2434, %v2432
    %v2436 = vmul.f32 %v2434, %v2431
    %v2437 = vmul.f32 %v2434, %v2430
    %v2438 = vmul.f32 %v2434, %v2429
    %v2439 = vadd.f32 %v2420, %v2435
    %v2440 = vadd.f32 %v2420, %v2436
    %v2441 = vadd.f32 %v2420, %v2437
    %v2442 = vadd.f32 %v2420, %v2438
    %2443 = vrot.lane.b32.xlu0 %v2415, 40
    %v2444 = vpop.permute.xlu0 %2443
    %2445 = vrot.lane.b32.xlu0 %v2416, 40
    %v2446 = vpop.permute.xlu0 %2445
    %2447 = vrot.lane.b32.xlu0 %v2417, 40
    %v2448 = vpop.permute.xlu0 %2447
    %2449 = vrot.lane.b32.xlu0 %v2418, 40
    %v2450 = vpop.permute.xlu0 %2449
    %v2451 = vsel %vm892, %v2448, %v2450
    %v2452 = vsel %vm892, %v2446, %v2448
    %v2453 = vsel %vm892, %v2444, %v2446
    %v2454 = vsel %vm892, %v2450, %v2444
    %s2455 = scalar_lea.vmem [#allocation5], 872
    %v2456 = vld [vmem:[%s2455] sm:$0xff]
    %v2457 = vmul.f32 %v2456, %v2454
    %v2458 = vmul.f32 %v2456, %v2453
    %v2459 = vmul.f32 %v2456, %v2452
    %v2460 = vmul.f32 %v2456, %v2451
    %v2461 = vadd.f32 %v2439, %v2457
    %v2462 = vadd.f32 %v2440, %v2458
    %v2463 = vadd.f32 %v2441, %v2459
    %v2464 = vadd.f32 %v2442, %v2460
    %2465 = vrot.lane.b32.xlu0 %v2415, 38
    %v2466 = vpop.permute.xlu0 %2465
    %2467 = vrot.lane.b32.xlu0 %v2416, 38
    %v2468 = vpop.permute.xlu0 %2467
    %2469 = vrot.lane.b32.xlu0 %v2417, 38
    %v2470 = vpop.permute.xlu0 %2469
    %2471 = vrot.lane.b32.xlu0 %v2418, 38
    %v2472 = vpop.permute.xlu0 %2471
    %v2473 = vsel %vm915, %v2470, %v2472
    %v2474 = vsel %vm915, %v2468, %v2470
    %v2475 = vsel %vm915, %v2466, %v2468
    %v2476 = vsel %vm915, %v2472, %v2466
    %s2477 = scalar_lea.vmem [#allocation5], 880
    %v2478 = vld [vmem:[%s2477] sm:$0xff]
    %v2479 = vmul.f32 %v2478, %v2476
    %v2480 = vmul.f32 %v2478, %v2475
    %v2481 = vmul.f32 %v2478, %v2474
    %v2482 = vmul.f32 %v2478, %v2473
    %v2483 = vadd.f32 %v2461, %v2479
    %v2484 = vadd.f32 %v2462, %v2480
    %v2485 = vadd.f32 %v2463, %v2481
    %v2486 = vadd.f32 %v2464, %v2482
    %2487 = vrot.lane.b32.xlu0 %v2415, 2
    %v2488 = vpop.permute.xlu0 %2487
    %2489 = vrot.lane.b32.xlu0 %v2416, 2
    %v2490 = vpop.permute.xlu0 %2489
    %2491 = vrot.lane.b32.xlu0 %v2417, 2
    %v2492 = vpop.permute.xlu0 %2491
    %2493 = vrot.lane.b32.xlu0 %v2418, 2
    %v2494 = vpop.permute.xlu0 %2493
    %v2495 = vsel %vm938, %v2492, %v2494
    %v2496 = vsel %vm938, %v2490, %v2492
    %v2497 = vsel %vm938, %v2488, %v2490
    %v2498 = vsel %vm938, %v2494, %v2488
    %s2499 = scalar_lea.vmem [#allocation5], 888
    %v2500 = vld [vmem:[%s2499] sm:$0xff]
    %v2501 = vmul.f32 %v2500, %v2498
    %v2502 = vmul.f32 %v2500, %v2497
    %v2503 = vmul.f32 %v2500, %v2496
    %v2504 = vmul.f32 %v2500, %v2495
    %v2505 = vadd.f32 %v2483, %v2501
    %v2506 = vadd.f32 %v2484, %v2502
    %v2507 = vadd.f32 %v2485, %v2503
    %v2508 = vadd.f32 %v2486, %v2504
    %s2509 = scalar_lea.vmem [#allocation5], 896
    %v2510 = vld [vmem:[%s2509] sm:$0xff]
    %v2511 = vmul.f32 %v2510, %v2415
    %v2512 = vmul.f32 %v2510, %v2416
    %v2513 = vmul.f32 %v2510, %v2417
    %v2514 = vmul.f32 %v2510, %v2418
    %v2515 = vadd.f32 %v2505, %v2511
    %v2516 = vadd.f32 %v2506, %v2512
    %v2517 = vadd.f32 %v2507, %v2513
    %v2518 = vadd.f32 %v2508, %v2514
    %2519 = vrot.lane.b32.xlu0 %v2415, 126
    %v2520 = vpop.permute.xlu0 %2519
    %2521 = vrot.lane.b32.xlu0 %v2416, 126
    %v2522 = vpop.permute.xlu0 %2521
    %2523 = vrot.lane.b32.xlu0 %v2417, 126
    %v2524 = vpop.permute.xlu0 %2523
    %2525 = vrot.lane.b32.xlu0 %v2418, 126
    %v2526 = vpop.permute.xlu0 %2525
    %v2527 = vsel %vm971, %v2524, %v2526
    %v2528 = vsel %vm971, %v2522, %v2524
    %v2529 = vsel %vm971, %v2520, %v2522
    %v2530 = vsel %vm971, %v2526, %v2520
    %s2531 = scalar_lea.vmem [#allocation5], 904
    %v2532 = vld [vmem:[%s2531] sm:$0xff]
    %v2533 = vmul.f32 %v2532, %v2529
    %v2534 = vmul.f32 %v2532, %v2528
    %v2535 = vmul.f32 %v2532, %v2527
    %v2536 = vmul.f32 %v2532, %v2530
    %v2537 = vadd.f32 %v2515, %v2533
    %v2538 = vadd.f32 %v2516, %v2534
    %v2539 = vadd.f32 %v2517, %v2535
    %v2540 = vadd.f32 %v2518, %v2536
    %2541 = vrot.lane.b32.xlu0 %v2415, 90
    %v2542 = vpop.permute.xlu0 %2541
    %2543 = vrot.lane.b32.xlu0 %v2416, 90
    %v2544 = vpop.permute.xlu0 %2543
    %2545 = vrot.lane.b32.xlu0 %v2417, 90
    %v2546 = vpop.permute.xlu0 %2545
    %2547 = vrot.lane.b32.xlu0 %v2418, 90
    %v2548 = vpop.permute.xlu0 %2547
    %v2549 = vsel %vm994, %v2546, %v2548
    %v2550 = vsel %vm994, %v2544, %v2546
    %v2551 = vsel %vm994, %v2542, %v2544
    %v2552 = vsel %vm994, %v2548, %v2542
    %s2553 = scalar_lea.vmem [#allocation5], 912
    %v2554 = vld [vmem:[%s2553] sm:$0xff]
    %v2555 = vmul.f32 %v2554, %v2551
    %v2556 = vmul.f32 %v2554, %v2550
    %v2557 = vmul.f32 %v2554, %v2549
    %v2558 = vmul.f32 %v2554, %v2552
    %v2559 = vadd.f32 %v2537, %v2555
    %v2560 = vadd.f32 %v2538, %v2556
    %v2561 = vadd.f32 %v2539, %v2557
    %v2562 = vadd.f32 %v2540, %v2558
    %2563 = vrot.lane.b32.xlu0 %v2415, 88
    %v2564 = vpop.permute.xlu0 %2563
    %2565 = vrot.lane.b32.xlu0 %v2416, 88
    %v2566 = vpop.permute.xlu0 %2565
    %2567 = vrot.lane.b32.xlu0 %v2417, 88
    %v2568 = vpop.permute.xlu0 %2567
    %2569 = vrot.lane.b32.xlu0 %v2418, 88
    %v2570 = vpop.permute.xlu0 %2569
    %v2571 = vsel %vm1017, %v2568, %v2570
    %v2572 = vsel %vm1017, %v2566, %v2568
    %v2573 = vsel %vm1017, %v2564, %v2566
    %v2574 = vsel %vm1017, %v2570, %v2564
    %s2575 = scalar_lea.vmem [#allocation5], 920
    %v2576 = vld [vmem:[%s2575] sm:$0xff]
    %v2577 = vmul.f32 %v2576, %v2573
    %v2578 = vmul.f32 %v2576, %v2572
    %v2579 = vmul.f32 %v2576, %v2571
    %v2580 = vmul.f32 %v2576, %v2574
    %v2581 = vadd.f32 %v2559, %v2577
    %v2582 = vadd.f32 %v2560, %v2578
    %v2583 = vadd.f32 %v2561, %v2579
    %v2584 = vadd.f32 %v2562, %v2580
    %2585 = vrot.lane.b32.xlu0 %v2415, 86
    %v2586 = vpop.permute.xlu0 %2585
    %2587 = vrot.lane.b32.xlu0 %v2416, 86
    %v2588 = vpop.permute.xlu0 %2587
    %2589 = vrot.lane.b32.xlu0 %v2417, 86
    %v2590 = vpop.permute.xlu0 %2589
    %2591 = vrot.lane.b32.xlu0 %v2418, 86
    %v2592 = vpop.permute.xlu0 %2591
    %v2593 = vsel %vm1040, %v2590, %v2592
    %v2594 = vsel %vm1040, %v2588, %v2590
    %v2595 = vsel %vm1040, %v2586, %v2588
    %v2596 = vsel %vm1040, %v2592, %v2586
    %s2597 = scalar_lea.vmem [#allocation5], 928
    %v2598 = vld [vmem:[%s2597] sm:$0xff]
    %v2599 = vmul.f32 %v2598, %v2595
    %v2600 = vmul.f32 %v2598, %v2594
    %v2601 = vmul.f32 %v2598, %v2593
    %v2602 = vmul.f32 %v2598, %v2596
    %v2603 = vadd.f32 %v2581, %v2599
    %v2604 = vadd.f32 %v2582, %v2600
    %v2605 = vadd.f32 %v2583, %v2601
    %v2606 = vadd.f32 %v2584, %v2602
    %v2607 = vrot.slane %v2415, 2
    %v2608 = vrot.slane %v2416, 2
    %v2609 = vrot.slane %v2417, 2
    %v2610 = vrot.slane %v2418, 2
    %2611 = vrot.lane.b32.xlu0 %v2607, 42
    %v2612 = vpop.permute.xlu0 %2611
    %2613 = vrot.lane.b32.xlu0 %v2608, 42
    %v2614 = vpop.permute.xlu0 %2613
    %2615 = vrot.lane.b32.xlu0 %v2609, 42
    %v2616 = vpop.permute.xlu0 %2615
    %2617 = vrot.lane.b32.xlu0 %v2610, 42
    %v2618 = vpop.permute.xlu0 %2617
    %v2619 = vsel %vm869, %v2616, %v2618
    %v2620 = vsel %vm869, %v2614, %v2616
    %v2621 = vsel %vm869, %v2612, %v2614
    %v2622 = vsel %vm869, %v2618, %v2612
    %s2623 = scalar_lea.vmem [#allocation5], 936
    %v2624 = vld [vmem:[%s2623] sm:$0xff]
    %v2625 = vmul.f32 %v2624, %v2622
    %v2626 = vmul.f32 %v2624, %v2621
    %v2627 = vmul.f32 %v2624, %v2620
    %v2628 = vmul.f32 %v2624, %v2619
    %v2629 = vadd.f32 %v2603, %v2625
    %v2630 = vadd.f32 %v2604, %v2626
    %v2631 = vadd.f32 %v2605, %v2627
    %v2632 = vadd.f32 %v2606, %v2628
    %2633 = vrot.lane.b32.xlu0 %v2607, 40
    %v2634 = vpop.permute.xlu0 %2633
    %2635 = vrot.lane.b32.xlu0 %v2608, 40
    %v2636 = vpop.permute.xlu0 %2635
    %2637 = vrot.lane.b32.xlu0 %v2609, 40
    %v2638 = vpop.permute.xlu0 %2637
    %2639 = vrot.lane.b32.xlu0 %v2610, 40
    %v2640 = vpop.permute.xlu0 %2639
    %v2641 = vsel %vm892, %v2638, %v2640
    %v2642 = vsel %vm892, %v2636, %v2638
    %v2643 = vsel %vm892, %v2634, %v2636
    %v2644 = vsel %vm892, %v2640, %v2634
    %s2645 = scalar_lea.vmem [#allocation5], 944
    %v2646 = vld [vmem:[%s2645] sm:$0xff]
    %v2647 = vmul.f32 %v2646, %v2644
    %v2648 = vmul.f32 %v2646, %v2643
    %v2649 = vmul.f32 %v2646, %v2642
    %v2650 = vmul.f32 %v2646, %v2641
    %v2651 = vadd.f32 %v2629, %v2647
    %v2652 = vadd.f32 %v2630, %v2648
    %v2653 = vadd.f32 %v2631, %v2649
    %v2654 = vadd.f32 %v2632, %v2650
    %2655 = vrot.lane.b32.xlu0 %v2607, 38
    %v2656 = vpop.permute.xlu0 %2655
    %2657 = vrot.lane.b32.xlu0 %v2608, 38
    %v2658 = vpop.permute.xlu0 %2657
    %2659 = vrot.lane.b32.xlu0 %v2609, 38
    %v2660 = vpop.permute.xlu0 %2659
    %2661 = vrot.lane.b32.xlu0 %v2610, 38
    %v2662 = vpop.permute.xlu0 %2661
    %v2663 = vsel %vm915, %v2660, %v2662
    %v2664 = vsel %vm915, %v2658, %v2660
    %v2665 = vsel %vm915, %v2656, %v2658
    %v2666 = vsel %vm915, %v2662, %v2656
    %s2667 = scalar_lea.vmem [#allocation5], 952
    %v2668 = vld [vmem:[%s2667] sm:$0xff]
    %v2669 = vmul.f32 %v2668, %v2666
    %v2670 = vmul.f32 %v2668, %v2665
    %v2671 = vmul.f32 %v2668, %v2664
    %v2672 = vmul.f32 %v2668, %v2663
    %v2673 = vadd.f32 %v2651, %v2669
    %v2674 = vadd.f32 %v2652, %v2670
    %v2675 = vadd.f32 %v2653, %v2671
    %v2676 = vadd.f32 %v2654, %v2672
    %2677 = vrot.lane.b32.xlu0 %v2607, 2
    %v2678 = vpop.permute.xlu0 %2677
    %2679 = vrot.lane.b32.xlu0 %v2608, 2
    %v2680 = vpop.permute.xlu0 %2679
    %2681 = vrot.lane.b32.xlu0 %v2609, 2
    %v2682 = vpop.permute.xlu0 %2681
    %2683 = vrot.lane.b32.xlu0 %v2610, 2
    %v2684 = vpop.permute.xlu0 %2683
    %v2685 = vsel %vm938, %v2682, %v2684
    %v2686 = vsel %vm938, %v2680, %v2682
    %v2687 = vsel %vm938, %v2678, %v2680
    %v2688 = vsel %vm938, %v2684, %v2678
    %s2689 = scalar_lea.vmem [#allocation5], 960
    %v2690 = vld [vmem:[%s2689] sm:$0xff]
    %v2691 = vmul.f32 %v2690, %v2688
    %v2692 = vmul.f32 %v2690, %v2687
    %v2693 = vmul.f32 %v2690, %v2686
    %v2694 = vmul.f32 %v2690, %v2685
    %v2695 = vadd.f32 %v2673, %v2691
    %v2696 = vadd.f32 %v2674, %v2692
    %v2697 = vadd.f32 %v2675, %v2693
    %v2698 = vadd.f32 %v2676, %v2694
    %s2699 = scalar_lea.vmem [#allocation5], 968
    %v2700 = vld [vmem:[%s2699] sm:$0xff]
    %v2701 = vmul.f32 %v2700, %v2607
    %v2702 = vmul.f32 %v2700, %v2608
    %v2703 = vmul.f32 %v2700, %v2609
    %v2704 = vmul.f32 %v2700, %v2610
    %v2705 = vadd.f32 %v2695, %v2701
    %v2706 = vadd.f32 %v2696, %v2702
    %v2707 = vadd.f32 %v2697, %v2703
    %v2708 = vadd.f32 %v2698, %v2704
    %2709 = vrot.lane.b32.xlu0 %v2607, 126
    %v2710 = vpop.permute.xlu0 %2709
    %2711 = vrot.lane.b32.xlu0 %v2608, 126
    %v2712 = vpop.permute.xlu0 %2711
    %2713 = vrot.lane.b32.xlu0 %v2609, 126
    %v2714 = vpop.permute.xlu0 %2713
    %2715 = vrot.lane.b32.xlu0 %v2610, 126
    %v2716 = vpop.permute.xlu0 %2715
    %v2717 = vsel %vm971, %v2714, %v2716
    %v2718 = vsel %vm971, %v2712, %v2714
    %v2719 = vsel %vm971, %v2710, %v2712
    %v2720 = vsel %vm971, %v2716, %v2710
    %s2721 = scalar_lea.vmem [#allocation5], 976
    %v2722 = vld [vmem:[%s2721] sm:$0xff]
    %v2723 = vmul.f32 %v2722, %v2719
    %v2724 = vmul.f32 %v2722, %v2718
    %v2725 = vmul.f32 %v2722, %v2717
    %v2726 = vmul.f32 %v2722, %v2720
    %v2727 = vadd.f32 %v2705, %v2723
    %v2728 = vadd.f32 %v2706, %v2724
    %v2729 = vadd.f32 %v2707, %v2725
    %v2730 = vadd.f32 %v2708, %v2726
    %2731 = vrot.lane.b32.xlu0 %v2607, 90
    %v2732 = vpop.permute.xlu0 %2731
    %2733 = vrot.lane.b32.xlu0 %v2608, 90
    %v2734 = vpop.permute.xlu0 %2733
    %2735 = vrot.lane.b32.xlu0 %v2609, 90
    %v2736 = vpop.permute.xlu0 %2735
    %2737 = vrot.lane.b32.xlu0 %v2610, 90
    %v2738 = vpop.permute.xlu0 %2737
    %v2739 = vsel %vm994, %v2736, %v2738
    %v2740 = vsel %vm994, %v2734, %v2736
    %v2741 = vsel %vm994, %v2732, %v2734
    %v2742 = vsel %vm994, %v2738, %v2732
    %s2743 = scalar_lea.vmem [#allocation5], 984
    %v2744 = vld [vmem:[%s2743] sm:$0xff]
    %v2745 = vmul.f32 %v2744, %v2741
    %v2746 = vmul.f32 %v2744, %v2740
    %v2747 = vmul.f32 %v2744, %v2739
    %v2748 = vmul.f32 %v2744, %v2742
    %v2749 = vadd.f32 %v2727, %v2745
    %v2750 = vadd.f32 %v2728, %v2746
    %v2751 = vadd.f32 %v2729, %v2747
    %v2752 = vadd.f32 %v2730, %v2748
    %2753 = vrot.lane.b32.xlu0 %v2607, 88
    %v2754 = vpop.permute.xlu0 %2753
    %2755 = vrot.lane.b32.xlu0 %v2608, 88
    %v2756 = vpop.permute.xlu0 %2755
    %2757 = vrot.lane.b32.xlu0 %v2609, 88
    %v2758 = vpop.permute.xlu0 %2757
    %2759 = vrot.lane.b32.xlu0 %v2610, 88
    %v2760 = vpop.permute.xlu0 %2759
    %v2761 = vsel %vm1017, %v2758, %v2760
    %v2762 = vsel %vm1017, %v2756, %v2758
    %v2763 = vsel %vm1017, %v2754, %v2756
    %v2764 = vsel %vm1017, %v2760, %v2754
    %s2765 = scalar_lea.vmem [#allocation5], 992
    %v2766 = vld [vmem:[%s2765] sm:$0xff]
    %v2767 = vmul.f32 %v2766, %v2763
    %v2768 = vmul.f32 %v2766, %v2762
    %v2769 = vmul.f32 %v2766, %v2761
    %v2770 = vmul.f32 %v2766, %v2764
    %v2771 = vadd.f32 %v2749, %v2767
    %v2772 = vadd.f32 %v2750, %v2768
    %v2773 = vadd.f32 %v2751, %v2769
    %v2774 = vadd.f32 %v2752, %v2770
    %2775 = vrot.lane.b32.xlu0 %v2607, 86
    %v2776 = vpop.permute.xlu0 %2775
    %2777 = vrot.lane.b32.xlu0 %v2608, 86
    %v2778 = vpop.permute.xlu0 %2777
    %2779 = vrot.lane.b32.xlu0 %v2609, 86
    %v2780 = vpop.permute.xlu0 %2779
    %2781 = vrot.lane.b32.xlu0 %v2610, 86
    %v2782 = vpop.permute.xlu0 %2781
    %v2783 = vsel %vm1040, %v2780, %v2782
    %v2784 = vsel %vm1040, %v2778, %v2780
    %v2785 = vsel %vm1040, %v2776, %v2778
    %v2786 = vsel %vm1040, %v2782, %v2776
    %s2787 = scalar_lea.vmem [#allocation5], 1000
    %v2788 = vld [vmem:[%s2787] sm:$0xff]
    %v2789 = vmul.f32 %v2788, %v2785
    %v2790 = vmul.f32 %v2788, %v2784
    %v2791 = vmul.f32 %v2788, %v2783
    %v2792 = vmul.f32 %v2788, %v2786
    %v2793 = vadd.f32 %v2771, %v2789
    %v2794 = vadd.f32 %v2772, %v2790
    %v2795 = vadd.f32 %v2773, %v2791
    %v2796 = vadd.f32 %v2774, %v2792
    %v2797 = vrot.slane %v2415, 4
    %v2798 = vrot.slane %v2416, 4
    %v2799 = vrot.slane %v2417, 4
    %v2800 = vrot.slane %v2418, 4
    %2801 = vrot.lane.b32.xlu0 %v2797, 42
    %v2802 = vpop.permute.xlu0 %2801
    %2803 = vrot.lane.b32.xlu0 %v2798, 42
    %v2804 = vpop.permute.xlu0 %2803
    %2805 = vrot.lane.b32.xlu0 %v2799, 42
    %v2806 = vpop.permute.xlu0 %2805
    %2807 = vrot.lane.b32.xlu0 %v2800, 42
    %v2808 = vpop.permute.xlu0 %2807
    %v2809 = vsel %vm869, %v2806, %v2808
    %v2810 = vsel %vm869, %v2804, %v2806
    %v2811 = vsel %vm869, %v2802, %v2804
    %v2812 = vsel %vm869, %v2808, %v2802
    %s2813 = scalar_lea.vmem [#allocation5], 1008
    %v2814 = vld [vmem:[%s2813] sm:$0xff]
    %v2815 = vmul.f32 %v2814, %v2812
    %v2816 = vmul.f32 %v2814, %v2811
    %v2817 = vmul.f32 %v2814, %v2810
    %v2818 = vmul.f32 %v2814, %v2809
    %v2819 = vadd.f32 %v2793, %v2815
    %v2820 = vadd.f32 %v2794, %v2816
    %v2821 = vadd.f32 %v2795, %v2817
    %v2822 = vadd.f32 %v2796, %v2818
    %2823 = vrot.lane.b32.xlu0 %v2797, 40
    %v2824 = vpop.permute.xlu0 %2823
    %2825 = vrot.lane.b32.xlu0 %v2798, 40
    %v2826 = vpop.permute.xlu0 %2825
    %2827 = vrot.lane.b32.xlu0 %v2799, 40
    %v2828 = vpop.permute.xlu0 %2827
    %2829 = vrot.lane.b32.xlu0 %v2800, 40
    %v2830 = vpop.permute.xlu0 %2829
    %v2831 = vsel %vm892, %v2828, %v2830
    %v2832 = vsel %vm892, %v2826, %v2828
    %v2833 = vsel %vm892, %v2824, %v2826
    %v2834 = vsel %vm892, %v2830, %v2824
    %s2835 = scalar_lea.vmem [#allocation5], 1016
    %v2836 = vld [vmem:[%s2835] sm:$0xff]
    %v2837 = vmul.f32 %v2836, %v2834
    %v2838 = vmul.f32 %v2836, %v2833
    %v2839 = vmul.f32 %v2836, %v2832
    %v2840 = vmul.f32 %v2836, %v2831
    %v2841 = vadd.f32 %v2819, %v2837
    %v2842 = vadd.f32 %v2820, %v2838
    %v2843 = vadd.f32 %v2821, %v2839
    %v2844 = vadd.f32 %v2822, %v2840
    %2845 = vrot.lane.b32.xlu0 %v2797, 38
    %v2846 = vpop.permute.xlu0 %2845
    %2847 = vrot.lane.b32.xlu0 %v2798, 38
    %v2848 = vpop.permute.xlu0 %2847
    %2849 = vrot.lane.b32.xlu0 %v2799, 38
    %v2850 = vpop.permute.xlu0 %2849
    %2851 = vrot.lane.b32.xlu0 %v2800, 38
    %v2852 = vpop.permute.xlu0 %2851
    %v2853 = vsel %vm915, %v2850, %v2852
    %v2854 = vsel %vm915, %v2848, %v2850
    %v2855 = vsel %vm915, %v2846, %v2848
    %v2856 = vsel %vm915, %v2852, %v2846
    %s2857 = scalar_lea.vmem [#allocation5], 1024
    %v2858 = vld [vmem:[%s2857] sm:$0xff]
    %v2859 = vmul.f32 %v2858, %v2856
    %v2860 = vmul.f32 %v2858, %v2855
    %v2861 = vmul.f32 %v2858, %v2854
    %v2862 = vmul.f32 %v2858, %v2853
    %v2863 = vadd.f32 %v2841, %v2859
    %v2864 = vadd.f32 %v2842, %v2860
    %v2865 = vadd.f32 %v2843, %v2861
    %v2866 = vadd.f32 %v2844, %v2862
    %2867 = vrot.lane.b32.xlu0 %v2797, 2
    %v2868 = vpop.permute.xlu0 %2867
    %2869 = vrot.lane.b32.xlu0 %v2798, 2
    %v2870 = vpop.permute.xlu0 %2869
    %2871 = vrot.lane.b32.xlu0 %v2799, 2
    %v2872 = vpop.permute.xlu0 %2871
    %2873 = vrot.lane.b32.xlu0 %v2800, 2
    %v2874 = vpop.permute.xlu0 %2873
    %v2875 = vsel %vm938, %v2872, %v2874
    %v2876 = vsel %vm938, %v2870, %v2872
    %v2877 = vsel %vm938, %v2868, %v2870
    %v2878 = vsel %vm938, %v2874, %v2868
    %s2879 = scalar_lea.vmem [#allocation5], 1032
    %v2880 = vld [vmem:[%s2879] sm:$0xff]
    %v2881 = vmul.f32 %v2880, %v2878
    %v2882 = vmul.f32 %v2880, %v2877
    %v2883 = vmul.f32 %v2880, %v2876
    %v2884 = vmul.f32 %v2880, %v2875
    %v2885 = vadd.f32 %v2863, %v2881
    %v2886 = vadd.f32 %v2864, %v2882
    %v2887 = vadd.f32 %v2865, %v2883
    %v2888 = vadd.f32 %v2866, %v2884
    %s2889 = scalar_lea.vmem [#allocation5], 1040
    %v2890 = vld [vmem:[%s2889] sm:$0xff]
    %v2891 = vmul.f32 %v2890, %v2797
    %v2892 = vmul.f32 %v2890, %v2798
    %v2893 = vmul.f32 %v2890, %v2799
    %v2894 = vmul.f32 %v2890, %v2800
    %v2895 = vadd.f32 %v2885, %v2891
    %v2896 = vadd.f32 %v2886, %v2892
    %v2897 = vadd.f32 %v2887, %v2893
    %v2898 = vadd.f32 %v2888, %v2894
    %2899 = vrot.lane.b32.xlu0 %v2797, 126
    %v2900 = vpop.permute.xlu0 %2899
    %2901 = vrot.lane.b32.xlu0 %v2798, 126
    %v2902 = vpop.permute.xlu0 %2901
    %2903 = vrot.lane.b32.xlu0 %v2799, 126
    %v2904 = vpop.permute.xlu0 %2903
    %2905 = vrot.lane.b32.xlu0 %v2800, 126
    %v2906 = vpop.permute.xlu0 %2905
    %v2907 = vsel %vm971, %v2904, %v2906
    %v2908 = vsel %vm971, %v2902, %v2904
    %v2909 = vsel %vm971, %v2900, %v2902
    %v2910 = vsel %vm971, %v2906, %v2900
    %s2911 = scalar_lea.vmem [#allocation5], 1048
    %v2912 = vld [vmem:[%s2911] sm:$0xff]
    %v2913 = vmul.f32 %v2912, %v2909
    %v2914 = vmul.f32 %v2912, %v2908
    %v2915 = vmul.f32 %v2912, %v2907
    %v2916 = vmul.f32 %v2912, %v2910
    %v2917 = vadd.f32 %v2895, %v2913
    %v2918 = vadd.f32 %v2896, %v2914
    %v2919 = vadd.f32 %v2897, %v2915
    %v2920 = vadd.f32 %v2898, %v2916
    %2921 = vrot.lane.b32.xlu0 %v2797, 90
    %v2922 = vpop.permute.xlu0 %2921
    %2923 = vrot.lane.b32.xlu0 %v2798, 90
    %v2924 = vpop.permute.xlu0 %2923
    %2925 = vrot.lane.b32.xlu0 %v2799, 90
    %v2926 = vpop.permute.xlu0 %2925
    %2927 = vrot.lane.b32.xlu0 %v2800, 90
    %v2928 = vpop.permute.xlu0 %2927
    %v2929 = vsel %vm994, %v2926, %v2928
    %v2930 = vsel %vm994, %v2924, %v2926
    %v2931 = vsel %vm994, %v2922, %v2924
    %v2932 = vsel %vm994, %v2928, %v2922
    %s2933 = scalar_lea.vmem [#allocation5], 1056
    %v2934 = vld [vmem:[%s2933] sm:$0xff]
    %v2935 = vmul.f32 %v2934, %v2931
    %v2936 = vmul.f32 %v2934, %v2930
    %v2937 = vmul.f32 %v2934, %v2929
    %v2938 = vmul.f32 %v2934, %v2932
    %v2939 = vadd.f32 %v2917, %v2935
    %v2940 = vadd.f32 %v2918, %v2936
    %v2941 = vadd.f32 %v2919, %v2937
    %v2942 = vadd.f32 %v2920, %v2938
    %2943 = vrot.lane.b32.xlu0 %v2797, 88
    %v2944 = vpop.permute.xlu0 %2943
    %2945 = vrot.lane.b32.xlu0 %v2798, 88
    %v2946 = vpop.permute.xlu0 %2945
    %2947 = vrot.lane.b32.xlu0 %v2799, 88
    %v2948 = vpop.permute.xlu0 %2947
    %2949 = vrot.lane.b32.xlu0 %v2800, 88
    %v2950 = vpop.permute.xlu0 %2949
    %v2951 = vsel %vm1017, %v2948, %v2950
    %v2952 = vsel %vm1017, %v2946, %v2948
    %v2953 = vsel %vm1017, %v2944, %v2946
    %v2954 = vsel %vm1017, %v2950, %v2944
    %s2955 = scalar_lea.vmem [#allocation5], 1064
    %v2956 = vld [vmem:[%s2955] sm:$0xff]
    %v2957 = vmul.f32 %v2956, %v2953
    %v2958 = vmul.f32 %v2956, %v2952
    %v2959 = vmul.f32 %v2956, %v2951
    %v2960 = vmul.f32 %v2956, %v2954
    %v2961 = vadd.f32 %v2939, %v2957
    %v2962 = vadd.f32 %v2940, %v2958
    %v2963 = vadd.f32 %v2941, %v2959
    %v2964 = vadd.f32 %v2942, %v2960
    %2965 = vrot.lane.b32.xlu0 %v2797, 86
    %v2966 = vpop.permute.xlu0 %2965
    %2967 = vrot.lane.b32.xlu0 %v2798, 86
    %v2968 = vpop.permute.xlu0 %2967
    %2969 = vrot.lane.b32.xlu0 %v2799, 86
    %v2970 = vpop.permute.xlu0 %2969
    %2971 = vrot.lane.b32.xlu0 %v2800, 86
    %v2972 = vpop.permute.xlu0 %2971
    %v2973 = vsel %vm1040, %v2970, %v2972
    %v2974 = vsel %vm1040, %v2968, %v2970
    %v2975 = vsel %vm1040, %v2966, %v2968
    %v2976 = vsel %vm1040, %v2972, %v2966
    %s2977 = scalar_lea.vmem [#allocation5], 1072
    %v2978 = vld [vmem:[%s2977] sm:$0xff]
    %v2979 = vmul.f32 %v2978, %v2975
    %v2980 = vmul.f32 %v2978, %v2974
    %v2981 = vmul.f32 %v2978, %v2973
    %v2982 = vmul.f32 %v2978, %v2976
    %v2983 = vadd.f32 %v2961, %v2979
    %v2984 = vadd.f32 %v2962, %v2980
    %v2985 = vadd.f32 %v2963, %v2981
    %v2986 = vadd.f32 %v2964, %v2982
    %v2987 = vrot.slane %v2415, 6
    %v2988 = vrot.slane %v2416, 6
    %v2989 = vrot.slane %v2417, 6
    %v2990 = vrot.slane %v2418, 6
    %2991 = vrot.lane.b32.xlu0 %v2987, 42
    %v2992 = vpop.permute.xlu0 %2991
    %2993 = vrot.lane.b32.xlu0 %v2988, 42
    %v2994 = vpop.permute.xlu0 %2993
    %2995 = vrot.lane.b32.xlu0 %v2989, 42
    %v2996 = vpop.permute.xlu0 %2995
    %2997 = vrot.lane.b32.xlu0 %v2990, 42
    %v2998 = vpop.permute.xlu0 %2997
    %v2999 = vsel %vm869, %v2996, %v2998
    %v3000 = vsel %vm869, %v2994, %v2996
    %v3001 = vsel %vm869, %v2992, %v2994
    %v3002 = vsel %vm869, %v2998, %v2992
    %s3003 = scalar_lea.vmem [#allocation5], 1080
    %v3004 = vld [vmem:[%s3003] sm:$0xff]
    %v3005 = vmul.f32 %v3004, %v3002
    %v3006 = vmul.f32 %v3004, %v3001
    %v3007 = vmul.f32 %v3004, %v3000
    %v3008 = vmul.f32 %v3004, %v2999
    %v3009 = vadd.f32 %v2983, %v3005
    %v3010 = vadd.f32 %v2984, %v3006
    %v3011 = vadd.f32 %v2985, %v3007
    %v3012 = vadd.f32 %v2986, %v3008
    %3013 = vrot.lane.b32.xlu0 %v2987, 40
    %v3014 = vpop.permute.xlu0 %3013
    %3015 = vrot.lane.b32.xlu0 %v2988, 40
    %v3016 = vpop.permute.xlu0 %3015
    %3017 = vrot.lane.b32.xlu0 %v2989, 40
    %v3018 = vpop.permute.xlu0 %3017
    %3019 = vrot.lane.b32.xlu0 %v2990, 40
    %v3020 = vpop.permute.xlu0 %3019
    %v3021 = vsel %vm892, %v3018, %v3020
    %v3022 = vsel %vm892, %v3016, %v3018
    %v3023 = vsel %vm892, %v3014, %v3016
    %v3024 = vsel %vm892, %v3020, %v3014
    %s3025 = scalar_lea.vmem [#allocation5], 1088
    %v3026 = vld [vmem:[%s3025] sm:$0xff]
    %v3027 = vmul.f32 %v3026, %v3024
    %v3028 = vmul.f32 %v3026, %v3023
    %v3029 = vmul.f32 %v3026, %v3022
    %v3030 = vmul.f32 %v3026, %v3021
    %v3031 = vadd.f32 %v3009, %v3027
    %v3032 = vadd.f32 %v3010, %v3028
    %v3033 = vadd.f32 %v3011, %v3029
    %v3034 = vadd.f32 %v3012, %v3030
    %3035 = vrot.lane.b32.xlu0 %v2987, 38
    %v3036 = vpop.permute.xlu0 %3035
    %3037 = vrot.lane.b32.xlu0 %v2988, 38
    %v3038 = vpop.permute.xlu0 %3037
    %3039 = vrot.lane.b32.xlu0 %v2989, 38
    %v3040 = vpop.permute.xlu0 %3039
    %3041 = vrot.lane.b32.xlu0 %v2990, 38
    %v3042 = vpop.permute.xlu0 %3041
    %v3043 = vsel %vm915, %v3040, %v3042
    %v3044 = vsel %vm915, %v3038, %v3040
    %v3045 = vsel %vm915, %v3036, %v3038
    %v3046 = vsel %vm915, %v3042, %v3036
    %s3047 = scalar_lea.vmem [#allocation5], 1096
    %v3048 = vld [vmem:[%s3047] sm:$0xff]
    %v3049 = vmul.f32 %v3048, %v3046
    %v3050 = vmul.f32 %v3048, %v3045
    %v3051 = vmul.f32 %v3048, %v3044
    %v3052 = vmul.f32 %v3048, %v3043
    %v3053 = vadd.f32 %v3031, %v3049
    %v3054 = vadd.f32 %v3032, %v3050
    %v3055 = vadd.f32 %v3033, %v3051
    %v3056 = vadd.f32 %v3034, %v3052
    %3057 = vrot.lane.b32.xlu0 %v2987, 2
    %v3058 = vpop.permute.xlu0 %3057
    %3059 = vrot.lane.b32.xlu0 %v2988, 2
    %v3060 = vpop.permute.xlu0 %3059
    %3061 = vrot.lane.b32.xlu0 %v2989, 2
    %v3062 = vpop.permute.xlu0 %3061
    %3063 = vrot.lane.b32.xlu0 %v2990, 2
    %v3064 = vpop.permute.xlu0 %3063
    %v3065 = vsel %vm938, %v3062, %v3064
    %v3066 = vsel %vm938, %v3060, %v3062
    %v3067 = vsel %vm938, %v3058, %v3060
    %v3068 = vsel %vm938, %v3064, %v3058
    %s3069 = scalar_lea.vmem [#allocation5], 1104
    %v3070 = vld [vmem:[%s3069] sm:$0xff]
    %v3071 = vmul.f32 %v3070, %v3068
    %v3072 = vmul.f32 %v3070, %v3067
    %v3073 = vmul.f32 %v3070, %v3066
    %v3074 = vmul.f32 %v3070, %v3065
    %v3075 = vadd.f32 %v3053, %v3071
    %v3076 = vadd.f32 %v3054, %v3072
    %v3077 = vadd.f32 %v3055, %v3073
    %v3078 = vadd.f32 %v3056, %v3074
    %s3079 = scalar_lea.vmem [#allocation5], 1112
    %v3080 = vld [vmem:[%s3079] sm:$0xff]
    %v3081 = vmul.f32 %v3080, %v2987
    %v3082 = vmul.f32 %v3080, %v2988
    %v3083 = vmul.f32 %v3080, %v2989
    %v3084 = vmul.f32 %v3080, %v2990
    %v3085 = vadd.f32 %v3075, %v3081
    %v3086 = vadd.f32 %v3076, %v3082
    %v3087 = vadd.f32 %v3077, %v3083
    %v3088 = vadd.f32 %v3078, %v3084
    %3089 = vrot.lane.b32.xlu0 %v2987, 126
    %v3090 = vpop.permute.xlu0 %3089
    %3091 = vrot.lane.b32.xlu0 %v2988, 126
    %v3092 = vpop.permute.xlu0 %3091
    %3093 = vrot.lane.b32.xlu0 %v2989, 126
    %v3094 = vpop.permute.xlu0 %3093
    %3095 = vrot.lane.b32.xlu0 %v2990, 126
    %v3096 = vpop.permute.xlu0 %3095
    %v3097 = vsel %vm971, %v3094, %v3096
    %v3098 = vsel %vm971, %v3092, %v3094
    %v3099 = vsel %vm971, %v3090, %v3092
    %v3100 = vsel %vm971, %v3096, %v3090
    %s3101 = scalar_lea.vmem [#allocation5], 1120
    %v3102 = vld [vmem:[%s3101] sm:$0xff]
    %v3103 = vmul.f32 %v3102, %v3099
    %v3104 = vmul.f32 %v3102, %v3098
    %v3105 = vmul.f32 %v3102, %v3097
    %v3106 = vmul.f32 %v3102, %v3100
    %v3107 = vadd.f32 %v3085, %v3103
    %v3108 = vadd.f32 %v3086, %v3104
    %v3109 = vadd.f32 %v3087, %v3105
    %v3110 = vadd.f32 %v3088, %v3106
    %3111 = vrot.lane.b32.xlu0 %v2987, 90
    %v3112 = vpop.permute.xlu0 %3111
    %3113 = vrot.lane.b32.xlu0 %v2988, 90
    %v3114 = vpop.permute.xlu0 %3113
    %3115 = vrot.lane.b32.xlu0 %v2989, 90
    %v3116 = vpop.permute.xlu0 %3115
    %3117 = vrot.lane.b32.xlu0 %v2990, 90
    %v3118 = vpop.permute.xlu0 %3117
    %v3119 = vsel %vm994, %v3116, %v3118
    %v3120 = vsel %vm994, %v3114, %v3116
    %v3121 = vsel %vm994, %v3112, %v3114
    %v3122 = vsel %vm994, %v3118, %v3112
    %s3123 = scalar_lea.vmem [#allocation5], 1128
    %v3124 = vld [vmem:[%s3123] sm:$0xff]
    %v3125 = vmul.f32 %v3124, %v3121
    %v3126 = vmul.f32 %v3124, %v3120
    %v3127 = vmul.f32 %v3124, %v3119
    %v3128 = vmul.f32 %v3124, %v3122
    %v3129 = vadd.f32 %v3107, %v3125
    %v3130 = vadd.f32 %v3108, %v3126
    %v3131 = vadd.f32 %v3109, %v3127
    %v3132 = vadd.f32 %v3110, %v3128
    %3133 = vrot.lane.b32.xlu0 %v2987, 88
    %v3134 = vpop.permute.xlu0 %3133
    %3135 = vrot.lane.b32.xlu0 %v2988, 88
    %v3136 = vpop.permute.xlu0 %3135
    %3137 = vrot.lane.b32.xlu0 %v2989, 88
    %v3138 = vpop.permute.xlu0 %3137
    %3139 = vrot.lane.b32.xlu0 %v2990, 88
    %v3140 = vpop.permute.xlu0 %3139
    %v3141 = vsel %vm1017, %v3138, %v3140
    %v3142 = vsel %vm1017, %v3136, %v3138
    %v3143 = vsel %vm1017, %v3134, %v3136
    %v3144 = vsel %vm1017, %v3140, %v3134
    %s3145 = scalar_lea.vmem [#allocation5], 1136
    %v3146 = vld [vmem:[%s3145] sm:$0xff]
    %v3147 = vmul.f32 %v3146, %v3143
    %v3148 = vmul.f32 %v3146, %v3142
    %v3149 = vmul.f32 %v3146, %v3141
    %v3150 = vmul.f32 %v3146, %v3144
    %v3151 = vadd.f32 %v3129, %v3147
    %v3152 = vadd.f32 %v3130, %v3148
    %v3153 = vadd.f32 %v3131, %v3149
    %v3154 = vadd.f32 %v3132, %v3150
    %3155 = vrot.lane.b32.xlu0 %v2987, 86
    %v3156 = vpop.permute.xlu0 %3155
    %3157 = vrot.lane.b32.xlu0 %v2988, 86
    %v3158 = vpop.permute.xlu0 %3157
    %3159 = vrot.lane.b32.xlu0 %v2989, 86
    %v3160 = vpop.permute.xlu0 %3159
    %3161 = vrot.lane.b32.xlu0 %v2990, 86
    %v3162 = vpop.permute.xlu0 %3161
    %v3163 = vsel %vm1040, %v3160, %v3162
    %v3164 = vsel %vm1040, %v3158, %v3160
    %v3165 = vsel %vm1040, %v3156, %v3158
    %v3166 = vsel %vm1040, %v3162, %v3156
    %s3167 = scalar_lea.vmem [#allocation5], 1144
    %v3168 = vld [vmem:[%s3167] sm:$0xff]
    %v3169 = vmul.f32 %v3168, %v3165
    %v3170 = vmul.f32 %v3168, %v3164
    %v3171 = vmul.f32 %v3168, %v3163
    %v3172 = vmul.f32 %v3168, %v3166
    %v3173 = vadd.f32 %v3151, %v3169
    %v3174 = vadd.f32 %v3152, %v3170
    %v3175 = vadd.f32 %v3153, %v3171
    %v3176 = vadd.f32 %v3154, %v3172
    %v3177 = vadd.f32 %v3173, %v1641
    %v3178 = vadd.f32 %v3174, %v1642
    %v3179 = vadd.f32 %v3175, %v1643
    %v3180 = vadd.f32 %v3176, %v1644
    %vm3181 = vcmp.ge.f32.partialorder %v3177, 0.0
    %vm3182 = vcmp.ge.f32.partialorder %v3178, 0.0
    %vm3183 = vcmp.ge.f32.partialorder %v3179, 0.0
    %vm3184 = vcmp.ge.f32.partialorder %v3180, 0.0
    %v3185 = vmul.f32 %v3177, 0.1
    %v3186 = vmul.f32 %v3178, 0.1
    %v3187 = vmul.f32 %v3179, 0.1
    %v3188 = vmul.f32 %v3180, 0.1
    %v3189 = vsel %vm3181, %v3177, %v3185
    %v3190 = vsel %vm3182, %v3178, %v3186
    %v3191 = vsel %vm3183, %v3179, %v3187
    %v3192 = vsel %vm3184, %v3180, %v3188
    %v3193 = vmul.f32 %v3189, %v69
    %v3194 = vmul.f32 %v3190, %v70
    %v3195 = vmul.f32 %v3191, %v71
    %v3196 = vmul.f32 %v3192, %v72
    %v3197 = vadd.f32 %v3193, %v73
    %v3198 = vadd.f32 %v3194, %v74
    %v3199 = vadd.f32 %v3195, %v75
    %v3200 = vadd.f32 %v3196, %v76
    %3201 = vst [vmem:[#allocation10] sm:$0xff] %v3197
    %3202 = vst [vmem:[#allocation10 + $0x8] sm:$0xff] %v3198
    %3203 = vst [vmem:[#allocation10 + $0x10] sm:$0xff] %v3199
    %3204 = vst [vmem:[#allocation10 + $0x18] sm:$0xff] %v3200
    // Predicated region
    $region34: #{tpu_custom_call.1} parent=1 // pred_check
      _
    $region35: #{tpu_custom_call.1} parent=1 // pred_check_branch
      %3206 = sbr.rel (0) target = $region37
    $region36: #{tpu_custom_call.1} parent=1 // pred_region
      %s3208 = ssub.s32 512, 512
      %3209 = vsyncadd [#allocation4], %s3208
      %s3211 = sshll.u32 [#allocation10], 4
      %s3212 = int_to_ptr.vmem [resolvable:$true] %s3211
      %3214 = dma.vmem_to_hbm [thread:$0]  %s3212, 512, %s4, [#allocation4]
    $region37: #{tpu_custom_call.1} parent=1 // pred_fallthru
      _
    // Predicated region
    $region38: #{tpu_custom_call.1} parent=1 // pred_check
      _
    $region39: #{tpu_custom_call.1} parent=1 // pred_check_branch
      %3216 = sbr.rel (0) target = $region41
    $region40: #{tpu_custom_call.1} parent=1 // pred_region
      %3217 = dma.done [#allocation4], 512
    $region41: #{tpu_custom_call.1} parent=1 // pred_fallthru
      _
    %3218 = vsyncpa [#allocation3], 1
    %3219 = vsyncpa [#allocation6], 1
    %3220 = vsyncpa [#allocation9], 1
    %3221 = vsyncpa [#allocation4], 1

</llo_original>
